<compile_context>
chip_gen: v7x
topology: tpu7x:2x2x1
jax: 0.10.0
libtpu: 0.0.40
codegen_flags: <defaults>
</compile_context>

<pallas_src>
import functools

import jax
import jax.numpy as jnp
from jax import lax
from jax.experimental import pallas as pl
from jax.experimental.pallas import tpu as pltpu

# ----- static shapes implied by CNN2(num_in_var=94, num_depth=0, num_neur=128)
L_IN = 94          # input length (num_in_var)
C = 32             # num_channel
L1 = 92            # after Conv1d(k=3, s=1)
L2 = 90            # after second Conv1d(k=3, s=1)
LP = 44            # after MaxPool1d(k=3, s=2)
NUM_NEUR = 128
NUM_OUT = 94
BN_EPS = 1e-5


# --------------------------------------------------------------------------
# Fused Pallas kernel (one batch tile per grid step)
# --------------------------------------------------------------------------
def cnn2_fused_kernel(x_ref, w1_ref, s1_ref, t1_ref, w2_ref, s2_ref, t2_ref,
                      wa_ref, wan_ref, ba_ref, wb_ref, bb_ref, out_ref,
                      h1_ref, h2_ref, fc_ref):
    """Layout: batch on lanes, channels/features on sublanes.

    x_ref  : (1+L_IN, BT)  row 0 = `need`, rows 1..94 = house_cons
    h1_ref : (L1, C, BT)   conv1 -> BN1 -> ReLU
    h2_ref : (L2, C, BT)   conv2 -> BN2 -> ReLU
    fc_ref : (C*LP, BT)    pooled activations, row index = i*32 + c
    out_ref: (NUM_OUT, BT)
    """
    # Hoisted loop-invariant constants (c on sublanes, broadcast along lanes).
    w1a = w1_ref[:, 0:1]            # (C, 1)
    w1b = w1_ref[:, 1:2]
    w1c = w1_ref[:, 2:3]
    s1 = s1_ref[...]                # (C, 1)
    t1 = t1_ref[...]
    w2 = w2_ref[...]                # (C, 3*C)  im2col weight, col = k*32 + c_in
    s2 = s2_ref[...]
    t2 = t2_ref[...]

    # ---- Conv1d(1 -> 32, k=3, s=1) + BN1 + ReLU  (VPU outer products) ----
    def conv1_body(l, carry):
        x0 = x_ref[pl.ds(1 + l, 1), :]          # (1, BT)
        x1 = x_ref[pl.ds(2 + l, 1), :]
        x2 = x_ref[pl.ds(3 + l, 1), :]
        h = w1a * x0 + w1b * x1 + w1c * x2      # (C, BT)
        h1_ref[l] = jnp.maximum(h * s1 + t1, 0.0)
        return carry

    lax.fori_loop(0, L1, conv1_body, 0)

    # ---- Conv1d(32 -> 32, k=3, s=1) as im2col MXU matmul + BN2 + ReLU ----
    def conv2_body(l, carry):
        cat = jnp.concatenate(
            [h1_ref[l], h1_ref[l + 1], h1_ref[l + 2]], axis=0)   # (3C, BT)
        h = jnp.dot(w2, cat, preferred_element_type=jnp.float32)  # (C, BT)
        h2_ref[l] = jnp.maximum(h * s2 + t2, 0.0)
        return carry

    lax.fori_loop(0, L2, conv2_body, 0)

    # ---- MaxPool1d(k=3, s=2) -> flattened (i*32 + c) feature rows --------
    for i in range(LP):  # static unroll: aligned static stores into fc_ref
        p = jnp.maximum(jnp.maximum(h2_ref[2 * i], h2_ref[2 * i + 1]),
                        h2_ref[2 * i + 2])                         # (C, BT)
        fc_ref[32 * i:32 * (i + 1), :] = p

    # ---- Linear(1409, 128) -> Linear(128, 94) -> Sigmoid -----------------
    need = x_ref[0:1, :]                                           # (1, BT)
    h = jnp.dot(wa_ref[...], fc_ref[...],
                preferred_element_type=jnp.float32)                # (128, BT)
    h = h + wan_ref[...] * need + ba_ref[...]
    z = jnp.dot(wb_ref[...], h,
                preferred_element_type=jnp.float32) + bb_ref[...]  # (94, BT)
    out_ref[...] = pl.reciprocal(1.0 + jnp.exp(-z), approx=True)   # sigmoid


# --------------------------------------------------------------------------
# Wrapper: parameter folding / permutation + pallas_call plumbing
# --------------------------------------------------------------------------
@functools.partial(jax.jit, static_argnames=("b_tile",))
def cnn2_forward(x, p, b_tile=128):
    assert x.shape[1] == L_IN + 1, "Wrong number of parameters"
    B = x.shape[0]
    bt = b_tile
    n_tiles = (B + bt - 1) // bt
    bpad = n_tiles * bt

    # Batch on lanes: pass x transposed and zero-padded to a lane multiple.
    xt = jnp.pad(jnp.transpose(x), ((0, 0), (0, bpad - B)))       # (95, bpad)

    # Fold conv bias + BatchNorm(eval) into per-channel scale/shift.
    s1 = p['bn1_g'] / jnp.sqrt(p['bn1_rv'] + BN_EPS)
    t1 = (p['conv1_b'] - p['bn1_rm']) * s1 + p['bn1_b']
    s2 = p['bn2_g'] / jnp.sqrt(p['bn2_rv'] + BN_EPS)
    t2 = (p['conv2_b'] - p['bn2_rm']) * s2 + p['bn2_b']

    w1 = p['conv1_w'][:, 0, :]                                     # (32, 3)
    # im2col conv2 weight: w2[c_out, k*32 + c_in]
    w2 = jnp.transpose(p['conv2_w'], (0, 2, 1)).reshape(C, 3 * C)  # (32, 96)
    # FC1 weight: drop the `need` column and permute from PyTorch flatten
    # order (1 + c*44 + i) to the kernel's row order (i*32 + c).
    wa_perm = jnp.transpose(
        p['fcin_w'][:, 1:].reshape(NUM_NEUR, C, LP), (0, 2, 1)
    ).reshape(NUM_NEUR, C * LP)                                    # (128, 1408)
    wa_need = p['fcin_w'][:, 0:1]                                  # (128, 1)
    ba = p['fcin_b'].reshape(NUM_NEUR, 1)
    wb = p['fcout_w']                                              # (94, 128)
    bb = p['fcout_b'].reshape(NUM_OUT, 1)

    def const_spec(shape):
        return pl.BlockSpec(shape, lambda t: (0, 0))

    out_t = pl.pallas_call(
        cnn2_fused_kernel,
        out_shape=jax.ShapeDtypeStruct((NUM_OUT, bpad), jnp.float32),
        grid=(n_tiles,),
        in_specs=[
            pl.BlockSpec((L_IN + 1, bt), lambda t: (0, t)),   # x tile
            const_spec((C, 3)),               # w1
            const_spec((C, 1)),               # s1
            const_spec((C, 1)),               # t1
            const_spec((C, 3 * C)),           # w2 (im2col)
            const_spec((C, 1)),               # s2
            const_spec((C, 1)),               # t2
            const_spec((NUM_NEUR, C * LP)),   # wa_perm
            const_spec((NUM_NEUR, 1)),        # wa_need
            const_spec((NUM_NEUR, 1)),        # ba
            const_spec((NUM_OUT, NUM_NEUR)),  # wb
            const_spec((NUM_OUT, 1)),         # bb
        ],
        out_specs=pl.BlockSpec((NUM_OUT, bt), lambda t: (0, t)),
        scratch_shapes=[
            pltpu.VMEM((L1, C, bt), jnp.float32),       # h1
            pltpu.VMEM((L2, C, bt), jnp.float32),       # h2
            pltpu.VMEM((C * LP, bt), jnp.float32),      # flattened pool / fc in
        ],
        compiler_params=pltpu.CompilerParams(
            dimension_semantics=("parallel",)),
    )(xt, w1, s1.reshape(C, 1), t1.reshape(C, 1), w2,
      s2.reshape(C, 1), t2.reshape(C, 1),
      wa_perm, wa_need, ba, wb, bb)

    return jnp.transpose(out_t)[:B]                                # (B, 94)


# --------------------------------------------------------------------------
# Deterministic synthetic parameters (shapes from CNN2.__init__)
# --------------------------------------------------------------------------
def make_params(key):
    ks = jax.random.split(key, 16)
    f32 = jnp.float32
    return {
        'conv1_w': 0.3 * jax.random.normal(ks[0], (C, 1, 3), f32),
        'conv1_b': 0.1 * jax.random.normal(ks[1], (C,), f32),
        'bn1_g': 1.0 + 0.1 * jax.random.normal(ks[2], (C,), f32),
        'bn1_b': 0.1 * jax.random.normal(ks[3], (C,), f32),
        'bn1_rm': 0.05 * jax.random.normal(ks[4], (C,), f32),
        'bn1_rv': 0.5 + jnp.abs(jax.random.normal(ks[5], (C,), f32)),
        'conv2_w': 0.1 * jax.random.normal(ks[6], (C, C, 3), f32),
        'conv2_b': 0.1 * jax.random.normal(ks[7], (C,), f32),
        'bn2_g': 1.0 + 0.1 * jax.random.normal(ks[8], (C,), f32),
        'bn2_b': 0.1 * jax.random.normal(ks[9], (C,), f32),
        'bn2_rm': 0.05 * jax.random.normal(ks[10], (C,), f32),
        'bn2_rv': 0.5 + jnp.abs(jax.random.normal(ks[11], (C,), f32)),
        'fcin_w': 0.03 * jax.random.normal(ks[12], (NUM_NEUR, C * LP + 1), f32),
        'fcin_b': 0.05 * jax.random.normal(ks[13], (NUM_NEUR,), f32),
        'fcout_w': 0.1 * jax.random.normal(ks[14], (NUM_OUT, NUM_NEUR), f32),
        'fcout_b': 0.05 * jax.random.normal(ks[15], (NUM_OUT,), f32),
    }


# --------------------------------------------------------------------------
# Pure-JAX reference (numerical sanity check)
# --------------------------------------------------------------------------
def reference_forward(x, p):
    B = x.shape[0]
    need = x[:, 0:1]
    hc = x[:, 1:].reshape(B, 1, L_IN)

    def bn(y, g, b, rm, rv):
        return ((y - rm[None, :, None]) / jnp.sqrt(rv + BN_EPS)[None, :, None]
                * g[None, :, None] + b[None, :, None])

    dn = ('NCH', 'OIH', 'NCH')
    y = jax.lax.conv_general_dilated(hc, p['conv1_w'], (1,), 'VALID',
                                     dimension_numbers=dn) + p['conv1_b'][None, :, None]
    y = jnp.maximum(bn(y, p['bn1_g'], p['bn1_b'], p['bn1_rm'], p['bn1_rv']), 0.0)
    y = jax.lax.conv_general_dilated(y, p['conv2_w'], (1,), 'VALID',
                                     dimension_numbers=dn) + p['conv2_b'][None, :, None]
    y = jnp.maximum(bn(y, p['bn2_g'], p['bn2_b'], p['bn2_rm'], p['bn2_rv']), 0.0)
    y = jnp.maximum(jnp.maximum(y[:, :, 0:88:2], y[:, :, 1:89:2]), y[:, :, 2:90:2])
    fc_in = jnp.concatenate([need, y.reshape(B, -1)], axis=1)
    h = fc_in @ p['fcin_w'].T + p['fcin_b']
    z = h @ p['fcout_w'].T + p['fcout_b']
    return jax.nn.sigmoid(z)


if __name__ == "__main__":
    # 200 samples -> padded to 2 grid tiles of 128; still tiny end-to-end.
    B = 200
    x = jax.random.normal(jax.random.PRNGKey(0), (B, L_IN + 1), dtype=jnp.float32)
    params = make_params(jax.random.PRNGKey(1))

    out = cnn2_forward(x, params)
    out = jax.block_until_ready(out)

    ref = reference_forward(x, params)
    assert out.shape == (B, NUM_OUT), out.shape
    assert bool(jnp.all(jnp.isfinite(out)))
    assert bool(jnp.allclose(out, ref, atol=2e-3, rtol=2e-3)), \
        f"max abs diff = {float(jnp.max(jnp.abs(out - ref)))}"
    print("KERNEL_OK")
</pallas_src>

<mosaic_0001>
module attributes {stable_mosaic.version = 11 : i64} {
  func.func @cnn2_fused_kernel(%arg0: i32, %arg1: memref<95x128xf32, #tpu.memory_space<vmem>>, %arg2: memref<32x3xf32, #tpu.memory_space<vmem>>, %arg3: memref<32x1xf32, #tpu.memory_space<vmem>>, %arg4: memref<32x1xf32, #tpu.memory_space<vmem>>, %arg5: memref<32x96xf32, #tpu.memory_space<vmem>>, %arg6: memref<32x1xf32, #tpu.memory_space<vmem>>, %arg7: memref<32x1xf32, #tpu.memory_space<vmem>>, %arg8: memref<128x1408xf32, #tpu.memory_space<vmem>>, %arg9: memref<128x1xf32, #tpu.memory_space<vmem>>, %arg10: memref<128x1xf32, #tpu.memory_space<vmem>>, %arg11: memref<94x128xf32, #tpu.memory_space<vmem>>, %arg12: memref<94x1xf32, #tpu.memory_space<vmem>>, %arg13: memref<94x128xf32, #tpu.memory_space<vmem>>, %arg14: memref<92x32x128xf32, #tpu.memory_space<vmem>>, %arg15: memref<90x32x128xf32, #tpu.memory_space<vmem>>, %arg16: memref<1408x128xf32, #tpu.memory_space<vmem>>) attributes {dimension_semantics = [#tpu.dimension_semantics<parallel>], iteration_bounds = array<i64: 2>, scalar_prefetch = 0 : i64, scratch_operands = 3 : i64, tpu.core_type = #tpu.core_type<tc>, window_params = [{transform_indices = @transform_0, window_bounds = array<i64: 95, 128>}, {pipeline_mode = #tpu.pipeline_mode<synchronous>, transform_indices = @transform_1, window_bounds = array<i64: 32, 3>}, {pipeline_mode = #tpu.pipeline_mode<synchronous>, transform_indices = @transform_2, window_bounds = array<i64: 32, 1>}, {pipeline_mode = #tpu.pipeline_mode<synchronous>, transform_indices = @transform_3, window_bounds = array<i64: 32, 1>}, {pipeline_mode = #tpu.pipeline_mode<synchronous>, transform_indices = @transform_4, window_bounds = array<i64: 32, 96>}, {pipeline_mode = #tpu.pipeline_mode<synchronous>, transform_indices = @transform_5, window_bounds = array<i64: 32, 1>}, {pipeline_mode = #tpu.pipeline_mode<synchronous>, transform_indices = @transform_6, window_bounds = array<i64: 32, 1>}, {pipeline_mode = #tpu.pipeline_mode<synchronous>, transform_indices = @transform_7, window_bounds = array<i64: 128, 1408>}, {pipeline_mode = #tpu.pipeline_mode<synchronous>, transform_indices = @transform_8, window_bounds = array<i64: 128, 1>}, {pipeline_mode = #tpu.pipeline_mode<synchronous>, transform_indices = @transform_9, window_bounds = array<i64: 128, 1>}, {pipeline_mode = #tpu.pipeline_mode<synchronous>, transform_indices = @transform_10, window_bounds = array<i64: 94, 128>}, {pipeline_mode = #tpu.pipeline_mode<synchronous>, transform_indices = @transform_11, window_bounds = array<i64: 94, 1>}, {transform_indices = @transform_12, window_bounds = array<i64: 94, 128>}]} {
    %c0 = arith.constant 0 : index
    %c0_0 = arith.constant 0 : index
    %0 = vector.load %arg2[%c0, %c0_0] : memref<32x3xf32, #tpu.memory_space<vmem>>, vector<32x1xf32>
    %c0_1 = arith.constant 0 : index
    %c1 = arith.constant 1 : index
    %1 = vector.load %arg2[%c0_1, %c1] : memref<32x3xf32, #tpu.memory_space<vmem>>, vector<32x1xf32>
    %c0_2 = arith.constant 0 : index
    %c2 = arith.constant 2 : index
    %2 = vector.load %arg2[%c0_2, %c2] : memref<32x3xf32, #tpu.memory_space<vmem>>, vector<32x1xf32>
    %c0_3 = arith.constant 0 : index
    %c0_4 = arith.constant 0 : index
    %3 = vector.load %arg3[%c0_3, %c0_4] : memref<32x1xf32, #tpu.memory_space<vmem>>, vector<32x1xf32>
    %c0_5 = arith.constant 0 : index
    %c0_6 = arith.constant 0 : index
    %4 = vector.load %arg4[%c0_5, %c0_6] : memref<32x1xf32, #tpu.memory_space<vmem>>, vector<32x1xf32>
    %c0_7 = arith.constant 0 : index
    %c0_8 = arith.constant 0 : index
    %5 = vector.load %arg5[%c0_7, %c0_8] : memref<32x96xf32, #tpu.memory_space<vmem>>, vector<32x96xf32>
    %c0_9 = arith.constant 0 : index
    %c0_10 = arith.constant 0 : index
    %6 = vector.load %arg6[%c0_9, %c0_10] : memref<32x1xf32, #tpu.memory_space<vmem>>, vector<32x1xf32>
    %c0_11 = arith.constant 0 : index
    %c0_12 = arith.constant 0 : index
    %7 = vector.load %arg7[%c0_11, %c0_12] : memref<32x1xf32, #tpu.memory_space<vmem>>, vector<32x1xf32>
    %c0_i32 = arith.constant 0 : i32
    %c92_i32 = arith.constant 92 : i32
    %8 = arith.addi %c0_i32, %c92_i32 : i32
    %c1_i32 = arith.constant 1 : i32
    scf.for %arg17 = %c0_i32 to %8 step %c1_i32  : i32 {
      %c1_i32_393 = arith.constant 1 : i32
      %430 = arith.addi %c1_i32_393, %arg17 : i32
      %431 = arith.index_cast %430 : i32 to index
      %c0_394 = arith.constant 0 : index
      %432 = vector.load %arg1[%431, %c0_394] : memref<95x128xf32, #tpu.memory_space<vmem>>, vector<1x128xf32>
      %c2_i32 = arith.constant 2 : i32
      %433 = arith.addi %c2_i32, %arg17 : i32
      %434 = arith.index_cast %433 : i32 to index
      %c0_395 = arith.constant 0 : index
      %435 = vector.load %arg1[%434, %c0_395] : memref<95x128xf32, #tpu.memory_space<vmem>>, vector<1x128xf32>
      %c3_i32 = arith.constant 3 : i32
      %436 = arith.addi %c3_i32, %arg17 : i32
      %437 = arith.index_cast %436 : i32 to index
      %c0_396 = arith.constant 0 : index
      %438 = vector.load %arg1[%437, %c0_396] : memref<95x128xf32, #tpu.memory_space<vmem>>, vector<1x128xf32>
      %439 = vector.broadcast %0 : vector<32x1xf32> to vector<32x128xf32>
      %440 = vector.broadcast %432 : vector<1x128xf32> to vector<32x128xf32>
      %441 = arith.mulf %439, %440 : vector<32x128xf32>
      %442 = vector.broadcast %1 : vector<32x1xf32> to vector<32x128xf32>
      %443 = vector.broadcast %435 : vector<1x128xf32> to vector<32x128xf32>
      %444 = arith.mulf %442, %443 : vector<32x128xf32>
      %445 = arith.addf %441, %444 : vector<32x128xf32>
      %446 = vector.broadcast %2 : vector<32x1xf32> to vector<32x128xf32>
      %447 = vector.broadcast %438 : vector<1x128xf32> to vector<32x128xf32>
      %448 = arith.mulf %446, %447 : vector<32x128xf32>
      %449 = arith.addf %445, %448 : vector<32x128xf32>
      %450 = vector.broadcast %3 : vector<32x1xf32> to vector<32x128xf32>
      %451 = arith.mulf %449, %450 : vector<32x128xf32>
      %452 = vector.broadcast %4 : vector<32x1xf32> to vector<32x128xf32>
      %453 = arith.addf %451, %452 : vector<32x128xf32>
      %cst_397 = arith.constant 0.000000e+00 : f32
      %454 = vector.broadcast %cst_397 : f32 to vector<32x128xf32>
      %455 = arith.maximumf %453, %454 : vector<32x128xf32>
      %456 = arith.index_cast %arg17 : i32 to index
      %c0_398 = arith.constant 0 : index
      %c0_399 = arith.constant 0 : index
      %457 = vector.load %arg14[%456, %c0_398, %c0_399] : memref<92x32x128xf32, #tpu.memory_space<vmem>>, vector<1x32x128xf32>
      %458 = vector.shape_cast %457 : vector<1x32x128xf32> to vector<32x128xf32>
      %459 = vector.shape_cast %455 : vector<32x128xf32> to vector<1x32x128xf32>
      tpu.vector_store %arg14[%456, %c0_398, %c0_399], %459 {strides = array<i32>} : memref<92x32x128xf32, #tpu.memory_space<vmem>>, vector<1x32x128xf32>,
    }
    %c92_i32_13 = arith.constant 92 : i32
    %c0_i32_14 = arith.constant 0 : i32
    %c90_i32 = arith.constant 90 : i32
    %9 = arith.addi %c0_i32_14, %c90_i32 : i32
    %c1_i32_15 = arith.constant 1 : i32
    scf.for %arg17 = %c0_i32_14 to %9 step %c1_i32_15  : i32 {
      %430 = arith.index_cast %arg17 : i32 to index
      %c0_393 = arith.constant 0 : index
      %c0_394 = arith.constant 0 : index
      %431 = vector.load %arg14[%430, %c0_393, %c0_394] : memref<92x32x128xf32, #tpu.memory_space<vmem>>, vector<1x32x128xf32>
      %432 = vector.shape_cast %431 : vector<1x32x128xf32> to vector<32x128xf32>
      %c1_i32_395 = arith.constant 1 : i32
      %433 = arith.addi %arg17, %c1_i32_395 : i32
      %434 = arith.index_cast %433 : i32 to index
      %c0_396 = arith.constant 0 : index
      %c0_397 = arith.constant 0 : index
      %435 = vector.load %arg14[%434, %c0_396, %c0_397] : memref<92x32x128xf32, #tpu.memory_space<vmem>>, vector<1x32x128xf32>
      %436 = vector.shape_cast %435 : vector<1x32x128xf32> to vector<32x128xf32>
      %c2_i32 = arith.constant 2 : i32
      %437 = arith.addi %arg17, %c2_i32 : i32
      %438 = arith.index_cast %437 : i32 to index
      %c0_398 = arith.constant 0 : index
      %c0_399 = arith.constant 0 : index
      %439 = vector.load %arg14[%438, %c0_398, %c0_399] : memref<92x32x128xf32, #tpu.memory_space<vmem>>, vector<1x32x128xf32>
      %440 = vector.shape_cast %439 : vector<1x32x128xf32> to vector<32x128xf32>
      %441 = tpu.concatenate %432, %436, %440 in 0 : vector<32x128xf32>, vector<32x128xf32>, vector<32x128xf32> -> vector<96x128xf32>
      %cst_400 = arith.constant dense<0.000000e+00> : vector<32x128xf32>
      %442 = tpu.matmul %5, %441, %cst_400 {dimension_numbers = #tpu.dot_dimension_numbers<[1], [0], [0], [1], [0, 0, 1, 1], [], []>} : vector<32x96xf32>, vector<96x128xf32>, vector<32x128xf32> -> vector<32x128xf32>
      %443 = vector.broadcast %6 : vector<32x1xf32> to vector<32x128xf32>
      %444 = arith.mulf %442, %443 : vector<32x128xf32>
      %445 = vector.broadcast %7 : vector<32x1xf32> to vector<32x128xf32>
      %446 = arith.addf %444, %445 : vector<32x128xf32>
      %cst_401 = arith.constant 0.000000e+00 : f32
      %447 = vector.broadcast %cst_401 : f32 to vector<32x128xf32>
      %448 = arith.maximumf %446, %447 : vector<32x128xf32>
      %449 = arith.index_cast %arg17 : i32 to index
      %c0_402 = arith.constant 0 : index
      %c0_403 = arith.constant 0 : index
      %450 = vector.load %arg15[%449, %c0_402, %c0_403] : memref<90x32x128xf32, #tpu.memory_space<vmem>>, vector<1x32x128xf32>
      %451 = vector.shape_cast %450 : vector<1x32x128xf32> to vector<32x128xf32>
      %452 = vector.shape_cast %448 : vector<32x128xf32> to vector<1x32x128xf32>
      tpu.vector_store %arg15[%449, %c0_402, %c0_403], %452 {strides = array<i32>} : memref<90x32x128xf32, #tpu.memory_space<vmem>>, vector<1x32x128xf32>,
    }
    %c90_i32_16 = arith.constant 90 : i32
    %c0_17 = arith.constant 0 : index
    %c0_18 = arith.constant 0 : index
    %c0_19 = arith.constant 0 : index
    %10 = vector.load %arg15[%c0_17, %c0_18, %c0_19] : memref<90x32x128xf32, #tpu.memory_space<vmem>>, vector<1x32x128xf32>
    %11 = vector.shape_cast %10 : vector<1x32x128xf32> to vector<32x128xf32>
    %c1_20 = arith.constant 1 : index
    %c0_21 = arith.constant 0 : index
    %c0_22 = arith.constant 0 : index
    %12 = vector.load %arg15[%c1_20, %c0_21, %c0_22] : memref<90x32x128xf32, #tpu.memory_space<vmem>>, vector<1x32x128xf32>
    %13 = vector.shape_cast %12 : vector<1x32x128xf32> to vector<32x128xf32>
    %14 = arith.maximumf %11, %13 : vector<32x128xf32>
    %c2_23 = arith.constant 2 : index
    %c0_24 = arith.constant 0 : index
    %c0_25 = arith.constant 0 : index
    %15 = vector.load %arg15[%c2_23, %c0_24, %c0_25] : memref<90x32x128xf32, #tpu.memory_space<vmem>>, vector<1x32x128xf32>
    %16 = vector.shape_cast %15 : vector<1x32x128xf32> to vector<32x128xf32>
    %17 = arith.maximumf %14, %16 : vector<32x128xf32>
    %c0_26 = arith.constant 0 : index
    %c0_27 = arith.constant 0 : index
    %18 = vector.load %arg16[%c0_26, %c0_27] : memref<1408x128xf32, #tpu.memory_space<vmem>>, vector<32x128xf32>
    tpu.vector_store %arg16[%c0_26, %c0_27], %17 {strides = array<i32>} : memref<1408x128xf32, #tpu.memory_space<vmem>>, vector<32x128xf32>,
    %c2_28 = arith.constant 2 : index
    %c0_29 = arith.constant 0 : index
    %c0_30 = arith.constant 0 : index
    %19 = vector.load %arg15[%c2_28, %c0_29, %c0_30] : memref<90x32x128xf32, #tpu.memory_space<vmem>>, vector<1x32x128xf32>
    %20 = vector.shape_cast %19 : vector<1x32x128xf32> to vector<32x128xf32>
    %c3 = arith.constant 3 : index
    %c0_31 = arith.constant 0 : index
    %c0_32 = arith.constant 0 : index
    %21 = vector.load %arg15[%c3, %c0_31, %c0_32] : memref<90x32x128xf32, #tpu.memory_space<vmem>>, vector<1x32x128xf32>
    %22 = vector.shape_cast %21 : vector<1x32x128xf32> to vector<32x128xf32>
    %23 = arith.maximumf %20, %22 : vector<32x128xf32>
    %c4 = arith.constant 4 : index
    %c0_33 = arith.constant 0 : index
    %c0_34 = arith.constant 0 : index
    %24 = vector.load %arg15[%c4, %c0_33, %c0_34] : memref<90x32x128xf32, #tpu.memory_space<vmem>>, vector<1x32x128xf32>
    %25 = vector.shape_cast %24 : vector<1x32x128xf32> to vector<32x128xf32>
    %26 = arith.maximumf %23, %25 : vector<32x128xf32>
    %c32 = arith.constant 32 : index
    %c0_35 = arith.constant 0 : index
    %27 = vector.load %arg16[%c32, %c0_35] : memref<1408x128xf32, #tpu.memory_space<vmem>>, vector<32x128xf32>
    tpu.vector_store %arg16[%c32, %c0_35], %26 {strides = array<i32>} : memref<1408x128xf32, #tpu.memory_space<vmem>>, vector<32x128xf32>,
    %c4_36 = arith.constant 4 : index
    %c0_37 = arith.constant 0 : index
    %c0_38 = arith.constant 0 : index
    %28 = vector.load %arg15[%c4_36, %c0_37, %c0_38] : memref<90x32x128xf32, #tpu.memory_space<vmem>>, vector<1x32x128xf32>
    %29 = vector.shape_cast %28 : vector<1x32x128xf32> to vector<32x128xf32>
    %c5 = arith.constant 5 : index
    %c0_39 = arith.constant 0 : index
    %c0_40 = arith.constant 0 : index
    %30 = vector.load %arg15[%c5, %c0_39, %c0_40] : memref<90x32x128xf32, #tpu.memory_space<vmem>>, vector<1x32x128xf32>
    %31 = vector.shape_cast %30 : vector<1x32x128xf32> to vector<32x128xf32>
    %32 = arith.maximumf %29, %31 : vector<32x128xf32>
    %c6 = arith.constant 6 : index
    %c0_41 = arith.constant 0 : index
    %c0_42 = arith.constant 0 : index
    %33 = vector.load %arg15[%c6, %c0_41, %c0_42] : memref<90x32x128xf32, #tpu.memory_space<vmem>>, vector<1x32x128xf32>
    %34 = vector.shape_cast %33 : vector<1x32x128xf32> to vector<32x128xf32>
    %35 = arith.maximumf %32, %34 : vector<32x128xf32>
    %c64 = arith.constant 64 : index
    %c0_43 = arith.constant 0 : index
    %36 = vector.load %arg16[%c64, %c0_43] : memref<1408x128xf32, #tpu.memory_space<vmem>>, vector<32x128xf32>
    tpu.vector_store %arg16[%c64, %c0_43], %35 {strides = array<i32>} : memref<1408x128xf32, #tpu.memory_space<vmem>>, vector<32x128xf32>,
    %c6_44 = arith.constant 6 : index
    %c0_45 = arith.constant 0 : index
    %c0_46 = arith.constant 0 : index
    %37 = vector.load %arg15[%c6_44, %c0_45, %c0_46] : memref<90x32x128xf32, #tpu.memory_space<vmem>>, vector<1x32x128xf32>
    %38 = vector.shape_cast %37 : vector<1x32x128xf32> to vector<32x128xf32>
    %c7 = arith.constant 7 : index
    %c0_47 = arith.constant 0 : index
    %c0_48 = arith.constant 0 : index
    %39 = vector.load %arg15[%c7, %c0_47, %c0_48] : memref<90x32x128xf32, #tpu.memory_space<vmem>>, vector<1x32x128xf32>
    %40 = vector.shape_cast %39 : vector<1x32x128xf32> to vector<32x128xf32>
    %41 = arith.maximumf %38, %40 : vector<32x128xf32>
    %c8 = arith.constant 8 : index
    %c0_49 = arith.constant 0 : index
    %c0_50 = arith.constant 0 : index
    %42 = vector.load %arg15[%c8, %c0_49, %c0_50] : memref<90x32x128xf32, #tpu.memory_space<vmem>>, vector<1x32x128xf32>
    %43 = vector.shape_cast %42 : vector<1x32x128xf32> to vector<32x128xf32>
    %44 = arith.maximumf %41, %43 : vector<32x128xf32>
    %c96 = arith.constant 96 : index
    %c0_51 = arith.constant 0 : index
    %45 = vector.load %arg16[%c96, %c0_51] : memref<1408x128xf32, #tpu.memory_space<vmem>>, vector<32x128xf32>
    tpu.vector_store %arg16[%c96, %c0_51], %44 {strides = array<i32>} : memref<1408x128xf32, #tpu.memory_space<vmem>>, vector<32x128xf32>,
    %c8_52 = arith.constant 8 : index
    %c0_53 = arith.constant 0 : index
    %c0_54 = arith.constant 0 : index
    %46 = vector.load %arg15[%c8_52, %c0_53, %c0_54] : memref<90x32x128xf32, #tpu.memory_space<vmem>>, vector<1x32x128xf32>
    %47 = vector.shape_cast %46 : vector<1x32x128xf32> to vector<32x128xf32>
    %c9 = arith.constant 9 : index
    %c0_55 = arith.constant 0 : index
    %c0_56 = arith.constant 0 : index
    %48 = vector.load %arg15[%c9, %c0_55, %c0_56] : memref<90x32x128xf32, #tpu.memory_space<vmem>>, vector<1x32x128xf32>
    %49 = vector.shape_cast %48 : vector<1x32x128xf32> to vector<32x128xf32>
    %50 = arith.maximumf %47, %49 : vector<32x128xf32>
    %c10 = arith.constant 10 : index
    %c0_57 = arith.constant 0 : index
    %c0_58 = arith.constant 0 : index
    %51 = vector.load %arg15[%c10, %c0_57, %c0_58] : memref<90x32x128xf32, #tpu.memory_space<vmem>>, vector<1x32x128xf32>
    %52 = vector.shape_cast %51 : vector<1x32x128xf32> to vector<32x128xf32>
    %53 = arith.maximumf %50, %52 : vector<32x128xf32>
    %c128 = arith.constant 128 : index
    %c0_59 = arith.constant 0 : index
    %54 = vector.load %arg16[%c128, %c0_59] : memref<1408x128xf32, #tpu.memory_space<vmem>>, vector<32x128xf32>
    tpu.vector_store %arg16[%c128, %c0_59], %53 {strides = array<i32>} : memref<1408x128xf32, #tpu.memory_space<vmem>>, vector<32x128xf32>,
    %c10_60 = arith.constant 10 : index
    %c0_61 = arith.constant 0 : index
    %c0_62 = arith.constant 0 : index
    %55 = vector.load %arg15[%c10_60, %c0_61, %c0_62] : memref<90x32x128xf32, #tpu.memory_space<vmem>>, vector<1x32x128xf32>
    %56 = vector.shape_cast %55 : vector<1x32x128xf32> to vector<32x128xf32>
    %c11 = arith.constant 11 : index
    %c0_63 = arith.constant 0 : index
    %c0_64 = arith.constant 0 : index
    %57 = vector.load %arg15[%c11, %c0_63, %c0_64] : memref<90x32x128xf32, #tpu.memory_space<vmem>>, vector<1x32x128xf32>
    %58 = vector.shape_cast %57 : vector<1x32x128xf32> to vector<32x128xf32>
    %59 = arith.maximumf %56, %58 : vector<32x128xf32>
    %c12 = arith.constant 12 : index
    %c0_65 = arith.constant 0 : index
    %c0_66 = arith.constant 0 : index
    %60 = vector.load %arg15[%c12, %c0_65, %c0_66] : memref<90x32x128xf32, #tpu.memory_space<vmem>>, vector<1x32x128xf32>
    %61 = vector.shape_cast %60 : vector<1x32x128xf32> to vector<32x128xf32>
    %62 = arith.maximumf %59, %61 : vector<32x128xf32>
    %c160 = arith.constant 160 : index
    %c0_67 = arith.constant 0 : index
    %63 = vector.load %arg16[%c160, %c0_67] : memref<1408x128xf32, #tpu.memory_space<vmem>>, vector<32x128xf32>
    tpu.vector_store %arg16[%c160, %c0_67], %62 {strides = array<i32>} : memref<1408x128xf32, #tpu.memory_space<vmem>>, vector<32x128xf32>,
    %c12_68 = arith.constant 12 : index
    %c0_69 = arith.constant 0 : index
    %c0_70 = arith.constant 0 : index
    %64 = vector.load %arg15[%c12_68, %c0_69, %c0_70] : memref<90x32x128xf32, #tpu.memory_space<vmem>>, vector<1x32x128xf32>
    %65 = vector.shape_cast %64 : vector<1x32x128xf32> to vector<32x128xf32>
    %c13 = arith.constant 13 : index
    %c0_71 = arith.constant 0 : index
    %c0_72 = arith.constant 0 : index
    %66 = vector.load %arg15[%c13, %c0_71, %c0_72] : memref<90x32x128xf32, #tpu.memory_space<vmem>>, vector<1x32x128xf32>
    %67 = vector.shape_cast %66 : vector<1x32x128xf32> to vector<32x128xf32>
    %68 = arith.maximumf %65, %67 : vector<32x128xf32>
    %c14 = arith.constant 14 : index
    %c0_73 = arith.constant 0 : index
    %c0_74 = arith.constant 0 : index
    %69 = vector.load %arg15[%c14, %c0_73, %c0_74] : memref<90x32x128xf32, #tpu.memory_space<vmem>>, vector<1x32x128xf32>
    %70 = vector.shape_cast %69 : vector<1x32x128xf32> to vector<32x128xf32>
    %71 = arith.maximumf %68, %70 : vector<32x128xf32>
    %c192 = arith.constant 192 : index
    %c0_75 = arith.constant 0 : index
    %72 = vector.load %arg16[%c192, %c0_75] : memref<1408x128xf32, #tpu.memory_space<vmem>>, vector<32x128xf32>
    tpu.vector_store %arg16[%c192, %c0_75], %71 {strides = array<i32>} : memref<1408x128xf32, #tpu.memory_space<vmem>>, vector<32x128xf32>,
    %c14_76 = arith.constant 14 : index
    %c0_77 = arith.constant 0 : index
    %c0_78 = arith.constant 0 : index
    %73 = vector.load %arg15[%c14_76, %c0_77, %c0_78] : memref<90x32x128xf32, #tpu.memory_space<vmem>>, vector<1x32x128xf32>
    %74 = vector.shape_cast %73 : vector<1x32x128xf32> to vector<32x128xf32>
    %c15 = arith.constant 15 : index
    %c0_79 = arith.constant 0 : index
    %c0_80 = arith.constant 0 : index
    %75 = vector.load %arg15[%c15, %c0_79, %c0_80] : memref<90x32x128xf32, #tpu.memory_space<vmem>>, vector<1x32x128xf32>
    %76 = vector.shape_cast %75 : vector<1x32x128xf32> to vector<32x128xf32>
    %77 = arith.maximumf %74, %76 : vector<32x128xf32>
    %c16 = arith.constant 16 : index
    %c0_81 = arith.constant 0 : index
    %c0_82 = arith.constant 0 : index
    %78 = vector.load %arg15[%c16, %c0_81, %c0_82] : memref<90x32x128xf32, #tpu.memory_space<vmem>>, vector<1x32x128xf32>
    %79 = vector.shape_cast %78 : vector<1x32x128xf32> to vector<32x128xf32>
    %80 = arith.maximumf %77, %79 : vector<32x128xf32>
    %c224 = arith.constant 224 : index
    %c0_83 = arith.constant 0 : index
    %81 = vector.load %arg16[%c224, %c0_83] : memref<1408x128xf32, #tpu.memory_space<vmem>>, vector<32x128xf32>
    tpu.vector_store %arg16[%c224, %c0_83], %80 {strides = array<i32>} : memref<1408x128xf32, #tpu.memory_space<vmem>>, vector<32x128xf32>,
    %c16_84 = arith.constant 16 : index
    %c0_85 = arith.constant 0 : index
    %c0_86 = arith.constant 0 : index
    %82 = vector.load %arg15[%c16_84, %c0_85, %c0_86] : memref<90x32x128xf32, #tpu.memory_space<vmem>>, vector<1x32x128xf32>
    %83 = vector.shape_cast %82 : vector<1x32x128xf32> to vector<32x128xf32>
    %c17 = arith.constant 17 : index
    %c0_87 = arith.constant 0 : index
    %c0_88 = arith.constant 0 : index
    %84 = vector.load %arg15[%c17, %c0_87, %c0_88] : memref<90x32x128xf32, #tpu.memory_space<vmem>>, vector<1x32x128xf32>
    %85 = vector.shape_cast %84 : vector<1x32x128xf32> to vector<32x128xf32>
    %86 = arith.maximumf %83, %85 : vector<32x128xf32>
    %c18 = arith.constant 18 : index
    %c0_89 = arith.constant 0 : index
    %c0_90 = arith.constant 0 : index
    %87 = vector.load %arg15[%c18, %c0_89, %c0_90] : memref<90x32x128xf32, #tpu.memory_space<vmem>>, vector<1x32x128xf32>
    %88 = vector.shape_cast %87 : vector<1x32x128xf32> to vector<32x128xf32>
    %89 = arith.maximumf %86, %88 : vector<32x128xf32>
    %c256 = arith.constant 256 : index
    %c0_91 = arith.constant 0 : index
    %90 = vector.load %arg16[%c256, %c0_91] : memref<1408x128xf32, #tpu.memory_space<vmem>>, vector<32x128xf32>
    tpu.vector_store %arg16[%c256, %c0_91], %89 {strides = array<i32>} : memref<1408x128xf32, #tpu.memory_space<vmem>>, vector<32x128xf32>,
    %c18_92 = arith.constant 18 : index
    %c0_93 = arith.constant 0 : index
    %c0_94 = arith.constant 0 : index
    %91 = vector.load %arg15[%c18_92, %c0_93, %c0_94] : memref<90x32x128xf32, #tpu.memory_space<vmem>>, vector<1x32x128xf32>
    %92 = vector.shape_cast %91 : vector<1x32x128xf32> to vector<32x128xf32>
    %c19 = arith.constant 19 : index
    %c0_95 = arith.constant 0 : index
    %c0_96 = arith.constant 0 : index
    %93 = vector.load %arg15[%c19, %c0_95, %c0_96] : memref<90x32x128xf32, #tpu.memory_space<vmem>>, vector<1x32x128xf32>
    %94 = vector.shape_cast %93 : vector<1x32x128xf32> to vector<32x128xf32>
    %95 = arith.maximumf %92, %94 : vector<32x128xf32>
    %c20 = arith.constant 20 : index
    %c0_97 = arith.constant 0 : index
    %c0_98 = arith.constant 0 : index
    %96 = vector.load %arg15[%c20, %c0_97, %c0_98] : memref<90x32x128xf32, #tpu.memory_space<vmem>>, vector<1x32x128xf32>
    %97 = vector.shape_cast %96 : vector<1x32x128xf32> to vector<32x128xf32>
    %98 = arith.maximumf %95, %97 : vector<32x128xf32>
    %c288 = arith.constant 288 : index
    %c0_99 = arith.constant 0 : index
    %99 = vector.load %arg16[%c288, %c0_99] : memref<1408x128xf32, #tpu.memory_space<vmem>>, vector<32x128xf32>
    tpu.vector_store %arg16[%c288, %c0_99], %98 {strides = array<i32>} : memref<1408x128xf32, #tpu.memory_space<vmem>>, vector<32x128xf32>,
    %c20_100 = arith.constant 20 : index
    %c0_101 = arith.constant 0 : index
    %c0_102 = arith.constant 0 : index
    %100 = vector.load %arg15[%c20_100, %c0_101, %c0_102] : memref<90x32x128xf32, #tpu.memory_space<vmem>>, vector<1x32x128xf32>
    %101 = vector.shape_cast %100 : vector<1x32x128xf32> to vector<32x128xf32>
    %c21 = arith.constant 21 : index
    %c0_103 = arith.constant 0 : index
    %c0_104 = arith.constant 0 : index
    %102 = vector.load %arg15[%c21, %c0_103, %c0_104] : memref<90x32x128xf32, #tpu.memory_space<vmem>>, vector<1x32x128xf32>
    %103 = vector.shape_cast %102 : vector<1x32x128xf32> to vector<32x128xf32>
    %104 = arith.maximumf %101, %103 : vector<32x128xf32>
    %c22 = arith.constant 22 : index
    %c0_105 = arith.constant 0 : index
    %c0_106 = arith.constant 0 : index
    %105 = vector.load %arg15[%c22, %c0_105, %c0_106] : memref<90x32x128xf32, #tpu.memory_space<vmem>>, vector<1x32x128xf32>
    %106 = vector.shape_cast %105 : vector<1x32x128xf32> to vector<32x128xf32>
    %107 = arith.maximumf %104, %106 : vector<32x128xf32>
    %c320 = arith.constant 320 : index
    %c0_107 = arith.constant 0 : index
    %108 = vector.load %arg16[%c320, %c0_107] : memref<1408x128xf32, #tpu.memory_space<vmem>>, vector<32x128xf32>
    tpu.vector_store %arg16[%c320, %c0_107], %107 {strides = array<i32>} : memref<1408x128xf32, #tpu.memory_space<vmem>>, vector<32x128xf32>,
    %c22_108 = arith.constant 22 : index
    %c0_109 = arith.constant 0 : index
    %c0_110 = arith.constant 0 : index
    %109 = vector.load %arg15[%c22_108, %c0_109, %c0_110] : memref<90x32x128xf32, #tpu.memory_space<vmem>>, vector<1x32x128xf32>
    %110 = vector.shape_cast %109 : vector<1x32x128xf32> to vector<32x128xf32>
    %c23 = arith.constant 23 : index
    %c0_111 = arith.constant 0 : index
    %c0_112 = arith.constant 0 : index
    %111 = vector.load %arg15[%c23, %c0_111, %c0_112] : memref<90x32x128xf32, #tpu.memory_space<vmem>>, vector<1x32x128xf32>
    %112 = vector.shape_cast %111 : vector<1x32x128xf32> to vector<32x128xf32>
    %113 = arith.maximumf %110, %112 : vector<32x128xf32>
    %c24 = arith.constant 24 : index
    %c0_113 = arith.constant 0 : index
    %c0_114 = arith.constant 0 : index
    %114 = vector.load %arg15[%c24, %c0_113, %c0_114] : memref<90x32x128xf32, #tpu.memory_space<vmem>>, vector<1x32x128xf32>
    %115 = vector.shape_cast %114 : vector<1x32x128xf32> to vector<32x128xf32>
    %116 = arith.maximumf %113, %115 : vector<32x128xf32>
    %c352 = arith.constant 352 : index
    %c0_115 = arith.constant 0 : index
    %117 = vector.load %arg16[%c352, %c0_115] : memref<1408x128xf32, #tpu.memory_space<vmem>>, vector<32x128xf32>
    tpu.vector_store %arg16[%c352, %c0_115], %116 {strides = array<i32>} : memref<1408x128xf32, #tpu.memory_space<vmem>>, vector<32x128xf32>,
    %c24_116 = arith.constant 24 : index
    %c0_117 = arith.constant 0 : index
    %c0_118 = arith.constant 0 : index
    %118 = vector.load %arg15[%c24_116, %c0_117, %c0_118] : memref<90x32x128xf32, #tpu.memory_space<vmem>>, vector<1x32x128xf32>
    %119 = vector.shape_cast %118 : vector<1x32x128xf32> to vector<32x128xf32>
    %c25 = arith.constant 25 : index
    %c0_119 = arith.constant 0 : index
    %c0_120 = arith.constant 0 : index
    %120 = vector.load %arg15[%c25, %c0_119, %c0_120] : memref<90x32x128xf32, #tpu.memory_space<vmem>>, vector<1x32x128xf32>
    %121 = vector.shape_cast %120 : vector<1x32x128xf32> to vector<32x128xf32>
    %122 = arith.maximumf %119, %121 : vector<32x128xf32>
    %c26 = arith.constant 26 : index
    %c0_121 = arith.constant 0 : index
    %c0_122 = arith.constant 0 : index
    %123 = vector.load %arg15[%c26, %c0_121, %c0_122] : memref<90x32x128xf32, #tpu.memory_space<vmem>>, vector<1x32x128xf32>
    %124 = vector.shape_cast %123 : vector<1x32x128xf32> to vector<32x128xf32>
    %125 = arith.maximumf %122, %124 : vector<32x128xf32>
    %c384 = arith.constant 384 : index
    %c0_123 = arith.constant 0 : index
    %126 = vector.load %arg16[%c384, %c0_123] : memref<1408x128xf32, #tpu.memory_space<vmem>>, vector<32x128xf32>
    tpu.vector_store %arg16[%c384, %c0_123], %125 {strides = array<i32>} : memref<1408x128xf32, #tpu.memory_space<vmem>>, vector<32x128xf32>,
    %c26_124 = arith.constant 26 : index
    %c0_125 = arith.constant 0 : index
    %c0_126 = arith.constant 0 : index
    %127 = vector.load %arg15[%c26_124, %c0_125, %c0_126] : memref<90x32x128xf32, #tpu.memory_space<vmem>>, vector<1x32x128xf32>
    %128 = vector.shape_cast %127 : vector<1x32x128xf32> to vector<32x128xf32>
    %c27 = arith.constant 27 : index
    %c0_127 = arith.constant 0 : index
    %c0_128 = arith.constant 0 : index
    %129 = vector.load %arg15[%c27, %c0_127, %c0_128] : memref<90x32x128xf32, #tpu.memory_space<vmem>>, vector<1x32x128xf32>
    %130 = vector.shape_cast %129 : vector<1x32x128xf32> to vector<32x128xf32>
    %131 = arith.maximumf %128, %130 : vector<32x128xf32>
    %c28 = arith.constant 28 : index
    %c0_129 = arith.constant 0 : index
    %c0_130 = arith.constant 0 : index
    %132 = vector.load %arg15[%c28, %c0_129, %c0_130] : memref<90x32x128xf32, #tpu.memory_space<vmem>>, vector<1x32x128xf32>
    %133 = vector.shape_cast %132 : vector<1x32x128xf32> to vector<32x128xf32>
    %134 = arith.maximumf %131, %133 : vector<32x128xf32>
    %c416 = arith.constant 416 : index
    %c0_131 = arith.constant 0 : index
    %135 = vector.load %arg16[%c416, %c0_131] : memref<1408x128xf32, #tpu.memory_space<vmem>>, vector<32x128xf32>
    tpu.vector_store %arg16[%c416, %c0_131], %134 {strides = array<i32>} : memref<1408x128xf32, #tpu.memory_space<vmem>>, vector<32x128xf32>,
    %c28_132 = arith.constant 28 : index
    %c0_133 = arith.constant 0 : index
    %c0_134 = arith.constant 0 : index
    %136 = vector.load %arg15[%c28_132, %c0_133, %c0_134] : memref<90x32x128xf32, #tpu.memory_space<vmem>>, vector<1x32x128xf32>
    %137 = vector.shape_cast %136 : vector<1x32x128xf32> to vector<32x128xf32>
    %c29 = arith.constant 29 : index
    %c0_135 = arith.constant 0 : index
    %c0_136 = arith.constant 0 : index
    %138 = vector.load %arg15[%c29, %c0_135, %c0_136] : memref<90x32x128xf32, #tpu.memory_space<vmem>>, vector<1x32x128xf32>
    %139 = vector.shape_cast %138 : vector<1x32x128xf32> to vector<32x128xf32>
    %140 = arith.maximumf %137, %139 : vector<32x128xf32>
    %c30 = arith.constant 30 : index
    %c0_137 = arith.constant 0 : index
    %c0_138 = arith.constant 0 : index
    %141 = vector.load %arg15[%c30, %c0_137, %c0_138] : memref<90x32x128xf32, #tpu.memory_space<vmem>>, vector<1x32x128xf32>
    %142 = vector.shape_cast %141 : vector<1x32x128xf32> to vector<32x128xf32>
    %143 = arith.maximumf %140, %142 : vector<32x128xf32>
    %c448 = arith.constant 448 : index
    %c0_139 = arith.constant 0 : index
    %144 = vector.load %arg16[%c448, %c0_139] : memref<1408x128xf32, #tpu.memory_space<vmem>>, vector<32x128xf32>
    tpu.vector_store %arg16[%c448, %c0_139], %143 {strides = array<i32>} : memref<1408x128xf32, #tpu.memory_space<vmem>>, vector<32x128xf32>,
    %c30_140 = arith.constant 30 : index
    %c0_141 = arith.constant 0 : index
    %c0_142 = arith.constant 0 : index
    %145 = vector.load %arg15[%c30_140, %c0_141, %c0_142] : memref<90x32x128xf32, #tpu.memory_space<vmem>>, vector<1x32x128xf32>
    %146 = vector.shape_cast %145 : vector<1x32x128xf32> to vector<32x128xf32>
    %c31 = arith.constant 31 : index
    %c0_143 = arith.constant 0 : index
    %c0_144 = arith.constant 0 : index
    %147 = vector.load %arg15[%c31, %c0_143, %c0_144] : memref<90x32x128xf32, #tpu.memory_space<vmem>>, vector<1x32x128xf32>
    %148 = vector.shape_cast %147 : vector<1x32x128xf32> to vector<32x128xf32>
    %149 = arith.maximumf %146, %148 : vector<32x128xf32>
    %c32_145 = arith.constant 32 : index
    %c0_146 = arith.constant 0 : index
    %c0_147 = arith.constant 0 : index
    %150 = vector.load %arg15[%c32_145, %c0_146, %c0_147] : memref<90x32x128xf32, #tpu.memory_space<vmem>>, vector<1x32x128xf32>
    %151 = vector.shape_cast %150 : vector<1x32x128xf32> to vector<32x128xf32>
    %152 = arith.maximumf %149, %151 : vector<32x128xf32>
    %c480 = arith.constant 480 : index
    %c0_148 = arith.constant 0 : index
    %153 = vector.load %arg16[%c480, %c0_148] : memref<1408x128xf32, #tpu.memory_space<vmem>>, vector<32x128xf32>
    tpu.vector_store %arg16[%c480, %c0_148], %152 {strides = array<i32>} : memref<1408x128xf32, #tpu.memory_space<vmem>>, vector<32x128xf32>,
    %c32_149 = arith.constant 32 : index
    %c0_150 = arith.constant 0 : index
    %c0_151 = arith.constant 0 : index
    %154 = vector.load %arg15[%c32_149, %c0_150, %c0_151] : memref<90x32x128xf32, #tpu.memory_space<vmem>>, vector<1x32x128xf32>
    %155 = vector.shape_cast %154 : vector<1x32x128xf32> to vector<32x128xf32>
    %c33 = arith.constant 33 : index
    %c0_152 = arith.constant 0 : index
    %c0_153 = arith.constant 0 : index
    %156 = vector.load %arg15[%c33, %c0_152, %c0_153] : memref<90x32x128xf32, #tpu.memory_space<vmem>>, vector<1x32x128xf32>
    %157 = vector.shape_cast %156 : vector<1x32x128xf32> to vector<32x128xf32>
    %158 = arith.maximumf %155, %157 : vector<32x128xf32>
    %c34 = arith.constant 34 : index
    %c0_154 = arith.constant 0 : index
    %c0_155 = arith.constant 0 : index
    %159 = vector.load %arg15[%c34, %c0_154, %c0_155] : memref<90x32x128xf32, #tpu.memory_space<vmem>>, vector<1x32x128xf32>
    %160 = vector.shape_cast %159 : vector<1x32x128xf32> to vector<32x128xf32>
    %161 = arith.maximumf %158, %160 : vector<32x128xf32>
    %c512 = arith.constant 512 : index
    %c0_156 = arith.constant 0 : index
    %162 = vector.load %arg16[%c512, %c0_156] : memref<1408x128xf32, #tpu.memory_space<vmem>>, vector<32x128xf32>
    tpu.vector_store %arg16[%c512, %c0_156], %161 {strides = array<i32>} : memref<1408x128xf32, #tpu.memory_space<vmem>>, vector<32x128xf32>,
    %c34_157 = arith.constant 34 : index
    %c0_158 = arith.constant 0 : index
    %c0_159 = arith.constant 0 : index
    %163 = vector.load %arg15[%c34_157, %c0_158, %c0_159] : memref<90x32x128xf32, #tpu.memory_space<vmem>>, vector<1x32x128xf32>
    %164 = vector.shape_cast %163 : vector<1x32x128xf32> to vector<32x128xf32>
    %c35 = arith.constant 35 : index
    %c0_160 = arith.constant 0 : index
    %c0_161 = arith.constant 0 : index
    %165 = vector.load %arg15[%c35, %c0_160, %c0_161] : memref<90x32x128xf32, #tpu.memory_space<vmem>>, vector<1x32x128xf32>
    %166 = vector.shape_cast %165 : vector<1x32x128xf32> to vector<32x128xf32>
    %167 = arith.maximumf %164, %166 : vector<32x128xf32>
    %c36 = arith.constant 36 : index
    %c0_162 = arith.constant 0 : index
    %c0_163 = arith.constant 0 : index
    %168 = vector.load %arg15[%c36, %c0_162, %c0_163] : memref<90x32x128xf32, #tpu.memory_space<vmem>>, vector<1x32x128xf32>
    %169 = vector.shape_cast %168 : vector<1x32x128xf32> to vector<32x128xf32>
    %170 = arith.maximumf %167, %169 : vector<32x128xf32>
    %c544 = arith.constant 544 : index
    %c0_164 = arith.constant 0 : index
    %171 = vector.load %arg16[%c544, %c0_164] : memref<1408x128xf32, #tpu.memory_space<vmem>>, vector<32x128xf32>
    tpu.vector_store %arg16[%c544, %c0_164], %170 {strides = array<i32>} : memref<1408x128xf32, #tpu.memory_space<vmem>>, vector<32x128xf32>,
    %c36_165 = arith.constant 36 : index
    %c0_166 = arith.constant 0 : index
    %c0_167 = arith.constant 0 : index
    %172 = vector.load %arg15[%c36_165, %c0_166, %c0_167] : memref<90x32x128xf32, #tpu.memory_space<vmem>>, vector<1x32x128xf32>
    %173 = vector.shape_cast %172 : vector<1x32x128xf32> to vector<32x128xf32>
    %c37 = arith.constant 37 : index
    %c0_168 = arith.constant 0 : index
    %c0_169 = arith.constant 0 : index
    %174 = vector.load %arg15[%c37, %c0_168, %c0_169] : memref<90x32x128xf32, #tpu.memory_space<vmem>>, vector<1x32x128xf32>
    %175 = vector.shape_cast %174 : vector<1x32x128xf32> to vector<32x128xf32>
    %176 = arith.maximumf %173, %175 : vector<32x128xf32>
    %c38 = arith.constant 38 : index
    %c0_170 = arith.constant 0 : index
    %c0_171 = arith.constant 0 : index
    %177 = vector.load %arg15[%c38, %c0_170, %c0_171] : memref<90x32x128xf32, #tpu.memory_space<vmem>>, vector<1x32x128xf32>
    %178 = vector.shape_cast %177 : vector<1x32x128xf32> to vector<32x128xf32>
    %179 = arith.maximumf %176, %178 : vector<32x128xf32>
    %c576 = arith.constant 576 : index
    %c0_172 = arith.constant 0 : index
    %180 = vector.load %arg16[%c576, %c0_172] : memref<1408x128xf32, #tpu.memory_space<vmem>>, vector<32x128xf32>
    tpu.vector_store %arg16[%c576, %c0_172], %179 {strides = array<i32>} : memref<1408x128xf32, #tpu.memory_space<vmem>>, vector<32x128xf32>,
    %c38_173 = arith.constant 38 : index
    %c0_174 = arith.constant 0 : index
    %c0_175 = arith.constant 0 : index
    %181 = vector.load %arg15[%c38_173, %c0_174, %c0_175] : memref<90x32x128xf32, #tpu.memory_space<vmem>>, vector<1x32x128xf32>
    %182 = vector.shape_cast %181 : vector<1x32x128xf32> to vector<32x128xf32>
    %c39 = arith.constant 39 : index
    %c0_176 = arith.constant 0 : index
    %c0_177 = arith.constant 0 : index
    %183 = vector.load %arg15[%c39, %c0_176, %c0_177] : memref<90x32x128xf32, #tpu.memory_space<vmem>>, vector<1x32x128xf32>
    %184 = vector.shape_cast %183 : vector<1x32x128xf32> to vector<32x128xf32>
    %185 = arith.maximumf %182, %184 : vector<32x128xf32>
    %c40 = arith.constant 40 : index
    %c0_178 = arith.constant 0 : index
    %c0_179 = arith.constant 0 : index
    %186 = vector.load %arg15[%c40, %c0_178, %c0_179] : memref<90x32x128xf32, #tpu.memory_space<vmem>>, vector<1x32x128xf32>
    %187 = vector.shape_cast %186 : vector<1x32x128xf32> to vector<32x128xf32>
    %188 = arith.maximumf %185, %187 : vector<32x128xf32>
    %c608 = arith.constant 608 : index
    %c0_180 = arith.constant 0 : index
    %189 = vector.load %arg16[%c608, %c0_180] : memref<1408x128xf32, #tpu.memory_space<vmem>>, vector<32x128xf32>
    tpu.vector_store %arg16[%c608, %c0_180], %188 {strides = array<i32>} : memref<1408x128xf32, #tpu.memory_space<vmem>>, vector<32x128xf32>,
    %c40_181 = arith.constant 40 : index
    %c0_182 = arith.constant 0 : index
    %c0_183 = arith.constant 0 : index
    %190 = vector.load %arg15[%c40_181, %c0_182, %c0_183] : memref<90x32x128xf32, #tpu.memory_space<vmem>>, vector<1x32x128xf32>
    %191 = vector.shape_cast %190 : vector<1x32x128xf32> to vector<32x128xf32>
    %c41 = arith.constant 41 : index
    %c0_184 = arith.constant 0 : index
    %c0_185 = arith.constant 0 : index
    %192 = vector.load %arg15[%c41, %c0_184, %c0_185] : memref<90x32x128xf32, #tpu.memory_space<vmem>>, vector<1x32x128xf32>
    %193 = vector.shape_cast %192 : vector<1x32x128xf32> to vector<32x128xf32>
    %194 = arith.maximumf %191, %193 : vector<32x128xf32>
    %c42 = arith.constant 42 : index
    %c0_186 = arith.constant 0 : index
    %c0_187 = arith.constant 0 : index
    %195 = vector.load %arg15[%c42, %c0_186, %c0_187] : memref<90x32x128xf32, #tpu.memory_space<vmem>>, vector<1x32x128xf32>
    %196 = vector.shape_cast %195 : vector<1x32x128xf32> to vector<32x128xf32>
    %197 = arith.maximumf %194, %196 : vector<32x128xf32>
    %c640 = arith.constant 640 : index
    %c0_188 = arith.constant 0 : index
    %198 = vector.load %arg16[%c640, %c0_188] : memref<1408x128xf32, #tpu.memory_space<vmem>>, vector<32x128xf32>
    tpu.vector_store %arg16[%c640, %c0_188], %197 {strides = array<i32>} : memref<1408x128xf32, #tpu.memory_space<vmem>>, vector<32x128xf32>,
    %c42_189 = arith.constant 42 : index
    %c0_190 = arith.constant 0 : index
    %c0_191 = arith.constant 0 : index
    %199 = vector.load %arg15[%c42_189, %c0_190, %c0_191] : memref<90x32x128xf32, #tpu.memory_space<vmem>>, vector<1x32x128xf32>
    %200 = vector.shape_cast %199 : vector<1x32x128xf32> to vector<32x128xf32>
    %c43 = arith.constant 43 : index
    %c0_192 = arith.constant 0 : index
    %c0_193 = arith.constant 0 : index
    %201 = vector.load %arg15[%c43, %c0_192, %c0_193] : memref<90x32x128xf32, #tpu.memory_space<vmem>>, vector<1x32x128xf32>
    %202 = vector.shape_cast %201 : vector<1x32x128xf32> to vector<32x128xf32>
    %203 = arith.maximumf %200, %202 : vector<32x128xf32>
    %c44 = arith.constant 44 : index
    %c0_194 = arith.constant 0 : index
    %c0_195 = arith.constant 0 : index
    %204 = vector.load %arg15[%c44, %c0_194, %c0_195] : memref<90x32x128xf32, #tpu.memory_space<vmem>>, vector<1x32x128xf32>
    %205 = vector.shape_cast %204 : vector<1x32x128xf32> to vector<32x128xf32>
    %206 = arith.maximumf %203, %205 : vector<32x128xf32>
    %c672 = arith.constant 672 : index
    %c0_196 = arith.constant 0 : index
    %207 = vector.load %arg16[%c672, %c0_196] : memref<1408x128xf32, #tpu.memory_space<vmem>>, vector<32x128xf32>
    tpu.vector_store %arg16[%c672, %c0_196], %206 {strides = array<i32>} : memref<1408x128xf32, #tpu.memory_space<vmem>>, vector<32x128xf32>,
    %c44_197 = arith.constant 44 : index
    %c0_198 = arith.constant 0 : index
    %c0_199 = arith.constant 0 : index
    %208 = vector.load %arg15[%c44_197, %c0_198, %c0_199] : memref<90x32x128xf32, #tpu.memory_space<vmem>>, vector<1x32x128xf32>
    %209 = vector.shape_cast %208 : vector<1x32x128xf32> to vector<32x128xf32>
    %c45 = arith.constant 45 : index
    %c0_200 = arith.constant 0 : index
    %c0_201 = arith.constant 0 : index
    %210 = vector.load %arg15[%c45, %c0_200, %c0_201] : memref<90x32x128xf32, #tpu.memory_space<vmem>>, vector<1x32x128xf32>
    %211 = vector.shape_cast %210 : vector<1x32x128xf32> to vector<32x128xf32>
    %212 = arith.maximumf %209, %211 : vector<32x128xf32>
    %c46 = arith.constant 46 : index
    %c0_202 = arith.constant 0 : index
    %c0_203 = arith.constant 0 : index
    %213 = vector.load %arg15[%c46, %c0_202, %c0_203] : memref<90x32x128xf32, #tpu.memory_space<vmem>>, vector<1x32x128xf32>
    %214 = vector.shape_cast %213 : vector<1x32x128xf32> to vector<32x128xf32>
    %215 = arith.maximumf %212, %214 : vector<32x128xf32>
    %c704 = arith.constant 704 : index
    %c0_204 = arith.constant 0 : index
    %216 = vector.load %arg16[%c704, %c0_204] : memref<1408x128xf32, #tpu.memory_space<vmem>>, vector<32x128xf32>
    tpu.vector_store %arg16[%c704, %c0_204], %215 {strides = array<i32>} : memref<1408x128xf32, #tpu.memory_space<vmem>>, vector<32x128xf32>,
    %c46_205 = arith.constant 46 : index
    %c0_206 = arith.constant 0 : index
    %c0_207 = arith.constant 0 : index
    %217 = vector.load %arg15[%c46_205, %c0_206, %c0_207] : memref<90x32x128xf32, #tpu.memory_space<vmem>>, vector<1x32x128xf32>
    %218 = vector.shape_cast %217 : vector<1x32x128xf32> to vector<32x128xf32>
    %c47 = arith.constant 47 : index
    %c0_208 = arith.constant 0 : index
    %c0_209 = arith.constant 0 : index
    %219 = vector.load %arg15[%c47, %c0_208, %c0_209] : memref<90x32x128xf32, #tpu.memory_space<vmem>>, vector<1x32x128xf32>
    %220 = vector.shape_cast %219 : vector<1x32x128xf32> to vector<32x128xf32>
    %221 = arith.maximumf %218, %220 : vector<32x128xf32>
    %c48 = arith.constant 48 : index
    %c0_210 = arith.constant 0 : index
    %c0_211 = arith.constant 0 : index
    %222 = vector.load %arg15[%c48, %c0_210, %c0_211] : memref<90x32x128xf32, #tpu.memory_space<vmem>>, vector<1x32x128xf32>
    %223 = vector.shape_cast %222 : vector<1x32x128xf32> to vector<32x128xf32>
    %224 = arith.maximumf %221, %223 : vector<32x128xf32>
    %c736 = arith.constant 736 : index
    %c0_212 = arith.constant 0 : index
    %225 = vector.load %arg16[%c736, %c0_212] : memref<1408x128xf32, #tpu.memory_space<vmem>>, vector<32x128xf32>
    tpu.vector_store %arg16[%c736, %c0_212], %224 {strides = array<i32>} : memref<1408x128xf32, #tpu.memory_space<vmem>>, vector<32x128xf32>,
    %c48_213 = arith.constant 48 : index
    %c0_214 = arith.constant 0 : index
    %c0_215 = arith.constant 0 : index
    %226 = vector.load %arg15[%c48_213, %c0_214, %c0_215] : memref<90x32x128xf32, #tpu.memory_space<vmem>>, vector<1x32x128xf32>
    %227 = vector.shape_cast %226 : vector<1x32x128xf32> to vector<32x128xf32>
    %c49 = arith.constant 49 : index
    %c0_216 = arith.constant 0 : index
    %c0_217 = arith.constant 0 : index
    %228 = vector.load %arg15[%c49, %c0_216, %c0_217] : memref<90x32x128xf32, #tpu.memory_space<vmem>>, vector<1x32x128xf32>
    %229 = vector.shape_cast %228 : vector<1x32x128xf32> to vector<32x128xf32>
    %230 = arith.maximumf %227, %229 : vector<32x128xf32>
    %c50 = arith.constant 50 : index
    %c0_218 = arith.constant 0 : index
    %c0_219 = arith.constant 0 : index
    %231 = vector.load %arg15[%c50, %c0_218, %c0_219] : memref<90x32x128xf32, #tpu.memory_space<vmem>>, vector<1x32x128xf32>
    %232 = vector.shape_cast %231 : vector<1x32x128xf32> to vector<32x128xf32>
    %233 = arith.maximumf %230, %232 : vector<32x128xf32>
    %c768 = arith.constant 768 : index
    %c0_220 = arith.constant 0 : index
    %234 = vector.load %arg16[%c768, %c0_220] : memref<1408x128xf32, #tpu.memory_space<vmem>>, vector<32x128xf32>
    tpu.vector_store %arg16[%c768, %c0_220], %233 {strides = array<i32>} : memref<1408x128xf32, #tpu.memory_space<vmem>>, vector<32x128xf32>,
    %c50_221 = arith.constant 50 : index
    %c0_222 = arith.constant 0 : index
    %c0_223 = arith.constant 0 : index
    %235 = vector.load %arg15[%c50_221, %c0_222, %c0_223] : memref<90x32x128xf32, #tpu.memory_space<vmem>>, vector<1x32x128xf32>
    %236 = vector.shape_cast %235 : vector<1x32x128xf32> to vector<32x128xf32>
    %c51 = arith.constant 51 : index
    %c0_224 = arith.constant 0 : index
    %c0_225 = arith.constant 0 : index
    %237 = vector.load %arg15[%c51, %c0_224, %c0_225] : memref<90x32x128xf32, #tpu.memory_space<vmem>>, vector<1x32x128xf32>
    %238 = vector.shape_cast %237 : vector<1x32x128xf32> to vector<32x128xf32>
    %239 = arith.maximumf %236, %238 : vector<32x128xf32>
    %c52 = arith.constant 52 : index
    %c0_226 = arith.constant 0 : index
    %c0_227 = arith.constant 0 : index
    %240 = vector.load %arg15[%c52, %c0_226, %c0_227] : memref<90x32x128xf32, #tpu.memory_space<vmem>>, vector<1x32x128xf32>
    %241 = vector.shape_cast %240 : vector<1x32x128xf32> to vector<32x128xf32>
    %242 = arith.maximumf %239, %241 : vector<32x128xf32>
    %c800 = arith.constant 800 : index
    %c0_228 = arith.constant 0 : index
    %243 = vector.load %arg16[%c800, %c0_228] : memref<1408x128xf32, #tpu.memory_space<vmem>>, vector<32x128xf32>
    tpu.vector_store %arg16[%c800, %c0_228], %242 {strides = array<i32>} : memref<1408x128xf32, #tpu.memory_space<vmem>>, vector<32x128xf32>,
    %c52_229 = arith.constant 52 : index
    %c0_230 = arith.constant 0 : index
    %c0_231 = arith.constant 0 : index
    %244 = vector.load %arg15[%c52_229, %c0_230, %c0_231] : memref<90x32x128xf32, #tpu.memory_space<vmem>>, vector<1x32x128xf32>
    %245 = vector.shape_cast %244 : vector<1x32x128xf32> to vector<32x128xf32>
    %c53 = arith.constant 53 : index
    %c0_232 = arith.constant 0 : index
    %c0_233 = arith.constant 0 : index
    %246 = vector.load %arg15[%c53, %c0_232, %c0_233] : memref<90x32x128xf32, #tpu.memory_space<vmem>>, vector<1x32x128xf32>
    %247 = vector.shape_cast %246 : vector<1x32x128xf32> to vector<32x128xf32>
    %248 = arith.maximumf %245, %247 : vector<32x128xf32>
    %c54 = arith.constant 54 : index
    %c0_234 = arith.constant 0 : index
    %c0_235 = arith.constant 0 : index
    %249 = vector.load %arg15[%c54, %c0_234, %c0_235] : memref<90x32x128xf32, #tpu.memory_space<vmem>>, vector<1x32x128xf32>
    %250 = vector.shape_cast %249 : vector<1x32x128xf32> to vector<32x128xf32>
    %251 = arith.maximumf %248, %250 : vector<32x128xf32>
    %c832 = arith.constant 832 : index
    %c0_236 = arith.constant 0 : index
    %252 = vector.load %arg16[%c832, %c0_236] : memref<1408x128xf32, #tpu.memory_space<vmem>>, vector<32x128xf32>
    tpu.vector_store %arg16[%c832, %c0_236], %251 {strides = array<i32>} : memref<1408x128xf32, #tpu.memory_space<vmem>>, vector<32x128xf32>,
    %c54_237 = arith.constant 54 : index
    %c0_238 = arith.constant 0 : index
    %c0_239 = arith.constant 0 : index
    %253 = vector.load %arg15[%c54_237, %c0_238, %c0_239] : memref<90x32x128xf32, #tpu.memory_space<vmem>>, vector<1x32x128xf32>
    %254 = vector.shape_cast %253 : vector<1x32x128xf32> to vector<32x128xf32>
    %c55 = arith.constant 55 : index
    %c0_240 = arith.constant 0 : index
    %c0_241 = arith.constant 0 : index
    %255 = vector.load %arg15[%c55, %c0_240, %c0_241] : memref<90x32x128xf32, #tpu.memory_space<vmem>>, vector<1x32x128xf32>
    %256 = vector.shape_cast %255 : vector<1x32x128xf32> to vector<32x128xf32>
    %257 = arith.maximumf %254, %256 : vector<32x128xf32>
    %c56 = arith.constant 56 : index
    %c0_242 = arith.constant 0 : index
    %c0_243 = arith.constant 0 : index
    %258 = vector.load %arg15[%c56, %c0_242, %c0_243] : memref<90x32x128xf32, #tpu.memory_space<vmem>>, vector<1x32x128xf32>
    %259 = vector.shape_cast %258 : vector<1x32x128xf32> to vector<32x128xf32>
    %260 = arith.maximumf %257, %259 : vector<32x128xf32>
    %c864 = arith.constant 864 : index
    %c0_244 = arith.constant 0 : index
    %261 = vector.load %arg16[%c864, %c0_244] : memref<1408x128xf32, #tpu.memory_space<vmem>>, vector<32x128xf32>
    tpu.vector_store %arg16[%c864, %c0_244], %260 {strides = array<i32>} : memref<1408x128xf32, #tpu.memory_space<vmem>>, vector<32x128xf32>,
    %c56_245 = arith.constant 56 : index
    %c0_246 = arith.constant 0 : index
    %c0_247 = arith.constant 0 : index
    %262 = vector.load %arg15[%c56_245, %c0_246, %c0_247] : memref<90x32x128xf32, #tpu.memory_space<vmem>>, vector<1x32x128xf32>
    %263 = vector.shape_cast %262 : vector<1x32x128xf32> to vector<32x128xf32>
    %c57 = arith.constant 57 : index
    %c0_248 = arith.constant 0 : index
    %c0_249 = arith.constant 0 : index
    %264 = vector.load %arg15[%c57, %c0_248, %c0_249] : memref<90x32x128xf32, #tpu.memory_space<vmem>>, vector<1x32x128xf32>
    %265 = vector.shape_cast %264 : vector<1x32x128xf32> to vector<32x128xf32>
    %266 = arith.maximumf %263, %265 : vector<32x128xf32>
    %c58 = arith.constant 58 : index
    %c0_250 = arith.constant 0 : index
    %c0_251 = arith.constant 0 : index
    %267 = vector.load %arg15[%c58, %c0_250, %c0_251] : memref<90x32x128xf32, #tpu.memory_space<vmem>>, vector<1x32x128xf32>
    %268 = vector.shape_cast %267 : vector<1x32x128xf32> to vector<32x128xf32>
    %269 = arith.maximumf %266, %268 : vector<32x128xf32>
    %c896 = arith.constant 896 : index
    %c0_252 = arith.constant 0 : index
    %270 = vector.load %arg16[%c896, %c0_252] : memref<1408x128xf32, #tpu.memory_space<vmem>>, vector<32x128xf32>
    tpu.vector_store %arg16[%c896, %c0_252], %269 {strides = array<i32>} : memref<1408x128xf32, #tpu.memory_space<vmem>>, vector<32x128xf32>,
    %c58_253 = arith.constant 58 : index
    %c0_254 = arith.constant 0 : index
    %c0_255 = arith.constant 0 : index
    %271 = vector.load %arg15[%c58_253, %c0_254, %c0_255] : memref<90x32x128xf32, #tpu.memory_space<vmem>>, vector<1x32x128xf32>
    %272 = vector.shape_cast %271 : vector<1x32x128xf32> to vector<32x128xf32>
    %c59 = arith.constant 59 : index
    %c0_256 = arith.constant 0 : index
    %c0_257 = arith.constant 0 : index
    %273 = vector.load %arg15[%c59, %c0_256, %c0_257] : memref<90x32x128xf32, #tpu.memory_space<vmem>>, vector<1x32x128xf32>
    %274 = vector.shape_cast %273 : vector<1x32x128xf32> to vector<32x128xf32>
    %275 = arith.maximumf %272, %274 : vector<32x128xf32>
    %c60 = arith.constant 60 : index
    %c0_258 = arith.constant 0 : index
    %c0_259 = arith.constant 0 : index
    %276 = vector.load %arg15[%c60, %c0_258, %c0_259] : memref<90x32x128xf32, #tpu.memory_space<vmem>>, vector<1x32x128xf32>
    %277 = vector.shape_cast %276 : vector<1x32x128xf32> to vector<32x128xf32>
    %278 = arith.maximumf %275, %277 : vector<32x128xf32>
    %c928 = arith.constant 928 : index
    %c0_260 = arith.constant 0 : index
    %279 = vector.load %arg16[%c928, %c0_260] : memref<1408x128xf32, #tpu.memory_space<vmem>>, vector<32x128xf32>
    tpu.vector_store %arg16[%c928, %c0_260], %278 {strides = array<i32>} : memref<1408x128xf32, #tpu.memory_space<vmem>>, vector<32x128xf32>,
    %c60_261 = arith.constant 60 : index
    %c0_262 = arith.constant 0 : index
    %c0_263 = arith.constant 0 : index
    %280 = vector.load %arg15[%c60_261, %c0_262, %c0_263] : memref<90x32x128xf32, #tpu.memory_space<vmem>>, vector<1x32x128xf32>
    %281 = vector.shape_cast %280 : vector<1x32x128xf32> to vector<32x128xf32>
    %c61 = arith.constant 61 : index
    %c0_264 = arith.constant 0 : index
    %c0_265 = arith.constant 0 : index
    %282 = vector.load %arg15[%c61, %c0_264, %c0_265] : memref<90x32x128xf32, #tpu.memory_space<vmem>>, vector<1x32x128xf32>
    %283 = vector.shape_cast %282 : vector<1x32x128xf32> to vector<32x128xf32>
    %284 = arith.maximumf %281, %283 : vector<32x128xf32>
    %c62 = arith.constant 62 : index
    %c0_266 = arith.constant 0 : index
    %c0_267 = arith.constant 0 : index
    %285 = vector.load %arg15[%c62, %c0_266, %c0_267] : memref<90x32x128xf32, #tpu.memory_space<vmem>>, vector<1x32x128xf32>
    %286 = vector.shape_cast %285 : vector<1x32x128xf32> to vector<32x128xf32>
    %287 = arith.maximumf %284, %286 : vector<32x128xf32>
    %c960 = arith.constant 960 : index
    %c0_268 = arith.constant 0 : index
    %288 = vector.load %arg16[%c960, %c0_268] : memref<1408x128xf32, #tpu.memory_space<vmem>>, vector<32x128xf32>
    tpu.vector_store %arg16[%c960, %c0_268], %287 {strides = array<i32>} : memref<1408x128xf32, #tpu.memory_space<vmem>>, vector<32x128xf32>,
    %c62_269 = arith.constant 62 : index
    %c0_270 = arith.constant 0 : index
    %c0_271 = arith.constant 0 : index
    %289 = vector.load %arg15[%c62_269, %c0_270, %c0_271] : memref<90x32x128xf32, #tpu.memory_space<vmem>>, vector<1x32x128xf32>
    %290 = vector.shape_cast %289 : vector<1x32x128xf32> to vector<32x128xf32>
    %c63 = arith.constant 63 : index
    %c0_272 = arith.constant 0 : index
    %c0_273 = arith.constant 0 : index
    %291 = vector.load %arg15[%c63, %c0_272, %c0_273] : memref<90x32x128xf32, #tpu.memory_space<vmem>>, vector<1x32x128xf32>
    %292 = vector.shape_cast %291 : vector<1x32x128xf32> to vector<32x128xf32>
    %293 = arith.maximumf %290, %292 : vector<32x128xf32>
    %c64_274 = arith.constant 64 : index
    %c0_275 = arith.constant 0 : index
    %c0_276 = arith.constant 0 : index
    %294 = vector.load %arg15[%c64_274, %c0_275, %c0_276] : memref<90x32x128xf32, #tpu.memory_space<vmem>>, vector<1x32x128xf32>
    %295 = vector.shape_cast %294 : vector<1x32x128xf32> to vector<32x128xf32>
    %296 = arith.maximumf %293, %295 : vector<32x128xf32>
    %c992 = arith.constant 992 : index
    %c0_277 = arith.constant 0 : index
    %297 = vector.load %arg16[%c992, %c0_277] : memref<1408x128xf32, #tpu.memory_space<vmem>>, vector<32x128xf32>
    tpu.vector_store %arg16[%c992, %c0_277], %296 {strides = array<i32>} : memref<1408x128xf32, #tpu.memory_space<vmem>>, vector<32x128xf32>,
    %c64_278 = arith.constant 64 : index
    %c0_279 = arith.constant 0 : index
    %c0_280 = arith.constant 0 : index
    %298 = vector.load %arg15[%c64_278, %c0_279, %c0_280] : memref<90x32x128xf32, #tpu.memory_space<vmem>>, vector<1x32x128xf32>
    %299 = vector.shape_cast %298 : vector<1x32x128xf32> to vector<32x128xf32>
    %c65 = arith.constant 65 : index
    %c0_281 = arith.constant 0 : index
    %c0_282 = arith.constant 0 : index
    %300 = vector.load %arg15[%c65, %c0_281, %c0_282] : memref<90x32x128xf32, #tpu.memory_space<vmem>>, vector<1x32x128xf32>
    %301 = vector.shape_cast %300 : vector<1x32x128xf32> to vector<32x128xf32>
    %302 = arith.maximumf %299, %301 : vector<32x128xf32>
    %c66 = arith.constant 66 : index
    %c0_283 = arith.constant 0 : index
    %c0_284 = arith.constant 0 : index
    %303 = vector.load %arg15[%c66, %c0_283, %c0_284] : memref<90x32x128xf32, #tpu.memory_space<vmem>>, vector<1x32x128xf32>
    %304 = vector.shape_cast %303 : vector<1x32x128xf32> to vector<32x128xf32>
    %305 = arith.maximumf %302, %304 : vector<32x128xf32>
    %c1024 = arith.constant 1024 : index
    %c0_285 = arith.constant 0 : index
    %306 = vector.load %arg16[%c1024, %c0_285] : memref<1408x128xf32, #tpu.memory_space<vmem>>, vector<32x128xf32>
    tpu.vector_store %arg16[%c1024, %c0_285], %305 {strides = array<i32>} : memref<1408x128xf32, #tpu.memory_space<vmem>>, vector<32x128xf32>,
    %c66_286 = arith.constant 66 : index
    %c0_287 = arith.constant 0 : index
    %c0_288 = arith.constant 0 : index
    %307 = vector.load %arg15[%c66_286, %c0_287, %c0_288] : memref<90x32x128xf32, #tpu.memory_space<vmem>>, vector<1x32x128xf32>
    %308 = vector.shape_cast %307 : vector<1x32x128xf32> to vector<32x128xf32>
    %c67 = arith.constant 67 : index
    %c0_289 = arith.constant 0 : index
    %c0_290 = arith.constant 0 : index
    %309 = vector.load %arg15[%c67, %c0_289, %c0_290] : memref<90x32x128xf32, #tpu.memory_space<vmem>>, vector<1x32x128xf32>
    %310 = vector.shape_cast %309 : vector<1x32x128xf32> to vector<32x128xf32>
    %311 = arith.maximumf %308, %310 : vector<32x128xf32>
    %c68 = arith.constant 68 : index
    %c0_291 = arith.constant 0 : index
    %c0_292 = arith.constant 0 : index
    %312 = vector.load %arg15[%c68, %c0_291, %c0_292] : memref<90x32x128xf32, #tpu.memory_space<vmem>>, vector<1x32x128xf32>
    %313 = vector.shape_cast %312 : vector<1x32x128xf32> to vector<32x128xf32>
    %314 = arith.maximumf %311, %313 : vector<32x128xf32>
    %c1056 = arith.constant 1056 : index
    %c0_293 = arith.constant 0 : index
    %315 = vector.load %arg16[%c1056, %c0_293] : memref<1408x128xf32, #tpu.memory_space<vmem>>, vector<32x128xf32>
    tpu.vector_store %arg16[%c1056, %c0_293], %314 {strides = array<i32>} : memref<1408x128xf32, #tpu.memory_space<vmem>>, vector<32x128xf32>,
    %c68_294 = arith.constant 68 : index
    %c0_295 = arith.constant 0 : index
    %c0_296 = arith.constant 0 : index
    %316 = vector.load %arg15[%c68_294, %c0_295, %c0_296] : memref<90x32x128xf32, #tpu.memory_space<vmem>>, vector<1x32x128xf32>
    %317 = vector.shape_cast %316 : vector<1x32x128xf32> to vector<32x128xf32>
    %c69 = arith.constant 69 : index
    %c0_297 = arith.constant 0 : index
    %c0_298 = arith.constant 0 : index
    %318 = vector.load %arg15[%c69, %c0_297, %c0_298] : memref<90x32x128xf32, #tpu.memory_space<vmem>>, vector<1x32x128xf32>
    %319 = vector.shape_cast %318 : vector<1x32x128xf32> to vector<32x128xf32>
    %320 = arith.maximumf %317, %319 : vector<32x128xf32>
    %c70 = arith.constant 70 : index
    %c0_299 = arith.constant 0 : index
    %c0_300 = arith.constant 0 : index
    %321 = vector.load %arg15[%c70, %c0_299, %c0_300] : memref<90x32x128xf32, #tpu.memory_space<vmem>>, vector<1x32x128xf32>
    %322 = vector.shape_cast %321 : vector<1x32x128xf32> to vector<32x128xf32>
    %323 = arith.maximumf %320, %322 : vector<32x128xf32>
    %c1088 = arith.constant 1088 : index
    %c0_301 = arith.constant 0 : index
    %324 = vector.load %arg16[%c1088, %c0_301] : memref<1408x128xf32, #tpu.memory_space<vmem>>, vector<32x128xf32>
    tpu.vector_store %arg16[%c1088, %c0_301], %323 {strides = array<i32>} : memref<1408x128xf32, #tpu.memory_space<vmem>>, vector<32x128xf32>,
    %c70_302 = arith.constant 70 : index
    %c0_303 = arith.constant 0 : index
    %c0_304 = arith.constant 0 : index
    %325 = vector.load %arg15[%c70_302, %c0_303, %c0_304] : memref<90x32x128xf32, #tpu.memory_space<vmem>>, vector<1x32x128xf32>
    %326 = vector.shape_cast %325 : vector<1x32x128xf32> to vector<32x128xf32>
    %c71 = arith.constant 71 : index
    %c0_305 = arith.constant 0 : index
    %c0_306 = arith.constant 0 : index
    %327 = vector.load %arg15[%c71, %c0_305, %c0_306] : memref<90x32x128xf32, #tpu.memory_space<vmem>>, vector<1x32x128xf32>
    %328 = vector.shape_cast %327 : vector<1x32x128xf32> to vector<32x128xf32>
    %329 = arith.maximumf %326, %328 : vector<32x128xf32>
    %c72 = arith.constant 72 : index
    %c0_307 = arith.constant 0 : index
    %c0_308 = arith.constant 0 : index
    %330 = vector.load %arg15[%c72, %c0_307, %c0_308] : memref<90x32x128xf32, #tpu.memory_space<vmem>>, vector<1x32x128xf32>
    %331 = vector.shape_cast %330 : vector<1x32x128xf32> to vector<32x128xf32>
    %332 = arith.maximumf %329, %331 : vector<32x128xf32>
    %c1120 = arith.constant 1120 : index
    %c0_309 = arith.constant 0 : index
    %333 = vector.load %arg16[%c1120, %c0_309] : memref<1408x128xf32, #tpu.memory_space<vmem>>, vector<32x128xf32>
    tpu.vector_store %arg16[%c1120, %c0_309], %332 {strides = array<i32>} : memref<1408x128xf32, #tpu.memory_space<vmem>>, vector<32x128xf32>,
    %c72_310 = arith.constant 72 : index
    %c0_311 = arith.constant 0 : index
    %c0_312 = arith.constant 0 : index
    %334 = vector.load %arg15[%c72_310, %c0_311, %c0_312] : memref<90x32x128xf32, #tpu.memory_space<vmem>>, vector<1x32x128xf32>
    %335 = vector.shape_cast %334 : vector<1x32x128xf32> to vector<32x128xf32>
    %c73 = arith.constant 73 : index
    %c0_313 = arith.constant 0 : index
    %c0_314 = arith.constant 0 : index
    %336 = vector.load %arg15[%c73, %c0_313, %c0_314] : memref<90x32x128xf32, #tpu.memory_space<vmem>>, vector<1x32x128xf32>
    %337 = vector.shape_cast %336 : vector<1x32x128xf32> to vector<32x128xf32>
    %338 = arith.maximumf %335, %337 : vector<32x128xf32>
    %c74 = arith.constant 74 : index
    %c0_315 = arith.constant 0 : index
    %c0_316 = arith.constant 0 : index
    %339 = vector.load %arg15[%c74, %c0_315, %c0_316] : memref<90x32x128xf32, #tpu.memory_space<vmem>>, vector<1x32x128xf32>
    %340 = vector.shape_cast %339 : vector<1x32x128xf32> to vector<32x128xf32>
    %341 = arith.maximumf %338, %340 : vector<32x128xf32>
    %c1152 = arith.constant 1152 : index
    %c0_317 = arith.constant 0 : index
    %342 = vector.load %arg16[%c1152, %c0_317] : memref<1408x128xf32, #tpu.memory_space<vmem>>, vector<32x128xf32>
    tpu.vector_store %arg16[%c1152, %c0_317], %341 {strides = array<i32>} : memref<1408x128xf32, #tpu.memory_space<vmem>>, vector<32x128xf32>,
    %c74_318 = arith.constant 74 : index
    %c0_319 = arith.constant 0 : index
    %c0_320 = arith.constant 0 : index
    %343 = vector.load %arg15[%c74_318, %c0_319, %c0_320] : memref<90x32x128xf32, #tpu.memory_space<vmem>>, vector<1x32x128xf32>
    %344 = vector.shape_cast %343 : vector<1x32x128xf32> to vector<32x128xf32>
    %c75 = arith.constant 75 : index
    %c0_321 = arith.constant 0 : index
    %c0_322 = arith.constant 0 : index
    %345 = vector.load %arg15[%c75, %c0_321, %c0_322] : memref<90x32x128xf32, #tpu.memory_space<vmem>>, vector<1x32x128xf32>
    %346 = vector.shape_cast %345 : vector<1x32x128xf32> to vector<32x128xf32>
    %347 = arith.maximumf %344, %346 : vector<32x128xf32>
    %c76 = arith.constant 76 : index
    %c0_323 = arith.constant 0 : index
    %c0_324 = arith.constant 0 : index
    %348 = vector.load %arg15[%c76, %c0_323, %c0_324] : memref<90x32x128xf32, #tpu.memory_space<vmem>>, vector<1x32x128xf32>
    %349 = vector.shape_cast %348 : vector<1x32x128xf32> to vector<32x128xf32>
    %350 = arith.maximumf %347, %349 : vector<32x128xf32>
    %c1184 = arith.constant 1184 : index
    %c0_325 = arith.constant 0 : index
    %351 = vector.load %arg16[%c1184, %c0_325] : memref<1408x128xf32, #tpu.memory_space<vmem>>, vector<32x128xf32>
    tpu.vector_store %arg16[%c1184, %c0_325], %350 {strides = array<i32>} : memref<1408x128xf32, #tpu.memory_space<vmem>>, vector<32x128xf32>,
    %c76_326 = arith.constant 76 : index
    %c0_327 = arith.constant 0 : index
    %c0_328 = arith.constant 0 : index
    %352 = vector.load %arg15[%c76_326, %c0_327, %c0_328] : memref<90x32x128xf32, #tpu.memory_space<vmem>>, vector<1x32x128xf32>
    %353 = vector.shape_cast %352 : vector<1x32x128xf32> to vector<32x128xf32>
    %c77 = arith.constant 77 : index
    %c0_329 = arith.constant 0 : index
    %c0_330 = arith.constant 0 : index
    %354 = vector.load %arg15[%c77, %c0_329, %c0_330] : memref<90x32x128xf32, #tpu.memory_space<vmem>>, vector<1x32x128xf32>
    %355 = vector.shape_cast %354 : vector<1x32x128xf32> to vector<32x128xf32>
    %356 = arith.maximumf %353, %355 : vector<32x128xf32>
    %c78 = arith.constant 78 : index
    %c0_331 = arith.constant 0 : index
    %c0_332 = arith.constant 0 : index
    %357 = vector.load %arg15[%c78, %c0_331, %c0_332] : memref<90x32x128xf32, #tpu.memory_space<vmem>>, vector<1x32x128xf32>
    %358 = vector.shape_cast %357 : vector<1x32x128xf32> to vector<32x128xf32>
    %359 = arith.maximumf %356, %358 : vector<32x128xf32>
    %c1216 = arith.constant 1216 : index
    %c0_333 = arith.constant 0 : index
    %360 = vector.load %arg16[%c1216, %c0_333] : memref<1408x128xf32, #tpu.memory_space<vmem>>, vector<32x128xf32>
    tpu.vector_store %arg16[%c1216, %c0_333], %359 {strides = array<i32>} : memref<1408x128xf32, #tpu.memory_space<vmem>>, vector<32x128xf32>,
    %c78_334 = arith.constant 78 : index
    %c0_335 = arith.constant 0 : index
    %c0_336 = arith.constant 0 : index
    %361 = vector.load %arg15[%c78_334, %c0_335, %c0_336] : memref<90x32x128xf32, #tpu.memory_space<vmem>>, vector<1x32x128xf32>
    %362 = vector.shape_cast %361 : vector<1x32x128xf32> to vector<32x128xf32>
    %c79 = arith.constant 79 : index
    %c0_337 = arith.constant 0 : index
    %c0_338 = arith.constant 0 : index
    %363 = vector.load %arg15[%c79, %c0_337, %c0_338] : memref<90x32x128xf32, #tpu.memory_space<vmem>>, vector<1x32x128xf32>
    %364 = vector.shape_cast %363 : vector<1x32x128xf32> to vector<32x128xf32>
    %365 = arith.maximumf %362, %364 : vector<32x128xf32>
    %c80 = arith.constant 80 : index
    %c0_339 = arith.constant 0 : index
    %c0_340 = arith.constant 0 : index
    %366 = vector.load %arg15[%c80, %c0_339, %c0_340] : memref<90x32x128xf32, #tpu.memory_space<vmem>>, vector<1x32x128xf32>
    %367 = vector.shape_cast %366 : vector<1x32x128xf32> to vector<32x128xf32>
    %368 = arith.maximumf %365, %367 : vector<32x128xf32>
    %c1248 = arith.constant 1248 : index
    %c0_341 = arith.constant 0 : index
    %369 = vector.load %arg16[%c1248, %c0_341] : memref<1408x128xf32, #tpu.memory_space<vmem>>, vector<32x128xf32>
    tpu.vector_store %arg16[%c1248, %c0_341], %368 {strides = array<i32>} : memref<1408x128xf32, #tpu.memory_space<vmem>>, vector<32x128xf32>,
    %c80_342 = arith.constant 80 : index
    %c0_343 = arith.constant 0 : index
    %c0_344 = arith.constant 0 : index
    %370 = vector.load %arg15[%c80_342, %c0_343, %c0_344] : memref<90x32x128xf32, #tpu.memory_space<vmem>>, vector<1x32x128xf32>
    %371 = vector.shape_cast %370 : vector<1x32x128xf32> to vector<32x128xf32>
    %c81 = arith.constant 81 : index
    %c0_345 = arith.constant 0 : index
    %c0_346 = arith.constant 0 : index
    %372 = vector.load %arg15[%c81, %c0_345, %c0_346] : memref<90x32x128xf32, #tpu.memory_space<vmem>>, vector<1x32x128xf32>
    %373 = vector.shape_cast %372 : vector<1x32x128xf32> to vector<32x128xf32>
    %374 = arith.maximumf %371, %373 : vector<32x128xf32>
    %c82 = arith.constant 82 : index
    %c0_347 = arith.constant 0 : index
    %c0_348 = arith.constant 0 : index
    %375 = vector.load %arg15[%c82, %c0_347, %c0_348] : memref<90x32x128xf32, #tpu.memory_space<vmem>>, vector<1x32x128xf32>
    %376 = vector.shape_cast %375 : vector<1x32x128xf32> to vector<32x128xf32>
    %377 = arith.maximumf %374, %376 : vector<32x128xf32>
    %c1280 = arith.constant 1280 : index
    %c0_349 = arith.constant 0 : index
    %378 = vector.load %arg16[%c1280, %c0_349] : memref<1408x128xf32, #tpu.memory_space<vmem>>, vector<32x128xf32>
    tpu.vector_store %arg16[%c1280, %c0_349], %377 {strides = array<i32>} : memref<1408x128xf32, #tpu.memory_space<vmem>>, vector<32x128xf32>,
    %c82_350 = arith.constant 82 : index
    %c0_351 = arith.constant 0 : index
    %c0_352 = arith.constant 0 : index
    %379 = vector.load %arg15[%c82_350, %c0_351, %c0_352] : memref<90x32x128xf32, #tpu.memory_space<vmem>>, vector<1x32x128xf32>
    %380 = vector.shape_cast %379 : vector<1x32x128xf32> to vector<32x128xf32>
    %c83 = arith.constant 83 : index
    %c0_353 = arith.constant 0 : index
    %c0_354 = arith.constant 0 : index
    %381 = vector.load %arg15[%c83, %c0_353, %c0_354] : memref<90x32x128xf32, #tpu.memory_space<vmem>>, vector<1x32x128xf32>
    %382 = vector.shape_cast %381 : vector<1x32x128xf32> to vector<32x128xf32>
    %383 = arith.maximumf %380, %382 : vector<32x128xf32>
    %c84 = arith.constant 84 : index
    %c0_355 = arith.constant 0 : index
    %c0_356 = arith.constant 0 : index
    %384 = vector.load %arg15[%c84, %c0_355, %c0_356] : memref<90x32x128xf32, #tpu.memory_space<vmem>>, vector<1x32x128xf32>
    %385 = vector.shape_cast %384 : vector<1x32x128xf32> to vector<32x128xf32>
    %386 = arith.maximumf %383, %385 : vector<32x128xf32>
    %c1312 = arith.constant 1312 : index
    %c0_357 = arith.constant 0 : index
    %387 = vector.load %arg16[%c1312, %c0_357] : memref<1408x128xf32, #tpu.memory_space<vmem>>, vector<32x128xf32>
    tpu.vector_store %arg16[%c1312, %c0_357], %386 {strides = array<i32>} : memref<1408x128xf32, #tpu.memory_space<vmem>>, vector<32x128xf32>,
    %c84_358 = arith.constant 84 : index
    %c0_359 = arith.constant 0 : index
    %c0_360 = arith.constant 0 : index
    %388 = vector.load %arg15[%c84_358, %c0_359, %c0_360] : memref<90x32x128xf32, #tpu.memory_space<vmem>>, vector<1x32x128xf32>
    %389 = vector.shape_cast %388 : vector<1x32x128xf32> to vector<32x128xf32>
    %c85 = arith.constant 85 : index
    %c0_361 = arith.constant 0 : index
    %c0_362 = arith.constant 0 : index
    %390 = vector.load %arg15[%c85, %c0_361, %c0_362] : memref<90x32x128xf32, #tpu.memory_space<vmem>>, vector<1x32x128xf32>
    %391 = vector.shape_cast %390 : vector<1x32x128xf32> to vector<32x128xf32>
    %392 = arith.maximumf %389, %391 : vector<32x128xf32>
    %c86 = arith.constant 86 : index
    %c0_363 = arith.constant 0 : index
    %c0_364 = arith.constant 0 : index
    %393 = vector.load %arg15[%c86, %c0_363, %c0_364] : memref<90x32x128xf32, #tpu.memory_space<vmem>>, vector<1x32x128xf32>
    %394 = vector.shape_cast %393 : vector<1x32x128xf32> to vector<32x128xf32>
    %395 = arith.maximumf %392, %394 : vector<32x128xf32>
    %c1344 = arith.constant 1344 : index
    %c0_365 = arith.constant 0 : index
    %396 = vector.load %arg16[%c1344, %c0_365] : memref<1408x128xf32, #tpu.memory_space<vmem>>, vector<32x128xf32>
    tpu.vector_store %arg16[%c1344, %c0_365], %395 {strides = array<i32>} : memref<1408x128xf32, #tpu.memory_space<vmem>>, vector<32x128xf32>,
    %c86_366 = arith.constant 86 : index
    %c0_367 = arith.constant 0 : index
    %c0_368 = arith.constant 0 : index
    %397 = vector.load %arg15[%c86_366, %c0_367, %c0_368] : memref<90x32x128xf32, #tpu.memory_space<vmem>>, vector<1x32x128xf32>
    %398 = vector.shape_cast %397 : vector<1x32x128xf32> to vector<32x128xf32>
    %c87 = arith.constant 87 : index
    %c0_369 = arith.constant 0 : index
    %c0_370 = arith.constant 0 : index
    %399 = vector.load %arg15[%c87, %c0_369, %c0_370] : memref<90x32x128xf32, #tpu.memory_space<vmem>>, vector<1x32x128xf32>
    %400 = vector.shape_cast %399 : vector<1x32x128xf32> to vector<32x128xf32>
    %401 = arith.maximumf %398, %400 : vector<32x128xf32>
    %c88 = arith.constant 88 : index
    %c0_371 = arith.constant 0 : index
    %c0_372 = arith.constant 0 : index
    %402 = vector.load %arg15[%c88, %c0_371, %c0_372] : memref<90x32x128xf32, #tpu.memory_space<vmem>>, vector<1x32x128xf32>
    %403 = vector.shape_cast %402 : vector<1x32x128xf32> to vector<32x128xf32>
    %404 = arith.maximumf %401, %403 : vector<32x128xf32>
    %c1376 = arith.constant 1376 : index
    %c0_373 = arith.constant 0 : index
    %405 = vector.load %arg16[%c1376, %c0_373] : memref<1408x128xf32, #tpu.memory_space<vmem>>, vector<32x128xf32>
    tpu.vector_store %arg16[%c1376, %c0_373], %404 {strides = array<i32>} : memref<1408x128xf32, #tpu.memory_space<vmem>>, vector<32x128xf32>,
    %c0_374 = arith.constant 0 : index
    %c0_375 = arith.constant 0 : index
    %406 = vector.load %arg1[%c0_374, %c0_375] : memref<95x128xf32, #tpu.memory_space<vmem>>, vector<1x128xf32>
    %c0_376 = arith.constant 0 : index
    %c0_377 = arith.constant 0 : index
    %407 = vector.load %arg8[%c0_376, %c0_377] : memref<128x1408xf32, #tpu.memory_space<vmem>>, vector<128x1408xf32>
    %c0_378 = arith.constant 0 : index
    %c0_379 = arith.constant 0 : index
    %408 = vector.load %arg16[%c0_378, %c0_379] : memref<1408x128xf32, #tpu.memory_space<vmem>>, vector<1408x128xf32>
    %cst = arith.constant dense<0.000000e+00> : vector<128x128xf32>
    %409 = tpu.matmul %407, %408, %cst {dimension_numbers = #tpu.dot_dimension_numbers<[1], [0], [0], [1], [0, 0, 1, 1], [], []>} : vector<128x1408xf32>, vector<1408x128xf32>, vector<128x128xf32> -> vector<128x128xf32>
    %c0_380 = arith.constant 0 : index
    %c0_381 = arith.constant 0 : index
    %410 = vector.load %arg9[%c0_380, %c0_381] : memref<128x1xf32, #tpu.memory_space<vmem>>, vector<128x1xf32>
    %411 = vector.broadcast %410 : vector<128x1xf32> to vector<128x128xf32>
    %412 = vector.broadcast %406 : vector<1x128xf32> to vector<128x128xf32>
    %413 = arith.mulf %411, %412 : vector<128x128xf32>
    %414 = arith.addf %409, %413 : vector<128x128xf32>
    %c0_382 = arith.constant 0 : index
    %c0_383 = arith.constant 0 : index
    %415 = vector.load %arg10[%c0_382, %c0_383] : memref<128x1xf32, #tpu.memory_space<vmem>>, vector<128x1xf32>
    %416 = vector.broadcast %415 : vector<128x1xf32> to vector<128x128xf32>
    %417 = arith.addf %414, %416 : vector<128x128xf32>
    %c0_384 = arith.constant 0 : index
    %c0_385 = arith.constant 0 : index
    %418 = vector.load %arg11[%c0_384, %c0_385] : memref<94x128xf32, #tpu.memory_space<vmem>>, vector<94x128xf32>
    %cst_386 = arith.constant dense<0.000000e+00> : vector<94x128xf32>
    %419 = tpu.matmul %418, %417, %cst_386 {dimension_numbers = #tpu.dot_dimension_numbers<[1], [0], [0], [1], [0, 0, 1, 1], [], []>} : vector<94x128xf32>, vector<128x128xf32>, vector<94x128xf32> -> vector<94x128xf32>
    %c0_387 = arith.constant 0 : index
    %c0_388 = arith.constant 0 : index
    %420 = vector.load %arg12[%c0_387, %c0_388] : memref<94x1xf32, #tpu.memory_space<vmem>>, vector<94x1xf32>
    %421 = vector.broadcast %420 : vector<94x1xf32> to vector<94x128xf32>
    %422 = arith.addf %419, %421 : vector<94x128xf32>
    %cst_389 = arith.constant 0.000000e+00 : f32
    %423 = vector.broadcast %cst_389 : f32 to vector<94x128xf32>
    %424 = arith.subf %423, %422 : vector<94x128xf32>
    %425 = math.exp %424 : vector<94x128xf32>
    %cst_390 = arith.constant 1.000000e+00 : f32
    %426 = vector.broadcast %cst_390 : f32 to vector<94x128xf32>
    %427 = arith.addf %426, %425 : vector<94x128xf32>
    %428 = tpu.reciprocal %427 {approx = true} : vector<94x128xf32> -> vector<94x128xf32>
    %c0_391 = arith.constant 0 : index
    %c0_392 = arith.constant 0 : index
    %429 = vector.load %arg13[%c0_391, %c0_392] : memref<94x128xf32, #tpu.memory_space<vmem>>, vector<94x128xf32>
    tpu.vector_store %arg13[%c0_391, %c0_392], %428 {strides = array<i32>} : memref<94x128xf32, #tpu.memory_space<vmem>>, vector<94x128xf32>,
    return
  }
  func.func @transform_0(%arg0: i32) -> (i32, i32) {
    %c0_i32 = arith.constant 0 : i32
    %c0_i32_0 = arith.constant 0 : i32
    return %c0_i32, %arg0 : i32, i32
  }
  func.func @transform_1(%arg0: i32) -> (i32, i32) {
    %c0_i32 = arith.constant 0 : i32
    %c0_i32_0 = arith.constant 0 : i32
    %c0_i32_1 = arith.constant 0 : i32
    return %c0_i32, %c0_i32_0 : i32, i32
  }
  func.func @transform_2(%arg0: i32) -> (i32, i32) {
    %c0_i32 = arith.constant 0 : i32
    %c0_i32_0 = arith.constant 0 : i32
    %c0_i32_1 = arith.constant 0 : i32
    return %c0_i32, %c0_i32_0 : i32, i32
  }
  func.func @transform_3(%arg0: i32) -> (i32, i32) {
    %c0_i32 = arith.constant 0 : i32
    %c0_i32_0 = arith.constant 0 : i32
    %c0_i32_1 = arith.constant 0 : i32
    return %c0_i32, %c0_i32_0 : i32, i32
  }
  func.func @transform_4(%arg0: i32) -> (i32, i32) {
    %c0_i32 = arith.constant 0 : i32
    %c0_i32_0 = arith.constant 0 : i32
    %c0_i32_1 = arith.constant 0 : i32
    return %c0_i32, %c0_i32_0 : i32, i32
  }
  func.func @transform_5(%arg0: i32) -> (i32, i32) {
    %c0_i32 = arith.constant 0 : i32
    %c0_i32_0 = arith.constant 0 : i32
    %c0_i32_1 = arith.constant 0 : i32
    return %c0_i32, %c0_i32_0 : i32, i32
  }
  func.func @transform_6(%arg0: i32) -> (i32, i32) {
    %c0_i32 = arith.constant 0 : i32
    %c0_i32_0 = arith.constant 0 : i32
    %c0_i32_1 = arith.constant 0 : i32
    return %c0_i32, %c0_i32_0 : i32, i32
  }
  func.func @transform_7(%arg0: i32) -> (i32, i32) {
    %c0_i32 = arith.constant 0 : i32
    %c0_i32_0 = arith.constant 0 : i32
    %c0_i32_1 = arith.constant 0 : i32
    return %c0_i32, %c0_i32_0 : i32, i32
  }
  func.func @transform_8(%arg0: i32) -> (i32, i32) {
    %c0_i32 = arith.constant 0 : i32
    %c0_i32_0 = arith.constant 0 : i32
    %c0_i32_1 = arith.constant 0 : i32
    return %c0_i32, %c0_i32_0 : i32, i32
  }
  func.func @transform_9(%arg0: i32) -> (i32, i32) {
    %c0_i32 = arith.constant 0 : i32
    %c0_i32_0 = arith.constant 0 : i32
    %c0_i32_1 = arith.constant 0 : i32
    return %c0_i32, %c0_i32_0 : i32, i32
  }
  func.func @transform_10(%arg0: i32) -> (i32, i32) {
    %c0_i32 = arith.constant 0 : i32
    %c0_i32_0 = arith.constant 0 : i32
    %c0_i32_1 = arith.constant 0 : i32
    return %c0_i32, %c0_i32_0 : i32, i32
  }
  func.func @transform_11(%arg0: i32) -> (i32, i32) {
    %c0_i32 = arith.constant 0 : i32
    %c0_i32_0 = arith.constant 0 : i32
    %c0_i32_1 = arith.constant 0 : i32
    return %c0_i32, %c0_i32_0 : i32, i32
  }
  func.func @transform_12(%arg0: i32) -> (i32, i32) {
    %c0_i32 = arith.constant 0 : i32
    %c0_i32_0 = arith.constant 0 : i32
    return %c0_i32, %arg0 : i32, i32
  }
}

</mosaic_0001>

<llo_original>
// kernel: cnn2_forward.1
$region0: #{cnn2_forward.1}
  #allocation0 [shape = 'u32[]', space=smem, size = 0x4, offset = 0x4, fixed_abs, tag = 'smem constant byte address 0x4 - core index']
  #allocation1 [shape = 'u32[144,128]{1,0:T(1,128)}', space=vmem, size = 0x12000, scoped, tag = 'internal scratch']
  #allocation2 [shape = 'f32[92,32,128]{2,1,0:T(8,128)}', space=vmem, size = 0x170000, scoped, tag = 'scratch operand']
  #allocation3 [shape = 'f32[90,32,128]{2,1,0:T(8,128)}', space=vmem, size = 0x168000, scoped, tag = 'scratch operand']
  #allocation4 [shape = 'f32[1408,128]{1,0:T(8,128)}', space=vmem, size = 0xb0000, scoped, tag = 'scratch operand']
  %s0 = inlined_call_operand.vmem [shape: f32[95,256], index: 0, kind: input, shape index: {}]
  %s1 = inlined_call_operand.vmem [shape: f32[32,3], index: 1, kind: input, shape index: {}]
  %s2 = inlined_call_operand.vmem [shape: f32[32,1], index: 2, kind: input, shape index: {}]
  %s3 = inlined_call_operand.vmem [shape: f32[32,1], index: 3, kind: input, shape index: {}]
  %s4 = inlined_call_operand.vmem [shape: f32[32,96], index: 4, kind: input, shape index: {}]
  %s5 = inlined_call_operand.vmem [shape: f32[32,1], index: 5, kind: input, shape index: {}]
  %s6 = inlined_call_operand.vmem [shape: f32[32,1], index: 6, kind: input, shape index: {}]
  %s7 = inlined_call_operand.vmem [shape: f32[128,1408], index: 7, kind: input, shape index: {}]
  %s8 = inlined_call_operand.vmem [shape: f32[128,1], index: 8, kind: input, shape index: {}]
  %s9 = inlined_call_operand.vmem [shape: f32[128,1], index: 9, kind: input, shape index: {}]
  %s10 = inlined_call_operand.vmem [shape: f32[94,128], index: 10, kind: input, shape index: {}]
  %s11 = inlined_call_operand.vmem [shape: f32[94,1], index: 11, kind: input, shape index: {}]
  %s12 = inlined_call_operand.hbm [shape: f32[94,256], index: 12, kind: output, shape index: {}]
  %s13 = sld [smem:[#allocation0]]
  $region133: #{cnn2_forward.1} parent=0
    _
  %s15 = ssub.s32 1, %s13
  %s16 = scalar_select 0, %s15, %s13
  $region1: #{cnn2_forward.1} parent=0
    #allocation5 [shape = 'u8[98304]{0}', space=vmem, size = 0x18000, scoped, tag = 'input window, operand 0']
    #allocation6 [shape = 'u8[98304]{0}', space=vmem, size = 0x18000, scoped, tag = 'output window, operand 0']
    #allocation7 [shape = 's32[2]{0}', space=sflag, size = 0x8, scoped, tag = 'scoped memory for cnn2_forward.1']
    %17 = vsyncpa [#allocation7], 0
    %s18 = scalar_lea.sflag [#allocation7], 1
    %19 = vsyncpa %s18, 0
    loop: start=0, step=1, limit=4
    $region2: #{cnn2_forward.1} parent=1 // loop_pre_header
      _
    $region3: #{cnn2_forward.1} parent=1 // loop_header
      %s21 = sphi 0, %s25
      %p22 = scmp.ge.s32.totalorder %s21, 4
      %s31 = sphi 0, %s33
      %s34 = sphi 0, %s31
      %s35 = sphi 0, %s34
      %s51 = sphi 0, %s35
      %s55 = sphi 0, %s55
      %s57 = sphi 0, %s55
      %s58 = sphi 0, %s57
      %s72 = sphi 0, %s58
      %s76 = sphi 0, %s76
      %s78 = sphi 0, %s76
      %s79 = sphi 0, %s78
      %s93 = sphi 0, %s79
      %s97 = sphi 0, %s97
      %s99 = sphi 0, %s97
      %s100 = sphi 0, %s99
      %s114 = sphi 0, %s100
      %s118 = sphi 0, %s118
      %s120 = sphi 0, %s118
      %s121 = sphi 0, %s120
      %s135 = sphi 0, %s121
      %s139 = sphi 0, %s139
      %s141 = sphi 0, %s139
      %s142 = sphi 0, %s141
      %s156 = sphi 0, %s142
      %s160 = sphi 0, %s160
      %s162 = sphi 0, %s160
      %s163 = sphi 0, %s162
      %s177 = sphi 0, %s163
      %s181 = sphi 0, %s181
      %s183 = sphi 0, %s181
      %s184 = sphi 0, %s183
      %s198 = sphi 0, %s184
      %s202 = sphi 0, %s202
      %s204 = sphi 0, %s202
      %s205 = sphi 0, %s204
      %s219 = sphi 0, %s205
      %s223 = sphi 0, %s223
      %s225 = sphi 0, %s223
      %s226 = sphi 0, %s225
      %s240 = sphi 0, %s226
      %s244 = sphi 0, %s244
      %s246 = sphi 0, %s244
      %s247 = sphi 0, %s246
      %s261 = sphi 0, %s247
      %s265 = sphi 0, %s265
      %s267 = sphi 0, %s265
      %s268 = sphi 0, %s267
      %s282 = sphi 0, %s268
      %s288 = sphi 0, %s290
      %s291 = sphi 0, %s288
      %s292 = sphi 0, %s291
      %s308 = sphi 0, %s292
    $region4: #{cnn2_forward.1} parent=1 // loop_header_branch
      %24 = sbr.rel (%p22) target = $region8
    $region5: #{cnn2_forward.1} parent=1 // loop_body
      %s26 = ssub.s32 %s21, 1
      %s27 = ssub.s32 %s21, 2
      %s28 = sadd.s32 %s21, 1
      %s29 = ssub.s32 %s21, %s28
      %p30 = scmp.eq.s32.totalorder %s29, 0
      %s32 = sadd.s32 %s31, 1
      %s33 = scalar_select %p30, %s31, %s32
      %p36 = pneg %p30
      %p37 = scmp.eq.s32.totalorder %s21, 1
      %p38 = por %p36, %p37
      %p39 = scmp.ne.s32.totalorder %s31, %s34
      %p40 = scmp.eq.s32.totalorder %s21, 0
      %p41 = por %p39, %p40
      %p42 = scmp.ne.s32.totalorder %s31, %s34
      %p43 = scmp.eq.s32.totalorder %s26, 1
      %p44 = por %p42, %p43
      %p45 = scmp.ne.s32.totalorder %s34, %s35
      %p46 = scmp.eq.s32.totalorder %s26, 0
      %p47 = por %p45, %p46
      %p48 = scmp.ne.s32.totalorder %s34, %s35
      %p49 = scmp.eq.s32.totalorder %s27, 1
      %p50 = por %p48, %p49
      %p52 = scmp.ne.s32.totalorder %s35, %s51
      %p53 = scmp.eq.s32.totalorder %s27, 0
      %p54 = por %p52, %p53
      %s56 = sadd.s32 %s55, 1
      %p59 = scmp.eq.s32.totalorder %s21, 1
      %p60 = scmp.ne.s32.totalorder %s55, %s57
      %p61 = scmp.eq.s32.totalorder %s21, 0
      %p62 = por %p60, %p61
      %p63 = scmp.ne.s32.totalorder %s55, %s57
      %p64 = scmp.eq.s32.totalorder %s26, 1
      %p65 = por %p63, %p64
      %p66 = scmp.ne.s32.totalorder %s57, %s58
      %p67 = scmp.eq.s32.totalorder %s26, 0
      %p68 = por %p66, %p67
      %p69 = scmp.ne.s32.totalorder %s57, %s58
      %p70 = scmp.eq.s32.totalorder %s27, 1
      %p71 = por %p69, %p70
      %p73 = scmp.ne.s32.totalorder %s58, %s72
      %p74 = scmp.eq.s32.totalorder %s27, 0
      %p75 = por %p73, %p74
      %s77 = sadd.s32 %s76, 1
      %p80 = scmp.eq.s32.totalorder %s21, 1
      %p81 = scmp.ne.s32.totalorder %s76, %s78
      %p82 = scmp.eq.s32.totalorder %s21, 0
      %p83 = por %p81, %p82
      %p84 = scmp.ne.s32.totalorder %s76, %s78
      %p85 = scmp.eq.s32.totalorder %s26, 1
      %p86 = por %p84, %p85
      %p87 = scmp.ne.s32.totalorder %s78, %s79
      %p88 = scmp.eq.s32.totalorder %s26, 0
      %p89 = por %p87, %p88
      %p90 = scmp.ne.s32.totalorder %s78, %s79
      %p91 = scmp.eq.s32.totalorder %s27, 1
      %p92 = por %p90, %p91
      %p94 = scmp.ne.s32.totalorder %s79, %s93
      %p95 = scmp.eq.s32.totalorder %s27, 0
      %p96 = por %p94, %p95
      %s98 = sadd.s32 %s97, 1
      %p101 = scmp.eq.s32.totalorder %s21, 1
      %p102 = scmp.ne.s32.totalorder %s97, %s99
      %p103 = scmp.eq.s32.totalorder %s21, 0
      %p104 = por %p102, %p103
      %p105 = scmp.ne.s32.totalorder %s97, %s99
      %p106 = scmp.eq.s32.totalorder %s26, 1
      %p107 = por %p105, %p106
      %p108 = scmp.ne.s32.totalorder %s99, %s100
      %p109 = scmp.eq.s32.totalorder %s26, 0
      %p110 = por %p108, %p109
      %p111 = scmp.ne.s32.totalorder %s99, %s100
      %p112 = scmp.eq.s32.totalorder %s27, 1
      %p113 = por %p111, %p112
      %p115 = scmp.ne.s32.totalorder %s100, %s114
      %p116 = scmp.eq.s32.totalorder %s27, 0
      %p117 = por %p115, %p116
      %s119 = sadd.s32 %s118, 1
      %p122 = scmp.eq.s32.totalorder %s21, 1
      %p123 = scmp.ne.s32.totalorder %s118, %s120
      %p124 = scmp.eq.s32.totalorder %s21, 0
      %p125 = por %p123, %p124
      %p126 = scmp.ne.s32.totalorder %s118, %s120
      %p127 = scmp.eq.s32.totalorder %s26, 1
      %p128 = por %p126, %p127
      %p129 = scmp.ne.s32.totalorder %s120, %s121
      %p130 = scmp.eq.s32.totalorder %s26, 0
      %p131 = por %p129, %p130
      %p132 = scmp.ne.s32.totalorder %s120, %s121
      %p133 = scmp.eq.s32.totalorder %s27, 1
      %p134 = por %p132, %p133
      %p136 = scmp.ne.s32.totalorder %s121, %s135
      %p137 = scmp.eq.s32.totalorder %s27, 0
      %p138 = por %p136, %p137
      %s140 = sadd.s32 %s139, 1
      %p143 = scmp.eq.s32.totalorder %s21, 1
      %p144 = scmp.ne.s32.totalorder %s139, %s141
      %p145 = scmp.eq.s32.totalorder %s21, 0
      %p146 = por %p144, %p145
      %p147 = scmp.ne.s32.totalorder %s139, %s141
      %p148 = scmp.eq.s32.totalorder %s26, 1
      %p149 = por %p147, %p148
      %p150 = scmp.ne.s32.totalorder %s141, %s142
      %p151 = scmp.eq.s32.totalorder %s26, 0
      %p152 = por %p150, %p151
      %p153 = scmp.ne.s32.totalorder %s141, %s142
      %p154 = scmp.eq.s32.totalorder %s27, 1
      %p155 = por %p153, %p154
      %p157 = scmp.ne.s32.totalorder %s142, %s156
      %p158 = scmp.eq.s32.totalorder %s27, 0
      %p159 = por %p157, %p158
      %s161 = sadd.s32 %s160, 1
      %p164 = scmp.eq.s32.totalorder %s21, 1
      %p165 = scmp.ne.s32.totalorder %s160, %s162
      %p166 = scmp.eq.s32.totalorder %s21, 0
      %p167 = por %p165, %p166
      %p168 = scmp.ne.s32.totalorder %s160, %s162
      %p169 = scmp.eq.s32.totalorder %s26, 1
      %p170 = por %p168, %p169
      %p171 = scmp.ne.s32.totalorder %s162, %s163
      %p172 = scmp.eq.s32.totalorder %s26, 0
      %p173 = por %p171, %p172
      %p174 = scmp.ne.s32.totalorder %s162, %s163
      %p175 = scmp.eq.s32.totalorder %s27, 1
      %p176 = por %p174, %p175
      %p178 = scmp.ne.s32.totalorder %s163, %s177
      %p179 = scmp.eq.s32.totalorder %s27, 0
      %p180 = por %p178, %p179
      %s182 = sadd.s32 %s181, 1
      %p185 = scmp.eq.s32.totalorder %s21, 1
      %p186 = scmp.ne.s32.totalorder %s181, %s183
      %p187 = scmp.eq.s32.totalorder %s21, 0
      %p188 = por %p186, %p187
      %p189 = scmp.ne.s32.totalorder %s181, %s183
      %p190 = scmp.eq.s32.totalorder %s26, 1
      %p191 = por %p189, %p190
      %p192 = scmp.ne.s32.totalorder %s183, %s184
      %p193 = scmp.eq.s32.totalorder %s26, 0
      %p194 = por %p192, %p193
      %p195 = scmp.ne.s32.totalorder %s183, %s184
      %p196 = scmp.eq.s32.totalorder %s27, 1
      %p197 = por %p195, %p196
      %p199 = scmp.ne.s32.totalorder %s184, %s198
      %p200 = scmp.eq.s32.totalorder %s27, 0
      %p201 = por %p199, %p200
      %s203 = sadd.s32 %s202, 1
      %p206 = scmp.eq.s32.totalorder %s21, 1
      %p207 = scmp.ne.s32.totalorder %s202, %s204
      %p208 = scmp.eq.s32.totalorder %s21, 0
      %p209 = por %p207, %p208
      %p210 = scmp.ne.s32.totalorder %s202, %s204
      %p211 = scmp.eq.s32.totalorder %s26, 1
      %p212 = por %p210, %p211
      %p213 = scmp.ne.s32.totalorder %s204, %s205
      %p214 = scmp.eq.s32.totalorder %s26, 0
      %p215 = por %p213, %p214
      %p216 = scmp.ne.s32.totalorder %s204, %s205
      %p217 = scmp.eq.s32.totalorder %s27, 1
      %p218 = por %p216, %p217
      %p220 = scmp.ne.s32.totalorder %s205, %s219
      %p221 = scmp.eq.s32.totalorder %s27, 0
      %p222 = por %p220, %p221
      %s224 = sadd.s32 %s223, 1
      %p227 = scmp.eq.s32.totalorder %s21, 1
      %p228 = scmp.ne.s32.totalorder %s223, %s225
      %p229 = scmp.eq.s32.totalorder %s21, 0
      %p230 = por %p228, %p229
      %p231 = scmp.ne.s32.totalorder %s223, %s225
      %p232 = scmp.eq.s32.totalorder %s26, 1
      %p233 = por %p231, %p232
      %p234 = scmp.ne.s32.totalorder %s225, %s226
      %p235 = scmp.eq.s32.totalorder %s26, 0
      %p236 = por %p234, %p235
      %p237 = scmp.ne.s32.totalorder %s225, %s226
      %p238 = scmp.eq.s32.totalorder %s27, 1
      %p239 = por %p237, %p238
      %p241 = scmp.ne.s32.totalorder %s226, %s240
      %p242 = scmp.eq.s32.totalorder %s27, 0
      %p243 = por %p241, %p242
      %s245 = sadd.s32 %s244, 1
      %p248 = scmp.eq.s32.totalorder %s21, 1
      %p249 = scmp.ne.s32.totalorder %s244, %s246
      %p250 = scmp.eq.s32.totalorder %s21, 0
      %p251 = por %p249, %p250
      %p252 = scmp.ne.s32.totalorder %s244, %s246
      %p253 = scmp.eq.s32.totalorder %s26, 1
      %p254 = por %p252, %p253
      %p255 = scmp.ne.s32.totalorder %s246, %s247
      %p256 = scmp.eq.s32.totalorder %s26, 0
      %p257 = por %p255, %p256
      %p258 = scmp.ne.s32.totalorder %s246, %s247
      %p259 = scmp.eq.s32.totalorder %s27, 1
      %p260 = por %p258, %p259
      %p262 = scmp.ne.s32.totalorder %s247, %s261
      %p263 = scmp.eq.s32.totalorder %s27, 0
      %p264 = por %p262, %p263
      %s266 = sadd.s32 %s265, 1
      %p269 = scmp.eq.s32.totalorder %s21, 1
      %p270 = scmp.ne.s32.totalorder %s265, %s267
      %p271 = scmp.eq.s32.totalorder %s21, 0
      %p272 = por %p270, %p271
      %p273 = scmp.ne.s32.totalorder %s265, %s267
      %p274 = scmp.eq.s32.totalorder %s26, 1
      %p275 = por %p273, %p274
      %p276 = scmp.ne.s32.totalorder %s267, %s268
      %p277 = scmp.eq.s32.totalorder %s26, 0
      %p278 = por %p276, %p277
      %p279 = scmp.ne.s32.totalorder %s267, %s268
      %p280 = scmp.eq.s32.totalorder %s27, 1
      %p281 = por %p279, %p280
      %p283 = scmp.ne.s32.totalorder %s268, %s282
      %p284 = scmp.eq.s32.totalorder %s27, 0
      %p285 = por %p283, %p284
      %s286 = ssub.s32 %s21, %s28
      %p287 = scmp.eq.s32.totalorder %s286, 0
      %s289 = sadd.s32 %s288, 1
      %s290 = scalar_select %p287, %s288, %s289
      %p293 = pneg %p287
      %p294 = scmp.eq.s32.totalorder %s21, 1
      %p295 = por %p293, %p294
      %p296 = scmp.ne.s32.totalorder %s288, %s291
      %p297 = scmp.eq.s32.totalorder %s21, 0
      %p298 = por %p296, %p297
      %p299 = scmp.ne.s32.totalorder %s288, %s291
      %p300 = scmp.eq.s32.totalorder %s26, 1
      %p301 = por %p299, %p300
      %p302 = scmp.ne.s32.totalorder %s291, %s292
      %p303 = scmp.eq.s32.totalorder %s26, 0
      %p304 = por %p302, %p303
      %p305 = scmp.ne.s32.totalorder %s291, %s292
      %p306 = scmp.eq.s32.totalorder %s27, 1
      %p307 = por %p305, %p306
      %p309 = scmp.ne.s32.totalorder %s292, %s308
      %p310 = scmp.eq.s32.totalorder %s27, 0
      %p311 = por %p309, %p310
      %p312 = scmp.le.s32.totalorder 1, %s21
      %p313 = scmp.lt.s32.totalorder %s21, 3
      %p314 = pnand %p312, %p313
      %p315 = pneg %p314
      // Predicated region
      $region9: #{cnn2_forward.1} parent=5 // pred_check
        _
      $region10: #{cnn2_forward.1} parent=5 // pred_check_branch
        %317 = sbr.rel (%p314) target = $region12
      $region11: #{cnn2_forward.1} parent=5 // pred_region
        %s318 = ssub.s32 %s21, 1
        // Predicated region
        $region13: #{cnn2_forward.1} parent=11 // pred_check
          %p319 = pneg %p68
        $region14: #{cnn2_forward.1} parent=11 // pred_check_branch
          %321 = sbr.rel (%p319) target = $region16
        $region15: #{cnn2_forward.1} parent=11 // pred_region
          _
        $region16: #{cnn2_forward.1} parent=11 // pred_fallthru
          _
        // Predicated region
        $region17: #{cnn2_forward.1} parent=11 // pred_check
          %p322 = pneg %p89
        $region18: #{cnn2_forward.1} parent=11 // pred_check_branch
          %324 = sbr.rel (%p322) target = $region20
        $region19: #{cnn2_forward.1} parent=11 // pred_region
          _
        $region20: #{cnn2_forward.1} parent=11 // pred_fallthru
          _
        // Predicated region
        $region21: #{cnn2_forward.1} parent=11 // pred_check
          %p325 = pneg %p110
        $region22: #{cnn2_forward.1} parent=11 // pred_check_branch
          %327 = sbr.rel (%p325) target = $region24
        $region23: #{cnn2_forward.1} parent=11 // pred_region
          _
        $region24: #{cnn2_forward.1} parent=11 // pred_fallthru
          _
        // Predicated region
        $region25: #{cnn2_forward.1} parent=11 // pred_check
          %p328 = pneg %p131
        $region26: #{cnn2_forward.1} parent=11 // pred_check_branch
          %330 = sbr.rel (%p328) target = $region28
        $region27: #{cnn2_forward.1} parent=11 // pred_region
          _
        $region28: #{cnn2_forward.1} parent=11 // pred_fallthru
          _
        // Predicated region
        $region29: #{cnn2_forward.1} parent=11 // pred_check
          %p331 = pneg %p152
        $region30: #{cnn2_forward.1} parent=11 // pred_check_branch
          %333 = sbr.rel (%p331) target = $region32
        $region31: #{cnn2_forward.1} parent=11 // pred_region
          _
        $region32: #{cnn2_forward.1} parent=11 // pred_fallthru
          _
        // Predicated region
        $region33: #{cnn2_forward.1} parent=11 // pred_check
          %p334 = pneg %p173
        $region34: #{cnn2_forward.1} parent=11 // pred_check_branch
          %336 = sbr.rel (%p334) target = $region36
        $region35: #{cnn2_forward.1} parent=11 // pred_region
          _
        $region36: #{cnn2_forward.1} parent=11 // pred_fallthru
          _
        // Predicated region
        $region37: #{cnn2_forward.1} parent=11 // pred_check
          %p337 = pneg %p194
        $region38: #{cnn2_forward.1} parent=11 // pred_check_branch
          %339 = sbr.rel (%p337) target = $region40
        $region39: #{cnn2_forward.1} parent=11 // pred_region
          _
        $region40: #{cnn2_forward.1} parent=11 // pred_fallthru
          _
        // Predicated region
        $region41: #{cnn2_forward.1} parent=11 // pred_check
          %p340 = pneg %p215
        $region42: #{cnn2_forward.1} parent=11 // pred_check_branch
          %342 = sbr.rel (%p340) target = $region44
        $region43: #{cnn2_forward.1} parent=11 // pred_region
          _
        $region44: #{cnn2_forward.1} parent=11 // pred_fallthru
          _
        // Predicated region
        $region45: #{cnn2_forward.1} parent=11 // pred_check
          %p343 = pneg %p236
        $region46: #{cnn2_forward.1} parent=11 // pred_check_branch
          %345 = sbr.rel (%p343) target = $region48
        $region47: #{cnn2_forward.1} parent=11 // pred_region
          _
        $region48: #{cnn2_forward.1} parent=11 // pred_fallthru
          _
        // Predicated region
        $region49: #{cnn2_forward.1} parent=11 // pred_check
          %p346 = pneg %p257
        $region50: #{cnn2_forward.1} parent=11 // pred_check_branch
          %348 = sbr.rel (%p346) target = $region52
        $region51: #{cnn2_forward.1} parent=11 // pred_region
          _
        $region52: #{cnn2_forward.1} parent=11 // pred_fallthru
          _
        // Predicated region
        $region53: #{cnn2_forward.1} parent=11 // pred_check
          %p349 = pneg %p278
        $region54: #{cnn2_forward.1} parent=11 // pred_check_branch
          %351 = sbr.rel (%p349) target = $region56
        $region55: #{cnn2_forward.1} parent=11 // pred_region
          _
        $region56: #{cnn2_forward.1} parent=11 // pred_fallthru
          _
      $region12: #{cnn2_forward.1} parent=5 // pred_fallthru
        _
      %p352 = scmp.lt.s32.totalorder %s21, 2
      // Predicated region
      $region57: #{cnn2_forward.1} parent=5 // pred_check
        %p353 = pneg %p352
      $region58: #{cnn2_forward.1} parent=5 // pred_check_branch
        %355 = sbr.rel (%p353) target = $region60
      $region59: #{cnn2_forward.1} parent=5 // pred_region
        // Predicated region
        $region61: #{cnn2_forward.1} parent=59 // pred_check
          %p356 = pneg %p41
        $region62: #{cnn2_forward.1} parent=59 // pred_check_branch
          %358 = sbr.rel (%p356) target = $region64
        $region63: #{cnn2_forward.1} parent=59 // pred_region
          %s359 = sand.u32 %s31, 1
          %s360 = sand.u32 %s31, 1
          %s361 = smul.addr %s360, 96
          %s362 = scalar_lea.vmem [#allocation5], %s361
          %s363 = smul.addr %s21, 8
          %s364 = scalar_lea.vmem %s0, %s363
          // Predicated region
          $region65: #{cnn2_forward.1} parent=63 // pred_check
            _
          $region66: #{cnn2_forward.1} parent=63 // pred_check_branch
            %366 = sbr.rel (0) target = $region68
          $region67: #{cnn2_forward.1} parent=63 // pred_region
            // Predicated region
            $region69: #{cnn2_forward.1} parent=67 // pred_check
              _
            $region70: #{cnn2_forward.1} parent=67 // pred_check_branch
              %368 = sbr.rel (0) target = $region72
            $region71: #{cnn2_forward.1} parent=67 // pred_region
              // Predicated region
              $region84: #{cnn2_forward.1} parent=71 // pred_check
                _
              $region85: #{cnn2_forward.1} parent=71 // pred_check_branch
                %405 = sbr.rel (0) target = $region87
              $region86: #{cnn2_forward.1} parent=71 // pred_region
                loop: start=0, step=1, limit=1
                $region88: #{cnn2_forward.1} parent=86 // loop_pre_header
                  _
                $region89: #{cnn2_forward.1} parent=86 // loop_header
                  %s407 = sphi 0, %s411
                  %p408 = scmp.ge.s32.totalorder %s407, 1
                  %s412 = sphi %s364, %s364
                  %s413 = sphi %s362, %s362
                $region90: #{cnn2_forward.1} parent=86 // loop_header_branch
                  %410 = sbr.rel (%p408) target = $region94
                $region91: #{cnn2_forward.1} parent=86 // loop_body
                  %v414 = vld [vmem:[%s412] sm:$0xff]
                  %415 = vst [vmem:[%s413] sm:$0xff] %v414
                  %v416 = vld [vmem:[%s412 + $0x10] sm:$0xff]
                  %417 = vst [vmem:[%s413 + $0x8] sm:$0xff] %v416
                  %v418 = vld [vmem:[%s412 + $0x20] sm:$0xff]
                  %419 = vst [vmem:[%s413 + $0x10] sm:$0xff] %v418
                  %v420 = vld [vmem:[%s412 + $0x30] sm:$0xff]
                  %421 = vst [vmem:[%s413 + $0x18] sm:$0xff] %v420
                  %v422 = vld [vmem:[%s412 + $0x40] sm:$0xff]
                  %423 = vst [vmem:[%s413 + $0x20] sm:$0xff] %v422
                  %v424 = vld [vmem:[%s412 + $0x50] sm:$0xff]
                  %425 = vst [vmem:[%s413 + $0x28] sm:$0xff] %v424
                  %v426 = vld [vmem:[%s412 + $0x60] sm:$0xff]
                  %427 = vst [vmem:[%s413 + $0x30] sm:$0xff] %v426
                  %v428 = vld [vmem:[%s412 + $0x70] sm:$0xff]
                  %429 = vst [vmem:[%s413 + $0x38] sm:$0xff] %v428
                  %v430 = vld [vmem:[%s412 + $0x80] sm:$0xff]
                  %431 = vst [vmem:[%s413 + $0x40] sm:$0xff] %v430
                  %v432 = vld [vmem:[%s412 + $0x90] sm:$0xff]
                  %433 = vst [vmem:[%s413 + $0x48] sm:$0xff] %v432
                  %v434 = vld [vmem:[%s412 + $0xa0] sm:$0xff]
                  %435 = vst [vmem:[%s413 + $0x50] sm:$0xff] %v434
                  %v436 = vld [vmem:[%s412 + $0xb0] sm:$0xff]
                  %437 = vst [vmem:[%s413 + $0x58] sm:$0xff] %v436
                $region92: #{cnn2_forward.1} parent=86 // loop_footer
                  %s411 = sadd.s32 1, %s407
                $region93: #{cnn2_forward.1} parent=86 // loop_footer_branch
                  %406 = sbr.rel target = $region89
                $region94: #{cnn2_forward.1} parent=86 // loop_exit
                  _
              $region87: #{cnn2_forward.1} parent=71 // pred_fallthru
                _
              // Predicated region
              $region95: #{cnn2_forward.1} parent=71 // pred_check
                _
              $region96: #{cnn2_forward.1} parent=71 // pred_check_branch
                %439 = sbr.rel target = $region98
              $region97: #{cnn2_forward.1} parent=71 // pred_region
                _
              $region98: #{cnn2_forward.1} parent=71 // pred_fallthru
                _
            $region72: #{cnn2_forward.1} parent=67 // pred_fallthru
              _
            // Predicated region
            $region73: #{cnn2_forward.1} parent=67 // pred_check
              _
            $region74: #{cnn2_forward.1} parent=67 // pred_check_branch
              %370 = sbr.rel target = $region76
            $region75: #{cnn2_forward.1} parent=67 // pred_region
              loop: start=0, step=1, limit=1
              $region77: #{cnn2_forward.1} parent=75 // loop_pre_header
                _
              $region78: #{cnn2_forward.1} parent=75 // loop_header
                %s373 = sphi 0, %s377
                %p374 = scmp.ge.s32.totalorder %s373, 1
                %s378 = sphi %s364, %s364
                %s379 = sphi %s362, %s362
              $region79: #{cnn2_forward.1} parent=75 // loop_header_branch
                %376 = sbr.rel (%p374) target = $region83
              $region80: #{cnn2_forward.1} parent=75 // loop_body
                %v380 = vld [vmem:[%s378] sm:$0xff]
                %381 = vst [vmem:[%s379] sm:$0xff] %v380
                %v382 = vld [vmem:[%s378 + $0x10] sm:$0xff]
                %383 = vst [vmem:[%s379 + $0x8] sm:$0xff] %v382
                %v384 = vld [vmem:[%s378 + $0x20] sm:$0xff]
                %385 = vst [vmem:[%s379 + $0x10] sm:$0xff] %v384
                %v386 = vld [vmem:[%s378 + $0x30] sm:$0xff]
                %387 = vst [vmem:[%s379 + $0x18] sm:$0xff] %v386
                %v388 = vld [vmem:[%s378 + $0x40] sm:$0xff]
                %389 = vst [vmem:[%s379 + $0x20] sm:$0xff] %v388
                %v390 = vld [vmem:[%s378 + $0x50] sm:$0xff]
                %391 = vst [vmem:[%s379 + $0x28] sm:$0xff] %v390
                %v392 = vld [vmem:[%s378 + $0x60] sm:$0xff]
                %393 = vst [vmem:[%s379 + $0x30] sm:$0xff] %v392
                %v394 = vld [vmem:[%s378 + $0x70] sm:$0xff]
                %395 = vst [vmem:[%s379 + $0x38] sm:$0xff] %v394
                %v396 = vld [vmem:[%s378 + $0x80] sm:$0xff]
                %397 = vst [vmem:[%s379 + $0x40] sm:$0xff] %v396
                %v398 = vld [vmem:[%s378 + $0x90] sm:$0xff]
                %399 = vst [vmem:[%s379 + $0x48] sm:$0xff] %v398
                %v400 = vld [vmem:[%s378 + $0xa0] sm:$0xff]
                %401 = vst [vmem:[%s379 + $0x50] sm:$0xff] %v400
                %v402 = vld [vmem:[%s378 + $0xb0] sm:$0xff]
                %403 = vst [vmem:[%s379 + $0x58] sm:$0xff] %v402
              $region81: #{cnn2_forward.1} parent=75 // loop_footer
                %s377 = sadd.s32 1, %s373
              $region82: #{cnn2_forward.1} parent=75 // loop_footer_branch
                %372 = sbr.rel target = $region78
              $region83: #{cnn2_forward.1} parent=75 // loop_exit
                _
            $region76: #{cnn2_forward.1} parent=67 // pred_fallthru
              _
          $region68: #{cnn2_forward.1} parent=63 // pred_fallthru
            _
          %440 = vnop
        $region64: #{cnn2_forward.1} parent=59 // pred_fallthru
          _
      $region60: #{cnn2_forward.1} parent=5 // pred_fallthru
        _
      %p441 = scmp.le.s32.totalorder 1, %s21
      %p442 = scmp.lt.s32.totalorder %s21, 3
      %p443 = pnand %p441, %p442
      %p444 = pneg %p443
      // Predicated region
      $region99: #{cnn2_forward.1} parent=5 // pred_check
        _
      $region100: #{cnn2_forward.1} parent=5 // pred_check_branch
        %446 = sbr.rel (%p443) target = $region102
      $region101: #{cnn2_forward.1} parent=5 // pred_region
        %s447 = ssub.s32 %s21, 1
        %s448 = sand.u32 %s34, 1
        %s449 = sand.u32 %s34, 1
        %s450 = smul.addr %s449, 96
        %s451 = scalar_lea.vmem [#allocation5], %s450
        // Predicated region
        $region103: #{cnn2_forward.1} parent=101 // pred_check
          %p452 = pneg %p47
        $region104: #{cnn2_forward.1} parent=101 // pred_check_branch
          %454 = sbr.rel (%p452) target = $region106
        $region105: #{cnn2_forward.1} parent=101 // pred_region
          _
        $region106: #{cnn2_forward.1} parent=101 // pred_fallthru
          _
        %s455 = sand.u32 %s34, 1
        %s456 = sand.u32 %s34, 1
        %s457 = smul.addr %s456, 96
        %s458 = scalar_lea.vmem [#allocation5], %s457
        %p459 = pneg %p47
        %p460 = pneg %p44
        %p461 = pneg %p68
        %p462 = pneg %p65
        %p463 = pneg %p89
        %p464 = pneg %p86
        %p465 = pneg %p110
        %p466 = pneg %p107
        %p467 = pneg %p131
        %p468 = pneg %p128
        %p469 = pneg %p152
        %p470 = pneg %p149
        %p471 = pneg %p173
        %p472 = pneg %p170
        %p473 = pneg %p194
        %p474 = pneg %p191
        %p475 = pneg %p215
        %p476 = pneg %p212
        %p477 = pneg %p236
        %p478 = pneg %p233
        %p479 = pneg %p257
        %p480 = pneg %p254
        %p481 = pneg %p278
        %p482 = pneg %p275
        %p483 = pneg %p304
        %p484 = pneg %p301
        %s485 = sand.u32 %s291, 1
        %s486 = scalar_lea.sflag [#allocation7], %s485
        %s487 = sand.u32 %s291, 1
        %s488 = smul.addr %s487, 96
        %s489 = scalar_lea.vmem [#allocation6], %s488
        %v490 = vld [vmem:[%s1] sm:$0xff]
        %v491 = vld [vmem:[%s1 + $0x8] sm:$0xff]
        %v492 = vld [vmem:[%s1 + $0x10] sm:$0xff]
        %v493 = vld [vmem:[%s1 + $0x18] sm:$0xff]
        %v494 = vld [vmem:[%s2] sm:$0xff]
        %v495 = vld [vmem:[%s2 + $0x8] sm:$0xff]
        %v496 = vld [vmem:[%s2 + $0x10] sm:$0xff]
        %v497 = vld [vmem:[%s2 + $0x18] sm:$0xff]
        %v498 = vld [vmem:[%s3] sm:$0xff]
        %v499 = vld [vmem:[%s3 + $0x8] sm:$0xff]
        %v500 = vld [vmem:[%s3 + $0x10] sm:$0xff]
        %v501 = vld [vmem:[%s3 + $0x18] sm:$0xff]
        %v502 = vld [vmem:[%s4] sm:$0xff]
        %v503 = vld [vmem:[%s4 + $0x8] sm:$0xff]
        %v504 = vld [vmem:[%s4 + $0x10] sm:$0xff]
        %v505 = vld [vmem:[%s4 + $0x18] sm:$0xff]
        %v506 = vld [vmem:[%s5] sm:$0xff]
        %v507 = vld [vmem:[%s5 + $0x8] sm:$0xff]
        %v508 = vld [vmem:[%s5 + $0x10] sm:$0xff]
        %v509 = vld [vmem:[%s5 + $0x18] sm:$0xff]
        %v510 = vld [vmem:[%s6] sm:$0xff]
        %v511 = vld [vmem:[%s6 + $0x8] sm:$0xff]
        %v512 = vld [vmem:[%s6 + $0x10] sm:$0xff]
        %v513 = vld [vmem:[%s6 + $0x18] sm:$0xff]
        loop: start=0, step=1, limit=92
        $region107: #{cnn2_forward.1} parent=101 // loop_pre_header
          _
        $region108: #{cnn2_forward.1} parent=101 // loop_header
          %s515 = sphi 0, %s519
          %p516 = scmp.ge.s32.totalorder %s515, 92
        $region109: #{cnn2_forward.1} parent=101 // loop_header_branch
          %518 = sbr.rel (%p516) target = $region113
        $region110: #{cnn2_forward.1} parent=101 // loop_body
          %s520 = sadd.s32 %s515, 1
          %s521 = scalar_lea.vmem %s451, %s520 [#allocation5]
          %v522 = vld [vmem:[%s521] sm:$0x1]
          %s523 = sadd.s32 %s515, 2
          %s524 = scalar_lea.vmem %s451, %s523 [#allocation5]
          %v525 = vld [vmem:[%s524] sm:$0x1]
          %s526 = sadd.s32 %s515, 3
          %s527 = scalar_lea.vmem %s451, %s526 [#allocation5]
          %v528 = vld [vmem:[%s527] sm:$0x1]
          %530 = vset.pattern.permute.xlu0 0
          %531 = vperm.xlu0 %530, %v490
          %v532 = vpop.permute.xlu0 %531
          %535 = vset.pattern.permute.xlu0 0
          %536 = vperm.xlu0 %535, %v491
          %v537 = vpop.permute.xlu0 %536
          %540 = vset.pattern.permute.xlu0 0
          %541 = vperm.xlu0 %540, %v492
          %v542 = vpop.permute.xlu0 %541
          %545 = vset.pattern.permute.xlu0 0
          %546 = vperm.xlu0 %545, %v493
          %v547 = vpop.permute.xlu0 %546
          %v549 = vlaneseq
          %v550 = vshrl.u32 %v549, 7
          %v551 = vsub.s32 0, %v550
          %v552 = vrot.slane %v522, %v551
          %v553 = vmul.f32 %v532, %v552
          %v554 = vmul.f32 %v537, %v552
          %v555 = vmul.f32 %v542, %v552
          %v556 = vmul.f32 %v547, %v552
          %557 = vset.pattern.permute.xlu0 1
          %558 = vperm.xlu0 %557, %v490
          %v559 = vpop.permute.xlu0 %558
          %561 = vset.pattern.permute.xlu0 1
          %562 = vperm.xlu0 %561, %v491
          %v563 = vpop.permute.xlu0 %562
          %565 = vset.pattern.permute.xlu0 1
          %566 = vperm.xlu0 %565, %v492
          %v567 = vpop.permute.xlu0 %566
          %569 = vset.pattern.permute.xlu0 1
          %570 = vperm.xlu0 %569, %v493
          %v571 = vpop.permute.xlu0 %570
          %v573 = vlaneseq
          %v574 = vshrl.u32 %v573, 7
          %v575 = vsub.s32 0, %v574
          %v576 = vrot.slane %v525, %v575
          %v577 = vmul.f32 %v559, %v576
          %v578 = vmul.f32 %v563, %v576
          %v579 = vmul.f32 %v567, %v576
          %v580 = vmul.f32 %v571, %v576
          %v581 = vadd.f32 %v553, %v577
          %v582 = vadd.f32 %v554, %v578
          %v583 = vadd.f32 %v555, %v579
          %v584 = vadd.f32 %v556, %v580
          %585 = vset.pattern.permute.xlu0 2
          %586 = vperm.xlu0 %585, %v490
          %v587 = vpop.permute.xlu0 %586
          %589 = vset.pattern.permute.xlu0 2
          %590 = vperm.xlu0 %589, %v491
          %v591 = vpop.permute.xlu0 %590
          %593 = vset.pattern.permute.xlu0 2
          %594 = vperm.xlu0 %593, %v492
          %v595 = vpop.permute.xlu0 %594
          %597 = vset.pattern.permute.xlu0 2
          %598 = vperm.xlu0 %597, %v493
          %v599 = vpop.permute.xlu0 %598
          %v601 = vlaneseq
          %v602 = vshrl.u32 %v601, 7
          %v603 = vsub.s32 0, %v602
          %v604 = vrot.slane %v528, %v603
          %v605 = vmul.f32 %v587, %v604
          %v606 = vmul.f32 %v591, %v604
          %v607 = vmul.f32 %v595, %v604
          %v608 = vmul.f32 %v599, %v604
          %v609 = vadd.f32 %v581, %v605
          %v610 = vadd.f32 %v582, %v606
          %v611 = vadd.f32 %v583, %v607
          %v612 = vadd.f32 %v584, %v608
          %614 = vset.pattern.permute.xlu0 0
          %615 = vperm.xlu0 %614, %v494
          %v616 = vpop.permute.xlu0 %615
          %619 = vset.pattern.permute.xlu0 0
          %620 = vperm.xlu0 %619, %v495
          %v621 = vpop.permute.xlu0 %620
          %624 = vset.pattern.permute.xlu0 0
          %625 = vperm.xlu0 %624, %v496
          %v626 = vpop.permute.xlu0 %625
          %629 = vset.pattern.permute.xlu0 0
          %630 = vperm.xlu0 %629, %v497
          %v631 = vpop.permute.xlu0 %630
          %v633 = vmul.f32 %v609, %v616
          %v634 = vmul.f32 %v610, %v621
          %v635 = vmul.f32 %v611, %v626
          %v636 = vmul.f32 %v612, %v631
          %638 = vset.pattern.permute.xlu0 0
          %639 = vperm.xlu0 %638, %v498
          %v640 = vpop.permute.xlu0 %639
          %643 = vset.pattern.permute.xlu0 0
          %644 = vperm.xlu0 %643, %v499
          %v645 = vpop.permute.xlu0 %644
          %648 = vset.pattern.permute.xlu0 0
          %649 = vperm.xlu0 %648, %v500
          %v650 = vpop.permute.xlu0 %649
          %653 = vset.pattern.permute.xlu0 0
          %654 = vperm.xlu0 %653, %v501
          %v655 = vpop.permute.xlu0 %654
          %v657 = vadd.f32 %v633, %v640
          %v658 = vadd.f32 %v634, %v645
          %v659 = vadd.f32 %v635, %v650
          %v660 = vadd.f32 %v636, %v655
          %v661 = vmax.f32 %v657, 0.0
          %v662 = vmax.f32 %v658, 0.0
          %v663 = vmax.f32 %v659, 0.0
          %v664 = vmax.f32 %v660, 0.0
          %s665 = smul.u32 %s515, 32
          %s666 = scalar_lea.vmem [#allocation2], %s665
          %667 = vst [vmem:[%s666] sm:$0xff] %v661
          %668 = vst [vmem:[%s666 + $0x8] sm:$0xff] %v662
          %669 = vst [vmem:[%s666 + $0x10] sm:$0xff] %v663
          %670 = vst [vmem:[%s666 + $0x18] sm:$0xff] %v664
        $region111: #{cnn2_forward.1} parent=101 // loop_footer
          %s519 = sadd.s32 1, %s515
        $region112: #{cnn2_forward.1} parent=101 // loop_footer_branch
          %514 = sbr.rel target = $region108
        $region113: #{cnn2_forward.1} parent=101 // loop_exit
          _
        loop: start=0, step=1, limit=90
        $region114: #{cnn2_forward.1} parent=101 // loop_pre_header
          _
        $region115: #{cnn2_forward.1} parent=101 // loop_header
          %s672 = sphi 0, %s676
          %p673 = scmp.ge.s32.totalorder %s672, 90
        $region116: #{cnn2_forward.1} parent=101 // loop_header_branch
          %675 = sbr.rel (%p673) target = $region120
        $region117: #{cnn2_forward.1} parent=101 // loop_body
          %s677 = smul.u32 %s672, 32
          %s678 = scalar_lea.vmem [#allocation2], %s677
          %v679 = vld [vmem:[%s678] sm:$0xff]
          %v680 = vld [vmem:[%s678 + $0x8] sm:$0xff]
          %v681 = vld [vmem:[%s678 + $0x10] sm:$0xff]
          %v682 = vld [vmem:[%s678 + $0x18] sm:$0xff]
          %s683 = sadd.s32 %s672, 1
          %s684 = smul.u32 %s683, 32
          %s685 = scalar_lea.vmem [#allocation2], %s684
          %v686 = vld [vmem:[%s685] sm:$0xff]
          %v687 = vld [vmem:[%s685 + $0x8] sm:$0xff]
          %v688 = vld [vmem:[%s685 + $0x10] sm:$0xff]
          %v689 = vld [vmem:[%s685 + $0x18] sm:$0xff]
          %s690 = sadd.s32 %s672, 2
          %s691 = smul.u32 %s690, 32
          %s692 = scalar_lea.vmem [#allocation2], %s691
          %v693 = vld [vmem:[%s692] sm:$0xff]
          %v694 = vld [vmem:[%s692 + $0x8] sm:$0xff]
          %v695 = vld [vmem:[%s692 + $0x10] sm:$0xff]
          %v696 = vld [vmem:[%s692 + $0x18] sm:$0xff]
          %vm697 = vcmask 785408
          %v699 = vsel %vm697, %v502, 0
          %v702 = vsel %vm697, %v503, 0
          %v705 = vsel %vm697, %v504, 0
          %v708 = vsel %vm697, %v505, 0
          %710 = vmatprep.subr.mxu0 0.0
          %711 = vmatpush1.msra.mxu0 %v679
          %712 = vmatprep.subr.mxu0 0.0
          %713 = vmatpush1.msra.mxu0 %v680
          %714 = vmatprep.subr.mxu0 0.0
          %715 = vmatpush1.msra.mxu0 %v681
          %716 = vmatprep.subr.mxu0 0.0
          %717 = vmatpush1.msra.mxu0 %v682
          %718 = vmatprep.subr.mxu0 0.0
          %719 = vmatpush1.msra.mxu0 %v686
          %720 = vmatprep.subr.mxu0 0.0
          %721 = vmatpush1.msra.mxu0 %v687
          %722 = vmatprep.subr.mxu0 0.0
          %723 = vmatpush1.msra.mxu0 %v688
          %724 = vmatprep.subr.mxu0 0.0
          %725 = vmatpush1.msra.mxu0 %v689
          %726 = vmatprep.subr.mxu0 0.0
          %727 = vmatpush1.msra.mxu0 %v693
          %728 = vmatprep.subr.mxu0 0.0
          %729 = vmatpush1.msra.mxu0 %v694
          %730 = vmatprep.subr.mxu0 0.0
          %731 = vmatpush1.msra.mxu0 %v695
          %732 = vmatprep.subr.mxu0 0.0
          %733 = vmatpush1.msra.mxu0 %v696
          %734 = vmatprep.subr.mxu0 0.0
          %735 = vmatpush1.msra.mxu0 0.0
          %736 = vmatprep.subr.mxu0 0.0
          %737 = vmatpush1.msra.mxu0 0.0
          %738 = vmatprep.subr.mxu0 0.0
          %739 = vmatpush1.msra.mxu0 0.0
          %740 = vmatprep.subr.mxu0 0.0
          %741 = vmatpush1.msra.mxu0 0.0
          %742 = vmatprep.subr.mxu0 0.0
          %743 = vmatpush1.msra.mxu0 0.0
          %744 = vmatprep.subr.mxu0 0.0
          %745 = vmatpush1.msra.mxu0 0.0
          %746 = vmatprep.subr.mxu0 0.0
          %747 = vmatpush1.msra.mxu0 0.0
          %748 = vmatprep.subr.mxu0 0.0
          %749 = vmatpush1.msra.mxu0 0.0
          %750 = vmatprep.subr.mxu0 0.0
          %751 = vmatpush1.msra.mxu0 0.0
          %752 = vmatprep.subr.mxu0 0.0
          %753 = vmatpush1.msra.mxu0 0.0
          %754 = vmatprep.subr.mxu0 0.0
          %755 = vmatpush1.msra.mxu0 0.0
          %756 = vmatprep.subr.mxu0 0.0
          %757 = vmatpush1.msra.mxu0 0.0
          %758 = vmatprep.subr.mxu0 0.0
          %759 = vmatpush1.msra.mxu0 0.0
          %760 = vmatprep.subr.mxu0 0.0
          %761 = vmatpush1.msra.mxu0 0.0
          %762 = vmatprep.subr.mxu0 0.0
          %763 = vmatpush1.msra.mxu0 0.0
          %764 = vmatprep.subr.mxu0 0.0
          %765 = vmatpush1.msra.mxu0 0.0
          %766 = vmatprep.subr.mxu0 0.0
          %767 = vmatpush1.msra.mxu0 0.0
          %768 = vmatprep.subr.mxu0 0.0
          %769 = vmatpush1.msra.mxu0 0.0
          %770 = vmatprep.subr.mxu0 0.0
          %771 = vmatpush1.msra.mxu0 0.0
          %772 = vmatprep.subr.mxu0 0.0
          %773 = vmatpush1.msra.mxu0 0.0
          %774 = vmatprep.mubr.f32.mxu0 0.0
          %775 = vmatmul.mubr.f32.gmra.mrb[0].mxu0 %v699
          %v776 = vpop.f32.mrb[0].mxu0
          %v777 = vadd.f32 0.0, %v776
          %v778 = vpop.f32.mrb[0].mxu0
          %779 = vmatprep.mubr.f32.mxu0 0.0
          %780 = vmatmul.mubr.f32.gmra.mrb[0].mxu0 %v702
          %v781 = vpop.f32.mrb[0].mxu0
          %v782 = vadd.f32 0.0, %v781
          %v783 = vpop.f32.mrb[0].mxu0
          %784 = vmatprep.mubr.f32.mxu0 0.0
          %785 = vmatmul.mubr.f32.gmra.mrb[0].mxu0 %v705
          %v786 = vpop.f32.mrb[0].mxu0
          %v787 = vadd.f32 0.0, %v786
          %v788 = vpop.f32.mrb[0].mxu0
          %789 = vmatprep.mubr.f32.mxu0 0.0
          %790 = vmatmul.mubr.f32.gmra.mrb[0].mxu0 %v708
          %v791 = vpop.f32.mrb[0].mxu0
          %v792 = vadd.f32 0.0, %v791
          %v793 = vpop.f32.mrb[0].mxu0
          %794 = vdwg.mxu0
          %796 = vset.pattern.permute.xlu0 0
          %797 = vperm.xlu0 %796, %v506
          %v798 = vpop.permute.xlu0 %797
          %801 = vset.pattern.permute.xlu0 0
          %802 = vperm.xlu0 %801, %v507
          %v803 = vpop.permute.xlu0 %802
          %806 = vset.pattern.permute.xlu0 0
          %807 = vperm.xlu0 %806, %v508
          %v808 = vpop.permute.xlu0 %807
          %811 = vset.pattern.permute.xlu0 0
          %812 = vperm.xlu0 %811, %v509
          %v813 = vpop.permute.xlu0 %812
          %v815 = vmul.f32 %v777, %v798
          %v816 = vmul.f32 %v782, %v803
          %v817 = vmul.f32 %v787, %v808
          %v818 = vmul.f32 %v792, %v813
          %820 = vset.pattern.permute.xlu0 0
          %821 = vperm.xlu0 %820, %v510
          %v822 = vpop.permute.xlu0 %821
          %825 = vset.pattern.permute.xlu0 0
          %826 = vperm.xlu0 %825, %v511
          %v827 = vpop.permute.xlu0 %826
          %830 = vset.pattern.permute.xlu0 0
          %831 = vperm.xlu0 %830, %v512
          %v832 = vpop.permute.xlu0 %831
          %835 = vset.pattern.permute.xlu0 0
          %836 = vperm.xlu0 %835, %v513
          %v837 = vpop.permute.xlu0 %836
          %v839 = vadd.f32 %v815, %v822
          %v840 = vadd.f32 %v816, %v827
          %v841 = vadd.f32 %v817, %v832
          %v842 = vadd.f32 %v818, %v837
          %v843 = vmax.f32 %v839, 0.0
          %v844 = vmax.f32 %v840, 0.0
          %v845 = vmax.f32 %v841, 0.0
          %v846 = vmax.f32 %v842, 0.0
          %s847 = scalar_lea.vmem [#allocation3], %s677
          %848 = vst [vmem:[%s847] sm:$0xff] %v843
          %849 = vst [vmem:[%s847 + $0x8] sm:$0xff] %v844
          %850 = vst [vmem:[%s847 + $0x10] sm:$0xff] %v845
          %851 = vst [vmem:[%s847 + $0x18] sm:$0xff] %v846
        $region118: #{cnn2_forward.1} parent=101 // loop_footer
          %s676 = sadd.s32 1, %s672
        $region119: #{cnn2_forward.1} parent=101 // loop_footer_branch
          %671 = sbr.rel target = $region115
        $region120: #{cnn2_forward.1} parent=101 // loop_exit
          _
        %v852 = vld [vmem:[#allocation3] sm:$0xff]
        %v853 = vld [vmem:[#allocation3 + $0x8] sm:$0xff]
        %v854 = vld [vmem:[#allocation3 + $0x10] sm:$0xff]
        %v855 = vld [vmem:[#allocation3 + $0x18] sm:$0xff]
        %s856 = scalar_lea.vmem [#allocation3], 32
        %v857 = vld [vmem:[%s856] sm:$0xff]
        %v858 = vld [vmem:[%s856 + $0x8] sm:$0xff]
        %v859 = vld [vmem:[%s856 + $0x10] sm:$0xff]
        %v860 = vld [vmem:[%s856 + $0x18] sm:$0xff]
        %v861 = vmax.f32 %v852, %v857
        %v862 = vmax.f32 %v853, %v858
        %v863 = vmax.f32 %v854, %v859
        %v864 = vmax.f32 %v855, %v860
        %s865 = scalar_lea.vmem [#allocation3], 64
        %v866 = vld [vmem:[%s865] sm:$0xff]
        %v867 = vld [vmem:[%s865 + $0x8] sm:$0xff]
        %v868 = vld [vmem:[%s865 + $0x10] sm:$0xff]
        %v869 = vld [vmem:[%s865 + $0x18] sm:$0xff]
        %v870 = vmax.f32 %v861, %v866
        %v871 = vmax.f32 %v862, %v867
        %v872 = vmax.f32 %v863, %v868
        %v873 = vmax.f32 %v864, %v869
        %874 = vst [vmem:[#allocation4] sm:$0xff] %v870
        %875 = vst [vmem:[#allocation4 + $0x8] sm:$0xff] %v871
        %876 = vst [vmem:[#allocation4 + $0x10] sm:$0xff] %v872
        %877 = vst [vmem:[#allocation4 + $0x18] sm:$0xff] %v873
        %v878 = vld [vmem:[%s865] sm:$0xff]
        %v879 = vld [vmem:[%s865 + $0x8] sm:$0xff]
        %v880 = vld [vmem:[%s865 + $0x10] sm:$0xff]
        %v881 = vld [vmem:[%s865 + $0x18] sm:$0xff]
        %s882 = scalar_lea.vmem [#allocation3], 96
        %v883 = vld [vmem:[%s882] sm:$0xff]
        %v884 = vld [vmem:[%s882 + $0x8] sm:$0xff]
        %v885 = vld [vmem:[%s882 + $0x10] sm:$0xff]
        %v886 = vld [vmem:[%s882 + $0x18] sm:$0xff]
        %v887 = vmax.f32 %v878, %v883
        %v888 = vmax.f32 %v879, %v884
        %v889 = vmax.f32 %v880, %v885
        %v890 = vmax.f32 %v881, %v886
        %s891 = scalar_lea.vmem [#allocation3], 128
        %v892 = vld [vmem:[%s891] sm:$0xff]
        %v893 = vld [vmem:[%s891 + $0x8] sm:$0xff]
        %v894 = vld [vmem:[%s891 + $0x10] sm:$0xff]
        %v895 = vld [vmem:[%s891 + $0x18] sm:$0xff]
        %v896 = vmax.f32 %v887, %v892
        %v897 = vmax.f32 %v888, %v893
        %v898 = vmax.f32 %v889, %v894
        %v899 = vmax.f32 %v890, %v895
        %900 = vst [vmem:[#allocation4 + $0x20] sm:$0xff] %v896
        %901 = vst [vmem:[#allocation4 + $0x28] sm:$0xff] %v897
        %902 = vst [vmem:[#allocation4 + $0x30] sm:$0xff] %v898
        %903 = vst [vmem:[#allocation4 + $0x38] sm:$0xff] %v899
        %v904 = vld [vmem:[%s891] sm:$0xff]
        %v905 = vld [vmem:[%s891 + $0x8] sm:$0xff]
        %v906 = vld [vmem:[%s891 + $0x10] sm:$0xff]
        %v907 = vld [vmem:[%s891 + $0x18] sm:$0xff]
        %s908 = scalar_lea.vmem [#allocation3], 160
        %v909 = vld [vmem:[%s908] sm:$0xff]
        %v910 = vld [vmem:[%s908 + $0x8] sm:$0xff]
        %v911 = vld [vmem:[%s908 + $0x10] sm:$0xff]
        %v912 = vld [vmem:[%s908 + $0x18] sm:$0xff]
        %v913 = vmax.f32 %v904, %v909
        %v914 = vmax.f32 %v905, %v910
        %v915 = vmax.f32 %v906, %v911
        %v916 = vmax.f32 %v907, %v912
        %s917 = scalar_lea.vmem [#allocation3], 192
        %v918 = vld [vmem:[%s917] sm:$0xff]
        %v919 = vld [vmem:[%s917 + $0x8] sm:$0xff]
        %v920 = vld [vmem:[%s917 + $0x10] sm:$0xff]
        %v921 = vld [vmem:[%s917 + $0x18] sm:$0xff]
        %v922 = vmax.f32 %v913, %v918
        %v923 = vmax.f32 %v914, %v919
        %v924 = vmax.f32 %v915, %v920
        %v925 = vmax.f32 %v916, %v921
        %926 = vst [vmem:[#allocation4 + $0x40] sm:$0xff] %v922
        %927 = vst [vmem:[#allocation4 + $0x48] sm:$0xff] %v923
        %928 = vst [vmem:[#allocation4 + $0x50] sm:$0xff] %v924
        %929 = vst [vmem:[#allocation4 + $0x58] sm:$0xff] %v925
        %v930 = vld [vmem:[%s917] sm:$0xff]
        %v931 = vld [vmem:[%s917 + $0x8] sm:$0xff]
        %v932 = vld [vmem:[%s917 + $0x10] sm:$0xff]
        %v933 = vld [vmem:[%s917 + $0x18] sm:$0xff]
        %s934 = scalar_lea.vmem [#allocation3], 224
        %v935 = vld [vmem:[%s934] sm:$0xff]
        %v936 = vld [vmem:[%s934 + $0x8] sm:$0xff]
        %v937 = vld [vmem:[%s934 + $0x10] sm:$0xff]
        %v938 = vld [vmem:[%s934 + $0x18] sm:$0xff]
        %v939 = vmax.f32 %v930, %v935
        %v940 = vmax.f32 %v931, %v936
        %v941 = vmax.f32 %v932, %v937
        %v942 = vmax.f32 %v933, %v938
        %s943 = scalar_lea.vmem [#allocation3], 256
        %v944 = vld [vmem:[%s943] sm:$0xff]
        %v945 = vld [vmem:[%s943 + $0x8] sm:$0xff]
        %v946 = vld [vmem:[%s943 + $0x10] sm:$0xff]
        %v947 = vld [vmem:[%s943 + $0x18] sm:$0xff]
        %v948 = vmax.f32 %v939, %v944
        %v949 = vmax.f32 %v940, %v945
        %v950 = vmax.f32 %v941, %v946
        %v951 = vmax.f32 %v942, %v947
        %952 = vst [vmem:[#allocation4 + $0x60] sm:$0xff] %v948
        %953 = vst [vmem:[#allocation4 + $0x68] sm:$0xff] %v949
        %954 = vst [vmem:[#allocation4 + $0x70] sm:$0xff] %v950
        %955 = vst [vmem:[#allocation4 + $0x78] sm:$0xff] %v951
        %v956 = vld [vmem:[%s943] sm:$0xff]
        %v957 = vld [vmem:[%s943 + $0x8] sm:$0xff]
        %v958 = vld [vmem:[%s943 + $0x10] sm:$0xff]
        %v959 = vld [vmem:[%s943 + $0x18] sm:$0xff]
        %s960 = scalar_lea.vmem [#allocation3], 288
        %v961 = vld [vmem:[%s960] sm:$0xff]
        %v962 = vld [vmem:[%s960 + $0x8] sm:$0xff]
        %v963 = vld [vmem:[%s960 + $0x10] sm:$0xff]
        %v964 = vld [vmem:[%s960 + $0x18] sm:$0xff]
        %v965 = vmax.f32 %v956, %v961
        %v966 = vmax.f32 %v957, %v962
        %v967 = vmax.f32 %v958, %v963
        %v968 = vmax.f32 %v959, %v964
        %s969 = scalar_lea.vmem [#allocation3], 320
        %v970 = vld [vmem:[%s969] sm:$0xff]
        %v971 = vld [vmem:[%s969 + $0x8] sm:$0xff]
        %v972 = vld [vmem:[%s969 + $0x10] sm:$0xff]
        %v973 = vld [vmem:[%s969 + $0x18] sm:$0xff]
        %v974 = vmax.f32 %v965, %v970
        %v975 = vmax.f32 %v966, %v971
        %v976 = vmax.f32 %v967, %v972
        %v977 = vmax.f32 %v968, %v973
        %978 = vst [vmem:[#allocation4 + $0x80] sm:$0xff] %v974
        %979 = vst [vmem:[#allocation4 + $0x88] sm:$0xff] %v975
        %980 = vst [vmem:[#allocation4 + $0x90] sm:$0xff] %v976
        %981 = vst [vmem:[#allocation4 + $0x98] sm:$0xff] %v977
        %v982 = vld [vmem:[%s969] sm:$0xff]
        %v983 = vld [vmem:[%s969 + $0x8] sm:$0xff]
        %v984 = vld [vmem:[%s969 + $0x10] sm:$0xff]
        %v985 = vld [vmem:[%s969 + $0x18] sm:$0xff]
        %s986 = scalar_lea.vmem [#allocation3], 352
        %v987 = vld [vmem:[%s986] sm:$0xff]
        %v988 = vld [vmem:[%s986 + $0x8] sm:$0xff]
        %v989 = vld [vmem:[%s986 + $0x10] sm:$0xff]
        %v990 = vld [vmem:[%s986 + $0x18] sm:$0xff]
        %v991 = vmax.f32 %v982, %v987
        %v992 = vmax.f32 %v983, %v988
        %v993 = vmax.f32 %v984, %v989
        %v994 = vmax.f32 %v985, %v990
        %s995 = scalar_lea.vmem [#allocation3], 384
        %v996 = vld [vmem:[%s995] sm:$0xff]
        %v997 = vld [vmem:[%s995 + $0x8] sm:$0xff]
        %v998 = vld [vmem:[%s995 + $0x10] sm:$0xff]
        %v999 = vld [vmem:[%s995 + $0x18] sm:$0xff]
        %v1000 = vmax.f32 %v991, %v996
        %v1001 = vmax.f32 %v992, %v997
        %v1002 = vmax.f32 %v993, %v998
        %v1003 = vmax.f32 %v994, %v999
        %1004 = vst [vmem:[#allocation4 + $0xa0] sm:$0xff] %v1000
        %1005 = vst [vmem:[#allocation4 + $0xa8] sm:$0xff] %v1001
        %1006 = vst [vmem:[#allocation4 + $0xb0] sm:$0xff] %v1002
        %1007 = vst [vmem:[#allocation4 + $0xb8] sm:$0xff] %v1003
        %v1008 = vld [vmem:[%s995] sm:$0xff]
        %v1009 = vld [vmem:[%s995 + $0x8] sm:$0xff]
        %v1010 = vld [vmem:[%s995 + $0x10] sm:$0xff]
        %v1011 = vld [vmem:[%s995 + $0x18] sm:$0xff]
        %s1012 = scalar_lea.vmem [#allocation3], 416
        %v1013 = vld [vmem:[%s1012] sm:$0xff]
        %v1014 = vld [vmem:[%s1012 + $0x8] sm:$0xff]
        %v1015 = vld [vmem:[%s1012 + $0x10] sm:$0xff]
        %v1016 = vld [vmem:[%s1012 + $0x18] sm:$0xff]
        %v1017 = vmax.f32 %v1008, %v1013
        %v1018 = vmax.f32 %v1009, %v1014
        %v1019 = vmax.f32 %v1010, %v1015
        %v1020 = vmax.f32 %v1011, %v1016
        %s1021 = scalar_lea.vmem [#allocation3], 448
        %v1022 = vld [vmem:[%s1021] sm:$0xff]
        %v1023 = vld [vmem:[%s1021 + $0x8] sm:$0xff]
        %v1024 = vld [vmem:[%s1021 + $0x10] sm:$0xff]
        %v1025 = vld [vmem:[%s1021 + $0x18] sm:$0xff]
        %v1026 = vmax.f32 %v1017, %v1022
        %v1027 = vmax.f32 %v1018, %v1023
        %v1028 = vmax.f32 %v1019, %v1024
        %v1029 = vmax.f32 %v1020, %v1025
        %1030 = vst [vmem:[#allocation4 + $0xc0] sm:$0xff] %v1026
        %1031 = vst [vmem:[#allocation4 + $0xc8] sm:$0xff] %v1027
        %1032 = vst [vmem:[#allocation4 + $0xd0] sm:$0xff] %v1028
        %1033 = vst [vmem:[#allocation4 + $0xd8] sm:$0xff] %v1029
        %v1034 = vld [vmem:[%s1021] sm:$0xff]
        %v1035 = vld [vmem:[%s1021 + $0x8] sm:$0xff]
        %v1036 = vld [vmem:[%s1021 + $0x10] sm:$0xff]
        %v1037 = vld [vmem:[%s1021 + $0x18] sm:$0xff]
        %s1038 = scalar_lea.vmem [#allocation3], 480
        %v1039 = vld [vmem:[%s1038] sm:$0xff]
        %v1040 = vld [vmem:[%s1038 + $0x8] sm:$0xff]
        %v1041 = vld [vmem:[%s1038 + $0x10] sm:$0xff]
        %v1042 = vld [vmem:[%s1038 + $0x18] sm:$0xff]
        %v1043 = vmax.f32 %v1034, %v1039
        %v1044 = vmax.f32 %v1035, %v1040
        %v1045 = vmax.f32 %v1036, %v1041
        %v1046 = vmax.f32 %v1037, %v1042
        %s1047 = scalar_lea.vmem [#allocation3], 512
        %v1048 = vld [vmem:[%s1047] sm:$0xff]
        %v1049 = vld [vmem:[%s1047 + $0x8] sm:$0xff]
        %v1050 = vld [vmem:[%s1047 + $0x10] sm:$0xff]
        %v1051 = vld [vmem:[%s1047 + $0x18] sm:$0xff]
        %v1052 = vmax.f32 %v1043, %v1048
        %v1053 = vmax.f32 %v1044, %v1049
        %v1054 = vmax.f32 %v1045, %v1050
        %v1055 = vmax.f32 %v1046, %v1051
        %1056 = vst [vmem:[#allocation4 + $0xe0] sm:$0xff] %v1052
        %1057 = vst [vmem:[#allocation4 + $0xe8] sm:$0xff] %v1053
        %1058 = vst [vmem:[#allocation4 + $0xf0] sm:$0xff] %v1054
        %1059 = vst [vmem:[#allocation4 + $0xf8] sm:$0xff] %v1055
        %v1060 = vld [vmem:[%s1047] sm:$0xff]
        %v1061 = vld [vmem:[%s1047 + $0x8] sm:$0xff]
        %v1062 = vld [vmem:[%s1047 + $0x10] sm:$0xff]
        %v1063 = vld [vmem:[%s1047 + $0x18] sm:$0xff]
        %s1064 = scalar_lea.vmem [#allocation3], 544
        %v1065 = vld [vmem:[%s1064] sm:$0xff]
        %v1066 = vld [vmem:[%s1064 + $0x8] sm:$0xff]
        %v1067 = vld [vmem:[%s1064 + $0x10] sm:$0xff]
        %v1068 = vld [vmem:[%s1064 + $0x18] sm:$0xff]
        %v1069 = vmax.f32 %v1060, %v1065
        %v1070 = vmax.f32 %v1061, %v1066
        %v1071 = vmax.f32 %v1062, %v1067
        %v1072 = vmax.f32 %v1063, %v1068
        %s1073 = scalar_lea.vmem [#allocation3], 576
        %v1074 = vld [vmem:[%s1073] sm:$0xff]
        %v1075 = vld [vmem:[%s1073 + $0x8] sm:$0xff]
        %v1076 = vld [vmem:[%s1073 + $0x10] sm:$0xff]
        %v1077 = vld [vmem:[%s1073 + $0x18] sm:$0xff]
        %v1078 = vmax.f32 %v1069, %v1074
        %v1079 = vmax.f32 %v1070, %v1075
        %v1080 = vmax.f32 %v1071, %v1076
        %v1081 = vmax.f32 %v1072, %v1077
        %1082 = vst [vmem:[#allocation4 + $0x100] sm:$0xff] %v1078
        %1083 = vst [vmem:[#allocation4 + $0x108] sm:$0xff] %v1079
        %1084 = vst [vmem:[#allocation4 + $0x110] sm:$0xff] %v1080
        %1085 = vst [vmem:[#allocation4 + $0x118] sm:$0xff] %v1081
        %v1086 = vld [vmem:[%s1073] sm:$0xff]
        %v1087 = vld [vmem:[%s1073 + $0x8] sm:$0xff]
        %v1088 = vld [vmem:[%s1073 + $0x10] sm:$0xff]
        %v1089 = vld [vmem:[%s1073 + $0x18] sm:$0xff]
        %s1090 = scalar_lea.vmem [#allocation3], 608
        %v1091 = vld [vmem:[%s1090] sm:$0xff]
        %v1092 = vld [vmem:[%s1090 + $0x8] sm:$0xff]
        %v1093 = vld [vmem:[%s1090 + $0x10] sm:$0xff]
        %v1094 = vld [vmem:[%s1090 + $0x18] sm:$0xff]
        %v1095 = vmax.f32 %v1086, %v1091
        %v1096 = vmax.f32 %v1087, %v1092
        %v1097 = vmax.f32 %v1088, %v1093
        %v1098 = vmax.f32 %v1089, %v1094
        %s1099 = scalar_lea.vmem [#allocation3], 640
        %v1100 = vld [vmem:[%s1099] sm:$0xff]
        %v1101 = vld [vmem:[%s1099 + $0x8] sm:$0xff]
        %v1102 = vld [vmem:[%s1099 + $0x10] sm:$0xff]
        %v1103 = vld [vmem:[%s1099 + $0x18] sm:$0xff]
        %v1104 = vmax.f32 %v1095, %v1100
        %v1105 = vmax.f32 %v1096, %v1101
        %v1106 = vmax.f32 %v1097, %v1102
        %v1107 = vmax.f32 %v1098, %v1103
        %1108 = vst [vmem:[#allocation4 + $0x120] sm:$0xff] %v1104
        %1109 = vst [vmem:[#allocation4 + $0x128] sm:$0xff] %v1105
        %1110 = vst [vmem:[#allocation4 + $0x130] sm:$0xff] %v1106
        %1111 = vst [vmem:[#allocation4 + $0x138] sm:$0xff] %v1107
        %v1112 = vld [vmem:[%s1099] sm:$0xff]
        %v1113 = vld [vmem:[%s1099 + $0x8] sm:$0xff]
        %v1114 = vld [vmem:[%s1099 + $0x10] sm:$0xff]
        %v1115 = vld [vmem:[%s1099 + $0x18] sm:$0xff]
        %s1116 = scalar_lea.vmem [#allocation3], 672
        %v1117 = vld [vmem:[%s1116] sm:$0xff]
        %v1118 = vld [vmem:[%s1116 + $0x8] sm:$0xff]
        %v1119 = vld [vmem:[%s1116 + $0x10] sm:$0xff]
        %v1120 = vld [vmem:[%s1116 + $0x18] sm:$0xff]
        %v1121 = vmax.f32 %v1112, %v1117
        %v1122 = vmax.f32 %v1113, %v1118
        %v1123 = vmax.f32 %v1114, %v1119
        %v1124 = vmax.f32 %v1115, %v1120
        %s1125 = scalar_lea.vmem [#allocation3], 704
        %v1126 = vld [vmem:[%s1125] sm:$0xff]
        %v1127 = vld [vmem:[%s1125 + $0x8] sm:$0xff]
        %v1128 = vld [vmem:[%s1125 + $0x10] sm:$0xff]
        %v1129 = vld [vmem:[%s1125 + $0x18] sm:$0xff]
        %v1130 = vmax.f32 %v1121, %v1126
        %v1131 = vmax.f32 %v1122, %v1127
        %v1132 = vmax.f32 %v1123, %v1128
        %v1133 = vmax.f32 %v1124, %v1129
        %1134 = vst [vmem:[#allocation4 + $0x140] sm:$0xff] %v1130
        %1135 = vst [vmem:[#allocation4 + $0x148] sm:$0xff] %v1131
        %1136 = vst [vmem:[#allocation4 + $0x150] sm:$0xff] %v1132
        %1137 = vst [vmem:[#allocation4 + $0x158] sm:$0xff] %v1133
        %v1138 = vld [vmem:[%s1125] sm:$0xff]
        %v1139 = vld [vmem:[%s1125 + $0x8] sm:$0xff]
        %v1140 = vld [vmem:[%s1125 + $0x10] sm:$0xff]
        %v1141 = vld [vmem:[%s1125 + $0x18] sm:$0xff]
        %s1142 = scalar_lea.vmem [#allocation3], 736
        %v1143 = vld [vmem:[%s1142] sm:$0xff]
        %v1144 = vld [vmem:[%s1142 + $0x8] sm:$0xff]
        %v1145 = vld [vmem:[%s1142 + $0x10] sm:$0xff]
        %v1146 = vld [vmem:[%s1142 + $0x18] sm:$0xff]
        %v1147 = vmax.f32 %v1138, %v1143
        %v1148 = vmax.f32 %v1139, %v1144
        %v1149 = vmax.f32 %v1140, %v1145
        %v1150 = vmax.f32 %v1141, %v1146
        %s1151 = scalar_lea.vmem [#allocation3], 768
        %v1152 = vld [vmem:[%s1151] sm:$0xff]
        %v1153 = vld [vmem:[%s1151 + $0x8] sm:$0xff]
        %v1154 = vld [vmem:[%s1151 + $0x10] sm:$0xff]
        %v1155 = vld [vmem:[%s1151 + $0x18] sm:$0xff]
        %v1156 = vmax.f32 %v1147, %v1152
        %v1157 = vmax.f32 %v1148, %v1153
        %v1158 = vmax.f32 %v1149, %v1154
        %v1159 = vmax.f32 %v1150, %v1155
        %1160 = vst [vmem:[#allocation4 + $0x160] sm:$0xff] %v1156
        %1161 = vst [vmem:[#allocation4 + $0x168] sm:$0xff] %v1157
        %1162 = vst [vmem:[#allocation4 + $0x170] sm:$0xff] %v1158
        %1163 = vst [vmem:[#allocation4 + $0x178] sm:$0xff] %v1159
        %v1164 = vld [vmem:[%s1151] sm:$0xff]
        %v1165 = vld [vmem:[%s1151 + $0x8] sm:$0xff]
        %v1166 = vld [vmem:[%s1151 + $0x10] sm:$0xff]
        %v1167 = vld [vmem:[%s1151 + $0x18] sm:$0xff]
        %s1168 = scalar_lea.vmem [#allocation3], 800
        %v1169 = vld [vmem:[%s1168] sm:$0xff]
        %v1170 = vld [vmem:[%s1168 + $0x8] sm:$0xff]
        %v1171 = vld [vmem:[%s1168 + $0x10] sm:$0xff]
        %v1172 = vld [vmem:[%s1168 + $0x18] sm:$0xff]
        %v1173 = vmax.f32 %v1164, %v1169
        %v1174 = vmax.f32 %v1165, %v1170
        %v1175 = vmax.f32 %v1166, %v1171
        %v1176 = vmax.f32 %v1167, %v1172
        %s1177 = scalar_lea.vmem [#allocation3], 832
        %v1178 = vld [vmem:[%s1177] sm:$0xff]
        %v1179 = vld [vmem:[%s1177 + $0x8] sm:$0xff]
        %v1180 = vld [vmem:[%s1177 + $0x10] sm:$0xff]
        %v1181 = vld [vmem:[%s1177 + $0x18] sm:$0xff]
        %v1182 = vmax.f32 %v1173, %v1178
        %v1183 = vmax.f32 %v1174, %v1179
        %v1184 = vmax.f32 %v1175, %v1180
        %v1185 = vmax.f32 %v1176, %v1181
        %1186 = vst [vmem:[#allocation4 + $0x180] sm:$0xff] %v1182
        %1187 = vst [vmem:[#allocation4 + $0x188] sm:$0xff] %v1183
        %1188 = vst [vmem:[#allocation4 + $0x190] sm:$0xff] %v1184
        %1189 = vst [vmem:[#allocation4 + $0x198] sm:$0xff] %v1185
        %v1190 = vld [vmem:[%s1177] sm:$0xff]
        %v1191 = vld [vmem:[%s1177 + $0x8] sm:$0xff]
        %v1192 = vld [vmem:[%s1177 + $0x10] sm:$0xff]
        %v1193 = vld [vmem:[%s1177 + $0x18] sm:$0xff]
        %s1194 = scalar_lea.vmem [#allocation3], 864
        %v1195 = vld [vmem:[%s1194] sm:$0xff]
        %v1196 = vld [vmem:[%s1194 + $0x8] sm:$0xff]
        %v1197 = vld [vmem:[%s1194 + $0x10] sm:$0xff]
        %v1198 = vld [vmem:[%s1194 + $0x18] sm:$0xff]
        %v1199 = vmax.f32 %v1190, %v1195
        %v1200 = vmax.f32 %v1191, %v1196
        %v1201 = vmax.f32 %v1192, %v1197
        %v1202 = vmax.f32 %v1193, %v1198
        %s1203 = scalar_lea.vmem [#allocation3], 896
        %v1204 = vld [vmem:[%s1203] sm:$0xff]
        %v1205 = vld [vmem:[%s1203 + $0x8] sm:$0xff]
        %v1206 = vld [vmem:[%s1203 + $0x10] sm:$0xff]
        %v1207 = vld [vmem:[%s1203 + $0x18] sm:$0xff]
        %v1208 = vmax.f32 %v1199, %v1204
        %v1209 = vmax.f32 %v1200, %v1205
        %v1210 = vmax.f32 %v1201, %v1206
        %v1211 = vmax.f32 %v1202, %v1207
        %1212 = vst [vmem:[#allocation4 + $0x1a0] sm:$0xff] %v1208
        %1213 = vst [vmem:[#allocation4 + $0x1a8] sm:$0xff] %v1209
        %1214 = vst [vmem:[#allocation4 + $0x1b0] sm:$0xff] %v1210
        %1215 = vst [vmem:[#allocation4 + $0x1b8] sm:$0xff] %v1211
        %v1216 = vld [vmem:[%s1203] sm:$0xff]
        %v1217 = vld [vmem:[%s1203 + $0x8] sm:$0xff]
        %v1218 = vld [vmem:[%s1203 + $0x10] sm:$0xff]
        %v1219 = vld [vmem:[%s1203 + $0x18] sm:$0xff]
        %s1220 = scalar_lea.vmem [#allocation3], 928
        %v1221 = vld [vmem:[%s1220] sm:$0xff]
        %v1222 = vld [vmem:[%s1220 + $0x8] sm:$0xff]
        %v1223 = vld [vmem:[%s1220 + $0x10] sm:$0xff]
        %v1224 = vld [vmem:[%s1220 + $0x18] sm:$0xff]
        %v1225 = vmax.f32 %v1216, %v1221
        %v1226 = vmax.f32 %v1217, %v1222
        %v1227 = vmax.f32 %v1218, %v1223
        %v1228 = vmax.f32 %v1219, %v1224
        %s1229 = scalar_lea.vmem [#allocation3], 960
        %v1230 = vld [vmem:[%s1229] sm:$0xff]
        %v1231 = vld [vmem:[%s1229 + $0x8] sm:$0xff]
        %v1232 = vld [vmem:[%s1229 + $0x10] sm:$0xff]
        %v1233 = vld [vmem:[%s1229 + $0x18] sm:$0xff]
        %v1234 = vmax.f32 %v1225, %v1230
        %v1235 = vmax.f32 %v1226, %v1231
        %v1236 = vmax.f32 %v1227, %v1232
        %v1237 = vmax.f32 %v1228, %v1233
        %1238 = vst [vmem:[#allocation4 + $0x1c0] sm:$0xff] %v1234
        %1239 = vst [vmem:[#allocation4 + $0x1c8] sm:$0xff] %v1235
        %1240 = vst [vmem:[#allocation4 + $0x1d0] sm:$0xff] %v1236
        %1241 = vst [vmem:[#allocation4 + $0x1d8] sm:$0xff] %v1237
        %v1242 = vld [vmem:[%s1229] sm:$0xff]
        %v1243 = vld [vmem:[%s1229 + $0x8] sm:$0xff]
        %v1244 = vld [vmem:[%s1229 + $0x10] sm:$0xff]
        %v1245 = vld [vmem:[%s1229 + $0x18] sm:$0xff]
        %s1246 = scalar_lea.vmem [#allocation3], 992
        %v1247 = vld [vmem:[%s1246] sm:$0xff]
        %v1248 = vld [vmem:[%s1246 + $0x8] sm:$0xff]
        %v1249 = vld [vmem:[%s1246 + $0x10] sm:$0xff]
        %v1250 = vld [vmem:[%s1246 + $0x18] sm:$0xff]
        %v1251 = vmax.f32 %v1242, %v1247
        %v1252 = vmax.f32 %v1243, %v1248
        %v1253 = vmax.f32 %v1244, %v1249
        %v1254 = vmax.f32 %v1245, %v1250
        %s1255 = scalar_lea.vmem [#allocation3], 1024
        %v1256 = vld [vmem:[%s1255] sm:$0xff]
        %v1257 = vld [vmem:[%s1255 + $0x8] sm:$0xff]
        %v1258 = vld [vmem:[%s1255 + $0x10] sm:$0xff]
        %v1259 = vld [vmem:[%s1255 + $0x18] sm:$0xff]
        %v1260 = vmax.f32 %v1251, %v1256
        %v1261 = vmax.f32 %v1252, %v1257
        %v1262 = vmax.f32 %v1253, %v1258
        %v1263 = vmax.f32 %v1254, %v1259
        %1264 = vst [vmem:[#allocation4 + $0x1e0] sm:$0xff] %v1260
        %1265 = vst [vmem:[#allocation4 + $0x1e8] sm:$0xff] %v1261
        %1266 = vst [vmem:[#allocation4 + $0x1f0] sm:$0xff] %v1262
        %1267 = vst [vmem:[#allocation4 + $0x1f8] sm:$0xff] %v1263
        %v1268 = vld [vmem:[%s1255] sm:$0xff]
        %v1269 = vld [vmem:[%s1255 + $0x8] sm:$0xff]
        %v1270 = vld [vmem:[%s1255 + $0x10] sm:$0xff]
        %v1271 = vld [vmem:[%s1255 + $0x18] sm:$0xff]
        %s1272 = scalar_lea.vmem [#allocation3], 1056
        %v1273 = vld [vmem:[%s1272] sm:$0xff]
        %v1274 = vld [vmem:[%s1272 + $0x8] sm:$0xff]
        %v1275 = vld [vmem:[%s1272 + $0x10] sm:$0xff]
        %v1276 = vld [vmem:[%s1272 + $0x18] sm:$0xff]
        %v1277 = vmax.f32 %v1268, %v1273
        %v1278 = vmax.f32 %v1269, %v1274
        %v1279 = vmax.f32 %v1270, %v1275
        %v1280 = vmax.f32 %v1271, %v1276
        %s1281 = scalar_lea.vmem [#allocation3], 1088
        %v1282 = vld [vmem:[%s1281] sm:$0xff]
        %v1283 = vld [vmem:[%s1281 + $0x8] sm:$0xff]
        %v1284 = vld [vmem:[%s1281 + $0x10] sm:$0xff]
        %v1285 = vld [vmem:[%s1281 + $0x18] sm:$0xff]
        %v1286 = vmax.f32 %v1277, %v1282
        %v1287 = vmax.f32 %v1278, %v1283
        %v1288 = vmax.f32 %v1279, %v1284
        %v1289 = vmax.f32 %v1280, %v1285
        %1290 = vst [vmem:[#allocation4 + $0x200] sm:$0xff] %v1286
        %1291 = vst [vmem:[#allocation4 + $0x208] sm:$0xff] %v1287
        %1292 = vst [vmem:[#allocation4 + $0x210] sm:$0xff] %v1288
        %1293 = vst [vmem:[#allocation4 + $0x218] sm:$0xff] %v1289
        %v1294 = vld [vmem:[%s1281] sm:$0xff]
        %v1295 = vld [vmem:[%s1281 + $0x8] sm:$0xff]
        %v1296 = vld [vmem:[%s1281 + $0x10] sm:$0xff]
        %v1297 = vld [vmem:[%s1281 + $0x18] sm:$0xff]
        %s1298 = scalar_lea.vmem [#allocation3], 1120
        %v1299 = vld [vmem:[%s1298] sm:$0xff]
        %v1300 = vld [vmem:[%s1298 + $0x8] sm:$0xff]
        %v1301 = vld [vmem:[%s1298 + $0x10] sm:$0xff]
        %v1302 = vld [vmem:[%s1298 + $0x18] sm:$0xff]
        %v1303 = vmax.f32 %v1294, %v1299
        %v1304 = vmax.f32 %v1295, %v1300
        %v1305 = vmax.f32 %v1296, %v1301
        %v1306 = vmax.f32 %v1297, %v1302
        %s1307 = scalar_lea.vmem [#allocation3], 1152
        %v1308 = vld [vmem:[%s1307] sm:$0xff]
        %v1309 = vld [vmem:[%s1307 + $0x8] sm:$0xff]
        %v1310 = vld [vmem:[%s1307 + $0x10] sm:$0xff]
        %v1311 = vld [vmem:[%s1307 + $0x18] sm:$0xff]
        %v1312 = vmax.f32 %v1303, %v1308
        %v1313 = vmax.f32 %v1304, %v1309
        %v1314 = vmax.f32 %v1305, %v1310
        %v1315 = vmax.f32 %v1306, %v1311
        %1316 = vst [vmem:[#allocation4 + $0x220] sm:$0xff] %v1312
        %1317 = vst [vmem:[#allocation4 + $0x228] sm:$0xff] %v1313
        %1318 = vst [vmem:[#allocation4 + $0x230] sm:$0xff] %v1314
        %1319 = vst [vmem:[#allocation4 + $0x238] sm:$0xff] %v1315
        %v1320 = vld [vmem:[%s1307] sm:$0xff]
        %v1321 = vld [vmem:[%s1307 + $0x8] sm:$0xff]
        %v1322 = vld [vmem:[%s1307 + $0x10] sm:$0xff]
        %v1323 = vld [vmem:[%s1307 + $0x18] sm:$0xff]
        %s1324 = scalar_lea.vmem [#allocation3], 1184
        %v1325 = vld [vmem:[%s1324] sm:$0xff]
        %v1326 = vld [vmem:[%s1324 + $0x8] sm:$0xff]
        %v1327 = vld [vmem:[%s1324 + $0x10] sm:$0xff]
        %v1328 = vld [vmem:[%s1324 + $0x18] sm:$0xff]
        %v1329 = vmax.f32 %v1320, %v1325
        %v1330 = vmax.f32 %v1321, %v1326
        %v1331 = vmax.f32 %v1322, %v1327
        %v1332 = vmax.f32 %v1323, %v1328
        %s1333 = scalar_lea.vmem [#allocation3], 1216
        %v1334 = vld [vmem:[%s1333] sm:$0xff]
        %v1335 = vld [vmem:[%s1333 + $0x8] sm:$0xff]
        %v1336 = vld [vmem:[%s1333 + $0x10] sm:$0xff]
        %v1337 = vld [vmem:[%s1333 + $0x18] sm:$0xff]
        %v1338 = vmax.f32 %v1329, %v1334
        %v1339 = vmax.f32 %v1330, %v1335
        %v1340 = vmax.f32 %v1331, %v1336
        %v1341 = vmax.f32 %v1332, %v1337
        %1342 = vst [vmem:[#allocation4 + $0x240] sm:$0xff] %v1338
        %1343 = vst [vmem:[#allocation4 + $0x248] sm:$0xff] %v1339
        %1344 = vst [vmem:[#allocation4 + $0x250] sm:$0xff] %v1340
        %1345 = vst [vmem:[#allocation4 + $0x258] sm:$0xff] %v1341
        %v1346 = vld [vmem:[%s1333] sm:$0xff]
        %v1347 = vld [vmem:[%s1333 + $0x8] sm:$0xff]
        %v1348 = vld [vmem:[%s1333 + $0x10] sm:$0xff]
        %v1349 = vld [vmem:[%s1333 + $0x18] sm:$0xff]
        %s1350 = scalar_lea.vmem [#allocation3], 1248
        %v1351 = vld [vmem:[%s1350] sm:$0xff]
        %v1352 = vld [vmem:[%s1350 + $0x8] sm:$0xff]
        %v1353 = vld [vmem:[%s1350 + $0x10] sm:$0xff]
        %v1354 = vld [vmem:[%s1350 + $0x18] sm:$0xff]
        %v1355 = vmax.f32 %v1346, %v1351
        %v1356 = vmax.f32 %v1347, %v1352
        %v1357 = vmax.f32 %v1348, %v1353
        %v1358 = vmax.f32 %v1349, %v1354
        %s1359 = scalar_lea.vmem [#allocation3], 1280
        %v1360 = vld [vmem:[%s1359] sm:$0xff]
        %v1361 = vld [vmem:[%s1359 + $0x8] sm:$0xff]
        %v1362 = vld [vmem:[%s1359 + $0x10] sm:$0xff]
        %v1363 = vld [vmem:[%s1359 + $0x18] sm:$0xff]
        %v1364 = vmax.f32 %v1355, %v1360
        %v1365 = vmax.f32 %v1356, %v1361
        %v1366 = vmax.f32 %v1357, %v1362
        %v1367 = vmax.f32 %v1358, %v1363
        %1368 = vst [vmem:[#allocation4 + $0x260] sm:$0xff] %v1364
        %1369 = vst [vmem:[#allocation4 + $0x268] sm:$0xff] %v1365
        %1370 = vst [vmem:[#allocation4 + $0x270] sm:$0xff] %v1366
        %1371 = vst [vmem:[#allocation4 + $0x278] sm:$0xff] %v1367
        %v1372 = vld [vmem:[%s1359] sm:$0xff]
        %v1373 = vld [vmem:[%s1359 + $0x8] sm:$0xff]
        %v1374 = vld [vmem:[%s1359 + $0x10] sm:$0xff]
        %v1375 = vld [vmem:[%s1359 + $0x18] sm:$0xff]
        %s1376 = scalar_lea.vmem [#allocation3], 1312
        %v1377 = vld [vmem:[%s1376] sm:$0xff]
        %v1378 = vld [vmem:[%s1376 + $0x8] sm:$0xff]
        %v1379 = vld [vmem:[%s1376 + $0x10] sm:$0xff]
        %v1380 = vld [vmem:[%s1376 + $0x18] sm:$0xff]
        %v1381 = vmax.f32 %v1372, %v1377
        %v1382 = vmax.f32 %v1373, %v1378
        %v1383 = vmax.f32 %v1374, %v1379
        %v1384 = vmax.f32 %v1375, %v1380
        %s1385 = scalar_lea.vmem [#allocation3], 1344
        %v1386 = vld [vmem:[%s1385] sm:$0xff]
        %v1387 = vld [vmem:[%s1385 + $0x8] sm:$0xff]
        %v1388 = vld [vmem:[%s1385 + $0x10] sm:$0xff]
        %v1389 = vld [vmem:[%s1385 + $0x18] sm:$0xff]
        %v1390 = vmax.f32 %v1381, %v1386
        %v1391 = vmax.f32 %v1382, %v1387
        %v1392 = vmax.f32 %v1383, %v1388
        %v1393 = vmax.f32 %v1384, %v1389
        %1394 = vst [vmem:[#allocation4 + $0x280] sm:$0xff] %v1390
        %1395 = vst [vmem:[#allocation4 + $0x288] sm:$0xff] %v1391
        %1396 = vst [vmem:[#allocation4 + $0x290] sm:$0xff] %v1392
        %1397 = vst [vmem:[#allocation4 + $0x298] sm:$0xff] %v1393
        %v1398 = vld [vmem:[%s1385] sm:$0xff]
        %v1399 = vld [vmem:[%s1385 + $0x8] sm:$0xff]
        %v1400 = vld [vmem:[%s1385 + $0x10] sm:$0xff]
        %v1401 = vld [vmem:[%s1385 + $0x18] sm:$0xff]
        %s1402 = scalar_lea.vmem [#allocation3], 1376
        %v1403 = vld [vmem:[%s1402] sm:$0xff]
        %v1404 = vld [vmem:[%s1402 + $0x8] sm:$0xff]
        %v1405 = vld [vmem:[%s1402 + $0x10] sm:$0xff]
        %v1406 = vld [vmem:[%s1402 + $0x18] sm:$0xff]
        %v1407 = vmax.f32 %v1398, %v1403
        %v1408 = vmax.f32 %v1399, %v1404
        %v1409 = vmax.f32 %v1400, %v1405
        %v1410 = vmax.f32 %v1401, %v1406
        %s1411 = scalar_lea.vmem [#allocation3], 1408
        %v1412 = vld [vmem:[%s1411] sm:$0xff]
        %v1413 = vld [vmem:[%s1411 + $0x8] sm:$0xff]
        %v1414 = vld [vmem:[%s1411 + $0x10] sm:$0xff]
        %v1415 = vld [vmem:[%s1411 + $0x18] sm:$0xff]
        %v1416 = vmax.f32 %v1407, %v1412
        %v1417 = vmax.f32 %v1408, %v1413
        %v1418 = vmax.f32 %v1409, %v1414
        %v1419 = vmax.f32 %v1410, %v1415
        %1420 = vst [vmem:[#allocation4 + $0x2a0] sm:$0xff] %v1416
        %1421 = vst [vmem:[#allocation4 + $0x2a8] sm:$0xff] %v1417
        %1422 = vst [vmem:[#allocation4 + $0x2b0] sm:$0xff] %v1418
        %1423 = vst [vmem:[#allocation4 + $0x2b8] sm:$0xff] %v1419
        %v1424 = vld [vmem:[%s1411] sm:$0xff]
        %v1425 = vld [vmem:[%s1411 + $0x8] sm:$0xff]
        %v1426 = vld [vmem:[%s1411 + $0x10] sm:$0xff]
        %v1427 = vld [vmem:[%s1411 + $0x18] sm:$0xff]
        %s1428 = scalar_lea.vmem [#allocation3], 1440
        %v1429 = vld [vmem:[%s1428] sm:$0xff]
        %v1430 = vld [vmem:[%s1428 + $0x8] sm:$0xff]
        %v1431 = vld [vmem:[%s1428 + $0x10] sm:$0xff]
        %v1432 = vld [vmem:[%s1428 + $0x18] sm:$0xff]
        %v1433 = vmax.f32 %v1424, %v1429
        %v1434 = vmax.f32 %v1425, %v1430
        %v1435 = vmax.f32 %v1426, %v1431
        %v1436 = vmax.f32 %v1427, %v1432
        %s1437 = scalar_lea.vmem [#allocation3], 1472
        %v1438 = vld [vmem:[%s1437] sm:$0xff]
        %v1439 = vld [vmem:[%s1437 + $0x8] sm:$0xff]
        %v1440 = vld [vmem:[%s1437 + $0x10] sm:$0xff]
        %v1441 = vld [vmem:[%s1437 + $0x18] sm:$0xff]
        %v1442 = vmax.f32 %v1433, %v1438
        %v1443 = vmax.f32 %v1434, %v1439
        %v1444 = vmax.f32 %v1435, %v1440
        %v1445 = vmax.f32 %v1436, %v1441
        %1446 = vst [vmem:[#allocation4 + $0x2c0] sm:$0xff] %v1442
        %1447 = vst [vmem:[#allocation4 + $0x2c8] sm:$0xff] %v1443
        %1448 = vst [vmem:[#allocation4 + $0x2d0] sm:$0xff] %v1444
        %1449 = vst [vmem:[#allocation4 + $0x2d8] sm:$0xff] %v1445
        %v1450 = vld [vmem:[%s1437] sm:$0xff]
        %v1451 = vld [vmem:[%s1437 + $0x8] sm:$0xff]
        %v1452 = vld [vmem:[%s1437 + $0x10] sm:$0xff]
        %v1453 = vld [vmem:[%s1437 + $0x18] sm:$0xff]
        %s1454 = scalar_lea.vmem [#allocation3], 1504
        %v1455 = vld [vmem:[%s1454] sm:$0xff]
        %v1456 = vld [vmem:[%s1454 + $0x8] sm:$0xff]
        %v1457 = vld [vmem:[%s1454 + $0x10] sm:$0xff]
        %v1458 = vld [vmem:[%s1454 + $0x18] sm:$0xff]
        %v1459 = vmax.f32 %v1450, %v1455
        %v1460 = vmax.f32 %v1451, %v1456
        %v1461 = vmax.f32 %v1452, %v1457
        %v1462 = vmax.f32 %v1453, %v1458
        %s1463 = scalar_lea.vmem [#allocation3], 1536
        %v1464 = vld [vmem:[%s1463] sm:$0xff]
        %v1465 = vld [vmem:[%s1463 + $0x8] sm:$0xff]
        %v1466 = vld [vmem:[%s1463 + $0x10] sm:$0xff]
        %v1467 = vld [vmem:[%s1463 + $0x18] sm:$0xff]
        %v1468 = vmax.f32 %v1459, %v1464
        %v1469 = vmax.f32 %v1460, %v1465
        %v1470 = vmax.f32 %v1461, %v1466
        %v1471 = vmax.f32 %v1462, %v1467
        %1472 = vst [vmem:[#allocation4 + $0x2e0] sm:$0xff] %v1468
        %1473 = vst [vmem:[#allocation4 + $0x2e8] sm:$0xff] %v1469
        %1474 = vst [vmem:[#allocation4 + $0x2f0] sm:$0xff] %v1470
        %1475 = vst [vmem:[#allocation4 + $0x2f8] sm:$0xff] %v1471
        %v1476 = vld [vmem:[%s1463] sm:$0xff]
        %v1477 = vld [vmem:[%s1463 + $0x8] sm:$0xff]
        %v1478 = vld [vmem:[%s1463 + $0x10] sm:$0xff]
        %v1479 = vld [vmem:[%s1463 + $0x18] sm:$0xff]
        %s1480 = scalar_lea.vmem [#allocation3], 1568
        %v1481 = vld [vmem:[%s1480] sm:$0xff]
        %v1482 = vld [vmem:[%s1480 + $0x8] sm:$0xff]
        %v1483 = vld [vmem:[%s1480 + $0x10] sm:$0xff]
        %v1484 = vld [vmem:[%s1480 + $0x18] sm:$0xff]
        %v1485 = vmax.f32 %v1476, %v1481
        %v1486 = vmax.f32 %v1477, %v1482
        %v1487 = vmax.f32 %v1478, %v1483
        %v1488 = vmax.f32 %v1479, %v1484
        %s1489 = scalar_lea.vmem [#allocation3], 1600
        %v1490 = vld [vmem:[%s1489] sm:$0xff]
        %v1491 = vld [vmem:[%s1489 + $0x8] sm:$0xff]
        %v1492 = vld [vmem:[%s1489 + $0x10] sm:$0xff]
        %v1493 = vld [vmem:[%s1489 + $0x18] sm:$0xff]
        %v1494 = vmax.f32 %v1485, %v1490
        %v1495 = vmax.f32 %v1486, %v1491
        %v1496 = vmax.f32 %v1487, %v1492
        %v1497 = vmax.f32 %v1488, %v1493
        %1498 = vst [vmem:[#allocation4 + $0x300] sm:$0xff] %v1494
        %1499 = vst [vmem:[#allocation4 + $0x308] sm:$0xff] %v1495
        %1500 = vst [vmem:[#allocation4 + $0x310] sm:$0xff] %v1496
        %1501 = vst [vmem:[#allocation4 + $0x318] sm:$0xff] %v1497
        %v1502 = vld [vmem:[%s1489] sm:$0xff]
        %v1503 = vld [vmem:[%s1489 + $0x8] sm:$0xff]
        %v1504 = vld [vmem:[%s1489 + $0x10] sm:$0xff]
        %v1505 = vld [vmem:[%s1489 + $0x18] sm:$0xff]
        %s1506 = scalar_lea.vmem [#allocation3], 1632
        %v1507 = vld [vmem:[%s1506] sm:$0xff]
        %v1508 = vld [vmem:[%s1506 + $0x8] sm:$0xff]
        %v1509 = vld [vmem:[%s1506 + $0x10] sm:$0xff]
        %v1510 = vld [vmem:[%s1506 + $0x18] sm:$0xff]
        %v1511 = vmax.f32 %v1502, %v1507
        %v1512 = vmax.f32 %v1503, %v1508
        %v1513 = vmax.f32 %v1504, %v1509
        %v1514 = vmax.f32 %v1505, %v1510
        %s1515 = scalar_lea.vmem [#allocation3], 1664
        %v1516 = vld [vmem:[%s1515] sm:$0xff]
        %v1517 = vld [vmem:[%s1515 + $0x8] sm:$0xff]
        %v1518 = vld [vmem:[%s1515 + $0x10] sm:$0xff]
        %v1519 = vld [vmem:[%s1515 + $0x18] sm:$0xff]
        %v1520 = vmax.f32 %v1511, %v1516
        %v1521 = vmax.f32 %v1512, %v1517
        %v1522 = vmax.f32 %v1513, %v1518
        %v1523 = vmax.f32 %v1514, %v1519
        %1524 = vst [vmem:[#allocation4 + $0x320] sm:$0xff] %v1520
        %1525 = vst [vmem:[#allocation4 + $0x328] sm:$0xff] %v1521
        %1526 = vst [vmem:[#allocation4 + $0x330] sm:$0xff] %v1522
        %1527 = vst [vmem:[#allocation4 + $0x338] sm:$0xff] %v1523
        %v1528 = vld [vmem:[%s1515] sm:$0xff]
        %v1529 = vld [vmem:[%s1515 + $0x8] sm:$0xff]
        %v1530 = vld [vmem:[%s1515 + $0x10] sm:$0xff]
        %v1531 = vld [vmem:[%s1515 + $0x18] sm:$0xff]
        %s1532 = scalar_lea.vmem [#allocation3], 1696
        %v1533 = vld [vmem:[%s1532] sm:$0xff]
        %v1534 = vld [vmem:[%s1532 + $0x8] sm:$0xff]
        %v1535 = vld [vmem:[%s1532 + $0x10] sm:$0xff]
        %v1536 = vld [vmem:[%s1532 + $0x18] sm:$0xff]
        %v1537 = vmax.f32 %v1528, %v1533
        %v1538 = vmax.f32 %v1529, %v1534
        %v1539 = vmax.f32 %v1530, %v1535
        %v1540 = vmax.f32 %v1531, %v1536
        %s1541 = scalar_lea.vmem [#allocation3], 1728
        %v1542 = vld [vmem:[%s1541] sm:$0xff]
        %v1543 = vld [vmem:[%s1541 + $0x8] sm:$0xff]
        %v1544 = vld [vmem:[%s1541 + $0x10] sm:$0xff]
        %v1545 = vld [vmem:[%s1541 + $0x18] sm:$0xff]
        %v1546 = vmax.f32 %v1537, %v1542
        %v1547 = vmax.f32 %v1538, %v1543
        %v1548 = vmax.f32 %v1539, %v1544
        %v1549 = vmax.f32 %v1540, %v1545
        %1550 = vst [vmem:[#allocation4 + $0x340] sm:$0xff] %v1546
        %1551 = vst [vmem:[#allocation4 + $0x348] sm:$0xff] %v1547
        %1552 = vst [vmem:[#allocation4 + $0x350] sm:$0xff] %v1548
        %1553 = vst [vmem:[#allocation4 + $0x358] sm:$0xff] %v1549
        %v1554 = vld [vmem:[%s1541] sm:$0xff]
        %v1555 = vld [vmem:[%s1541 + $0x8] sm:$0xff]
        %v1556 = vld [vmem:[%s1541 + $0x10] sm:$0xff]
        %v1557 = vld [vmem:[%s1541 + $0x18] sm:$0xff]
        %s1558 = scalar_lea.vmem [#allocation3], 1760
        %v1559 = vld [vmem:[%s1558] sm:$0xff]
        %v1560 = vld [vmem:[%s1558 + $0x8] sm:$0xff]
        %v1561 = vld [vmem:[%s1558 + $0x10] sm:$0xff]
        %v1562 = vld [vmem:[%s1558 + $0x18] sm:$0xff]
        %v1563 = vmax.f32 %v1554, %v1559
        %v1564 = vmax.f32 %v1555, %v1560
        %v1565 = vmax.f32 %v1556, %v1561
        %v1566 = vmax.f32 %v1557, %v1562
        %s1567 = scalar_lea.vmem [#allocation3], 1792
        %v1568 = vld [vmem:[%s1567] sm:$0xff]
        %v1569 = vld [vmem:[%s1567 + $0x8] sm:$0xff]
        %v1570 = vld [vmem:[%s1567 + $0x10] sm:$0xff]
        %v1571 = vld [vmem:[%s1567 + $0x18] sm:$0xff]
        %v1572 = vmax.f32 %v1563, %v1568
        %v1573 = vmax.f32 %v1564, %v1569
        %v1574 = vmax.f32 %v1565, %v1570
        %v1575 = vmax.f32 %v1566, %v1571
        %1576 = vst [vmem:[#allocation4 + $0x360] sm:$0xff] %v1572
        %1577 = vst [vmem:[#allocation4 + $0x368] sm:$0xff] %v1573
        %1578 = vst [vmem:[#allocation4 + $0x370] sm:$0xff] %v1574
        %1579 = vst [vmem:[#allocation4 + $0x378] sm:$0xff] %v1575
        %v1580 = vld [vmem:[%s1567] sm:$0xff]
        %v1581 = vld [vmem:[%s1567 + $0x8] sm:$0xff]
        %v1582 = vld [vmem:[%s1567 + $0x10] sm:$0xff]
        %v1583 = vld [vmem:[%s1567 + $0x18] sm:$0xff]
        %s1584 = scalar_lea.vmem [#allocation3], 1824
        %v1585 = vld [vmem:[%s1584] sm:$0xff]
        %v1586 = vld [vmem:[%s1584 + $0x8] sm:$0xff]
        %v1587 = vld [vmem:[%s1584 + $0x10] sm:$0xff]
        %v1588 = vld [vmem:[%s1584 + $0x18] sm:$0xff]
        %v1589 = vmax.f32 %v1580, %v1585
        %v1590 = vmax.f32 %v1581, %v1586
        %v1591 = vmax.f32 %v1582, %v1587
        %v1592 = vmax.f32 %v1583, %v1588
        %s1593 = scalar_lea.vmem [#allocation3], 1856
        %v1594 = vld [vmem:[%s1593] sm:$0xff]
        %v1595 = vld [vmem:[%s1593 + $0x8] sm:$0xff]
        %v1596 = vld [vmem:[%s1593 + $0x10] sm:$0xff]
        %v1597 = vld [vmem:[%s1593 + $0x18] sm:$0xff]
        %v1598 = vmax.f32 %v1589, %v1594
        %v1599 = vmax.f32 %v1590, %v1595
        %v1600 = vmax.f32 %v1591, %v1596
        %v1601 = vmax.f32 %v1592, %v1597
        %1602 = vst [vmem:[#allocation4 + $0x380] sm:$0xff] %v1598
        %1603 = vst [vmem:[#allocation4 + $0x388] sm:$0xff] %v1599
        %1604 = vst [vmem:[#allocation4 + $0x390] sm:$0xff] %v1600
        %1605 = vst [vmem:[#allocation4 + $0x398] sm:$0xff] %v1601
        %v1606 = vld [vmem:[%s1593] sm:$0xff]
        %v1607 = vld [vmem:[%s1593 + $0x8] sm:$0xff]
        %v1608 = vld [vmem:[%s1593 + $0x10] sm:$0xff]
        %v1609 = vld [vmem:[%s1593 + $0x18] sm:$0xff]
        %s1610 = scalar_lea.vmem [#allocation3], 1888
        %v1611 = vld [vmem:[%s1610] sm:$0xff]
        %v1612 = vld [vmem:[%s1610 + $0x8] sm:$0xff]
        %v1613 = vld [vmem:[%s1610 + $0x10] sm:$0xff]
        %v1614 = vld [vmem:[%s1610 + $0x18] sm:$0xff]
        %v1615 = vmax.f32 %v1606, %v1611
        %v1616 = vmax.f32 %v1607, %v1612
        %v1617 = vmax.f32 %v1608, %v1613
        %v1618 = vmax.f32 %v1609, %v1614
        %s1619 = scalar_lea.vmem [#allocation3], 1920
        %v1620 = vld [vmem:[%s1619] sm:$0xff]
        %v1621 = vld [vmem:[%s1619 + $0x8] sm:$0xff]
        %v1622 = vld [vmem:[%s1619 + $0x10] sm:$0xff]
        %v1623 = vld [vmem:[%s1619 + $0x18] sm:$0xff]
        %v1624 = vmax.f32 %v1615, %v1620
        %v1625 = vmax.f32 %v1616, %v1621
        %v1626 = vmax.f32 %v1617, %v1622
        %v1627 = vmax.f32 %v1618, %v1623
        %1628 = vst [vmem:[#allocation4 + $0x3a0] sm:$0xff] %v1624
        %1629 = vst [vmem:[#allocation4 + $0x3a8] sm:$0xff] %v1625
        %1630 = vst [vmem:[#allocation4 + $0x3b0] sm:$0xff] %v1626
        %1631 = vst [vmem:[#allocation4 + $0x3b8] sm:$0xff] %v1627
        %v1632 = vld [vmem:[%s1619] sm:$0xff]
        %v1633 = vld [vmem:[%s1619 + $0x8] sm:$0xff]
        %v1634 = vld [vmem:[%s1619 + $0x10] sm:$0xff]
        %v1635 = vld [vmem:[%s1619 + $0x18] sm:$0xff]
        %s1636 = scalar_lea.vmem [#allocation3], 1952
        %v1637 = vld [vmem:[%s1636] sm:$0xff]
        %v1638 = vld [vmem:[%s1636 + $0x8] sm:$0xff]
        %v1639 = vld [vmem:[%s1636 + $0x10] sm:$0xff]
        %v1640 = vld [vmem:[%s1636 + $0x18] sm:$0xff]
        %v1641 = vmax.f32 %v1632, %v1637
        %v1642 = vmax.f32 %v1633, %v1638
        %v1643 = vmax.f32 %v1634, %v1639
        %v1644 = vmax.f32 %v1635, %v1640
        %s1645 = scalar_lea.vmem [#allocation3], 1984
        %v1646 = vld [vmem:[%s1645] sm:$0xff]
        %v1647 = vld [vmem:[%s1645 + $0x8] sm:$0xff]
        %v1648 = vld [vmem:[%s1645 + $0x10] sm:$0xff]
        %v1649 = vld [vmem:[%s1645 + $0x18] sm:$0xff]
        %v1650 = vmax.f32 %v1641, %v1646
        %v1651 = vmax.f32 %v1642, %v1647
        %v1652 = vmax.f32 %v1643, %v1648
        %v1653 = vmax.f32 %v1644, %v1649
        %1654 = vst [vmem:[#allocation4 + $0x3c0] sm:$0xff] %v1650
        %1655 = vst [vmem:[#allocation4 + $0x3c8] sm:$0xff] %v1651
        %1656 = vst [vmem:[#allocation4 + $0x3d0] sm:$0xff] %v1652
        %1657 = vst [vmem:[#allocation4 + $0x3d8] sm:$0xff] %v1653
        %v1658 = vld [vmem:[%s1645] sm:$0xff]
        %v1659 = vld [vmem:[%s1645 + $0x8] sm:$0xff]
        %v1660 = vld [vmem:[%s1645 + $0x10] sm:$0xff]
        %v1661 = vld [vmem:[%s1645 + $0x18] sm:$0xff]
        %s1662 = scalar_lea.vmem [#allocation3], 2016
        %v1663 = vld [vmem:[%s1662] sm:$0xff]
        %v1664 = vld [vmem:[%s1662 + $0x8] sm:$0xff]
        %v1665 = vld [vmem:[%s1662 + $0x10] sm:$0xff]
        %v1666 = vld [vmem:[%s1662 + $0x18] sm:$0xff]
        %v1667 = vmax.f32 %v1658, %v1663
        %v1668 = vmax.f32 %v1659, %v1664
        %v1669 = vmax.f32 %v1660, %v1665
        %v1670 = vmax.f32 %v1661, %v1666
        %s1671 = scalar_lea.vmem [#allocation3], 2048
        %v1672 = vld [vmem:[%s1671] sm:$0xff]
        %v1673 = vld [vmem:[%s1671 + $0x8] sm:$0xff]
        %v1674 = vld [vmem:[%s1671 + $0x10] sm:$0xff]
        %v1675 = vld [vmem:[%s1671 + $0x18] sm:$0xff]
        %v1676 = vmax.f32 %v1667, %v1672
        %v1677 = vmax.f32 %v1668, %v1673
        %v1678 = vmax.f32 %v1669, %v1674
        %v1679 = vmax.f32 %v1670, %v1675
        %1680 = vst [vmem:[#allocation4 + $0x3e0] sm:$0xff] %v1676
        %1681 = vst [vmem:[#allocation4 + $0x3e8] sm:$0xff] %v1677
        %1682 = vst [vmem:[#allocation4 + $0x3f0] sm:$0xff] %v1678
        %1683 = vst [vmem:[#allocation4 + $0x3f8] sm:$0xff] %v1679
        %v1684 = vld [vmem:[%s1671] sm:$0xff]
        %v1685 = vld [vmem:[%s1671 + $0x8] sm:$0xff]
        %v1686 = vld [vmem:[%s1671 + $0x10] sm:$0xff]
        %v1687 = vld [vmem:[%s1671 + $0x18] sm:$0xff]
        %s1688 = scalar_lea.vmem [#allocation3], 2080
        %v1689 = vld [vmem:[%s1688] sm:$0xff]
        %v1690 = vld [vmem:[%s1688 + $0x8] sm:$0xff]
        %v1691 = vld [vmem:[%s1688 + $0x10] sm:$0xff]
        %v1692 = vld [vmem:[%s1688 + $0x18] sm:$0xff]
        %v1693 = vmax.f32 %v1684, %v1689
        %v1694 = vmax.f32 %v1685, %v1690
        %v1695 = vmax.f32 %v1686, %v1691
        %v1696 = vmax.f32 %v1687, %v1692
        %s1697 = scalar_lea.vmem [#allocation3], 2112
        %v1698 = vld [vmem:[%s1697] sm:$0xff]
        %v1699 = vld [vmem:[%s1697 + $0x8] sm:$0xff]
        %v1700 = vld [vmem:[%s1697 + $0x10] sm:$0xff]
        %v1701 = vld [vmem:[%s1697 + $0x18] sm:$0xff]
        %v1702 = vmax.f32 %v1693, %v1698
        %v1703 = vmax.f32 %v1694, %v1699
        %v1704 = vmax.f32 %v1695, %v1700
        %v1705 = vmax.f32 %v1696, %v1701
        %1706 = vst [vmem:[#allocation4 + $0x400] sm:$0xff] %v1702
        %1707 = vst [vmem:[#allocation4 + $0x408] sm:$0xff] %v1703
        %1708 = vst [vmem:[#allocation4 + $0x410] sm:$0xff] %v1704
        %1709 = vst [vmem:[#allocation4 + $0x418] sm:$0xff] %v1705
        %v1710 = vld [vmem:[%s1697] sm:$0xff]
        %v1711 = vld [vmem:[%s1697 + $0x8] sm:$0xff]
        %v1712 = vld [vmem:[%s1697 + $0x10] sm:$0xff]
        %v1713 = vld [vmem:[%s1697 + $0x18] sm:$0xff]
        %s1714 = scalar_lea.vmem [#allocation3], 2144
        %v1715 = vld [vmem:[%s1714] sm:$0xff]
        %v1716 = vld [vmem:[%s1714 + $0x8] sm:$0xff]
        %v1717 = vld [vmem:[%s1714 + $0x10] sm:$0xff]
        %v1718 = vld [vmem:[%s1714 + $0x18] sm:$0xff]
        %v1719 = vmax.f32 %v1710, %v1715
        %v1720 = vmax.f32 %v1711, %v1716
        %v1721 = vmax.f32 %v1712, %v1717
        %v1722 = vmax.f32 %v1713, %v1718
        %s1723 = scalar_lea.vmem [#allocation3], 2176
        %v1724 = vld [vmem:[%s1723] sm:$0xff]
        %v1725 = vld [vmem:[%s1723 + $0x8] sm:$0xff]
        %v1726 = vld [vmem:[%s1723 + $0x10] sm:$0xff]
        %v1727 = vld [vmem:[%s1723 + $0x18] sm:$0xff]
        %v1728 = vmax.f32 %v1719, %v1724
        %v1729 = vmax.f32 %v1720, %v1725
        %v1730 = vmax.f32 %v1721, %v1726
        %v1731 = vmax.f32 %v1722, %v1727
        %1732 = vst [vmem:[#allocation4 + $0x420] sm:$0xff] %v1728
        %1733 = vst [vmem:[#allocation4 + $0x428] sm:$0xff] %v1729
        %1734 = vst [vmem:[#allocation4 + $0x430] sm:$0xff] %v1730
        %1735 = vst [vmem:[#allocation4 + $0x438] sm:$0xff] %v1731
        %v1736 = vld [vmem:[%s1723] sm:$0xff]
        %v1737 = vld [vmem:[%s1723 + $0x8] sm:$0xff]
        %v1738 = vld [vmem:[%s1723 + $0x10] sm:$0xff]
        %v1739 = vld [vmem:[%s1723 + $0x18] sm:$0xff]
        %s1740 = scalar_lea.vmem [#allocation3], 2208
        %v1741 = vld [vmem:[%s1740] sm:$0xff]
        %v1742 = vld [vmem:[%s1740 + $0x8] sm:$0xff]
        %v1743 = vld [vmem:[%s1740 + $0x10] sm:$0xff]
        %v1744 = vld [vmem:[%s1740 + $0x18] sm:$0xff]
        %v1745 = vmax.f32 %v1736, %v1741
        %v1746 = vmax.f32 %v1737, %v1742
        %v1747 = vmax.f32 %v1738, %v1743
        %v1748 = vmax.f32 %v1739, %v1744
        %s1749 = scalar_lea.vmem [#allocation3], 2240
        %v1750 = vld [vmem:[%s1749] sm:$0xff]
        %v1751 = vld [vmem:[%s1749 + $0x8] sm:$0xff]
        %v1752 = vld [vmem:[%s1749 + $0x10] sm:$0xff]
        %v1753 = vld [vmem:[%s1749 + $0x18] sm:$0xff]
        %v1754 = vmax.f32 %v1745, %v1750
        %v1755 = vmax.f32 %v1746, %v1751
        %v1756 = vmax.f32 %v1747, %v1752
        %v1757 = vmax.f32 %v1748, %v1753
        %1758 = vst [vmem:[#allocation4 + $0x440] sm:$0xff] %v1754
        %1759 = vst [vmem:[#allocation4 + $0x448] sm:$0xff] %v1755
        %1760 = vst [vmem:[#allocation4 + $0x450] sm:$0xff] %v1756
        %1761 = vst [vmem:[#allocation4 + $0x458] sm:$0xff] %v1757
        %v1762 = vld [vmem:[%s1749] sm:$0xff]
        %v1763 = vld [vmem:[%s1749 + $0x8] sm:$0xff]
        %v1764 = vld [vmem:[%s1749 + $0x10] sm:$0xff]
        %v1765 = vld [vmem:[%s1749 + $0x18] sm:$0xff]
        %s1766 = scalar_lea.vmem [#allocation3], 2272
        %v1767 = vld [vmem:[%s1766] sm:$0xff]
        %v1768 = vld [vmem:[%s1766 + $0x8] sm:$0xff]
        %v1769 = vld [vmem:[%s1766 + $0x10] sm:$0xff]
        %v1770 = vld [vmem:[%s1766 + $0x18] sm:$0xff]
        %v1771 = vmax.f32 %v1762, %v1767
        %v1772 = vmax.f32 %v1763, %v1768
        %v1773 = vmax.f32 %v1764, %v1769
        %v1774 = vmax.f32 %v1765, %v1770
        %s1775 = scalar_lea.vmem [#allocation3], 2304
        %v1776 = vld [vmem:[%s1775] sm:$0xff]
        %v1777 = vld [vmem:[%s1775 + $0x8] sm:$0xff]
        %v1778 = vld [vmem:[%s1775 + $0x10] sm:$0xff]
        %v1779 = vld [vmem:[%s1775 + $0x18] sm:$0xff]
        %v1780 = vmax.f32 %v1771, %v1776
        %v1781 = vmax.f32 %v1772, %v1777
        %v1782 = vmax.f32 %v1773, %v1778
        %v1783 = vmax.f32 %v1774, %v1779
        %1784 = vst [vmem:[#allocation4 + $0x460] sm:$0xff] %v1780
        %1785 = vst [vmem:[#allocation4 + $0x468] sm:$0xff] %v1781
        %1786 = vst [vmem:[#allocation4 + $0x470] sm:$0xff] %v1782
        %1787 = vst [vmem:[#allocation4 + $0x478] sm:$0xff] %v1783
        %v1788 = vld [vmem:[%s1775] sm:$0xff]
        %v1789 = vld [vmem:[%s1775 + $0x8] sm:$0xff]
        %v1790 = vld [vmem:[%s1775 + $0x10] sm:$0xff]
        %v1791 = vld [vmem:[%s1775 + $0x18] sm:$0xff]
        %s1792 = scalar_lea.vmem [#allocation3], 2336
        %v1793 = vld [vmem:[%s1792] sm:$0xff]
        %v1794 = vld [vmem:[%s1792 + $0x8] sm:$0xff]
        %v1795 = vld [vmem:[%s1792 + $0x10] sm:$0xff]
        %v1796 = vld [vmem:[%s1792 + $0x18] sm:$0xff]
        %v1797 = vmax.f32 %v1788, %v1793
        %v1798 = vmax.f32 %v1789, %v1794
        %v1799 = vmax.f32 %v1790, %v1795
        %v1800 = vmax.f32 %v1791, %v1796
        %s1801 = scalar_lea.vmem [#allocation3], 2368
        %v1802 = vld [vmem:[%s1801] sm:$0xff]
        %v1803 = vld [vmem:[%s1801 + $0x8] sm:$0xff]
        %v1804 = vld [vmem:[%s1801 + $0x10] sm:$0xff]
        %v1805 = vld [vmem:[%s1801 + $0x18] sm:$0xff]
        %v1806 = vmax.f32 %v1797, %v1802
        %v1807 = vmax.f32 %v1798, %v1803
        %v1808 = vmax.f32 %v1799, %v1804
        %v1809 = vmax.f32 %v1800, %v1805
        %1810 = vst [vmem:[#allocation4 + $0x480] sm:$0xff] %v1806
        %1811 = vst [vmem:[#allocation4 + $0x488] sm:$0xff] %v1807
        %1812 = vst [vmem:[#allocation4 + $0x490] sm:$0xff] %v1808
        %1813 = vst [vmem:[#allocation4 + $0x498] sm:$0xff] %v1809
        %v1814 = vld [vmem:[%s1801] sm:$0xff]
        %v1815 = vld [vmem:[%s1801 + $0x8] sm:$0xff]
        %v1816 = vld [vmem:[%s1801 + $0x10] sm:$0xff]
        %v1817 = vld [vmem:[%s1801 + $0x18] sm:$0xff]
        %s1818 = scalar_lea.vmem [#allocation3], 2400
        %v1819 = vld [vmem:[%s1818] sm:$0xff]
        %v1820 = vld [vmem:[%s1818 + $0x8] sm:$0xff]
        %v1821 = vld [vmem:[%s1818 + $0x10] sm:$0xff]
        %v1822 = vld [vmem:[%s1818 + $0x18] sm:$0xff]
        %v1823 = vmax.f32 %v1814, %v1819
        %v1824 = vmax.f32 %v1815, %v1820
        %v1825 = vmax.f32 %v1816, %v1821
        %v1826 = vmax.f32 %v1817, %v1822
        %s1827 = scalar_lea.vmem [#allocation3], 2432
        %v1828 = vld [vmem:[%s1827] sm:$0xff]
        %v1829 = vld [vmem:[%s1827 + $0x8] sm:$0xff]
        %v1830 = vld [vmem:[%s1827 + $0x10] sm:$0xff]
        %v1831 = vld [vmem:[%s1827 + $0x18] sm:$0xff]
        %v1832 = vmax.f32 %v1823, %v1828
        %v1833 = vmax.f32 %v1824, %v1829
        %v1834 = vmax.f32 %v1825, %v1830
        %v1835 = vmax.f32 %v1826, %v1831
        %1836 = vst [vmem:[#allocation4 + $0x4a0] sm:$0xff] %v1832
        %1837 = vst [vmem:[#allocation4 + $0x4a8] sm:$0xff] %v1833
        %1838 = vst [vmem:[#allocation4 + $0x4b0] sm:$0xff] %v1834
        %1839 = vst [vmem:[#allocation4 + $0x4b8] sm:$0xff] %v1835
        %v1840 = vld [vmem:[%s1827] sm:$0xff]
        %v1841 = vld [vmem:[%s1827 + $0x8] sm:$0xff]
        %v1842 = vld [vmem:[%s1827 + $0x10] sm:$0xff]
        %v1843 = vld [vmem:[%s1827 + $0x18] sm:$0xff]
        %s1844 = scalar_lea.vmem [#allocation3], 2464
        %v1845 = vld [vmem:[%s1844] sm:$0xff]
        %v1846 = vld [vmem:[%s1844 + $0x8] sm:$0xff]
        %v1847 = vld [vmem:[%s1844 + $0x10] sm:$0xff]
        %v1848 = vld [vmem:[%s1844 + $0x18] sm:$0xff]
        %v1849 = vmax.f32 %v1840, %v1845
        %v1850 = vmax.f32 %v1841, %v1846
        %v1851 = vmax.f32 %v1842, %v1847
        %v1852 = vmax.f32 %v1843, %v1848
        %s1853 = scalar_lea.vmem [#allocation3], 2496
        %v1854 = vld [vmem:[%s1853] sm:$0xff]
        %v1855 = vld [vmem:[%s1853 + $0x8] sm:$0xff]
        %v1856 = vld [vmem:[%s1853 + $0x10] sm:$0xff]
        %v1857 = vld [vmem:[%s1853 + $0x18] sm:$0xff]
        %v1858 = vmax.f32 %v1849, %v1854
        %v1859 = vmax.f32 %v1850, %v1855
        %v1860 = vmax.f32 %v1851, %v1856
        %v1861 = vmax.f32 %v1852, %v1857
        %1862 = vst [vmem:[#allocation4 + $0x4c0] sm:$0xff] %v1858
        %1863 = vst [vmem:[#allocation4 + $0x4c8] sm:$0xff] %v1859
        %1864 = vst [vmem:[#allocation4 + $0x4d0] sm:$0xff] %v1860
        %1865 = vst [vmem:[#allocation4 + $0x4d8] sm:$0xff] %v1861
        %v1866 = vld [vmem:[%s1853] sm:$0xff]
        %v1867 = vld [vmem:[%s1853 + $0x8] sm:$0xff]
        %v1868 = vld [vmem:[%s1853 + $0x10] sm:$0xff]
        %v1869 = vld [vmem:[%s1853 + $0x18] sm:$0xff]
        %s1870 = scalar_lea.vmem [#allocation3], 2528
        %v1871 = vld [vmem:[%s1870] sm:$0xff]
        %v1872 = vld [vmem:[%s1870 + $0x8] sm:$0xff]
        %v1873 = vld [vmem:[%s1870 + $0x10] sm:$0xff]
        %v1874 = vld [vmem:[%s1870 + $0x18] sm:$0xff]
        %v1875 = vmax.f32 %v1866, %v1871
        %v1876 = vmax.f32 %v1867, %v1872
        %v1877 = vmax.f32 %v1868, %v1873
        %v1878 = vmax.f32 %v1869, %v1874
        %s1879 = scalar_lea.vmem [#allocation3], 2560
        %v1880 = vld [vmem:[%s1879] sm:$0xff]
        %v1881 = vld [vmem:[%s1879 + $0x8] sm:$0xff]
        %v1882 = vld [vmem:[%s1879 + $0x10] sm:$0xff]
        %v1883 = vld [vmem:[%s1879 + $0x18] sm:$0xff]
        %v1884 = vmax.f32 %v1875, %v1880
        %v1885 = vmax.f32 %v1876, %v1881
        %v1886 = vmax.f32 %v1877, %v1882
        %v1887 = vmax.f32 %v1878, %v1883
        %1888 = vst [vmem:[#allocation4 + $0x4e0] sm:$0xff] %v1884
        %1889 = vst [vmem:[#allocation4 + $0x4e8] sm:$0xff] %v1885
        %1890 = vst [vmem:[#allocation4 + $0x4f0] sm:$0xff] %v1886
        %1891 = vst [vmem:[#allocation4 + $0x4f8] sm:$0xff] %v1887
        %v1892 = vld [vmem:[%s1879] sm:$0xff]
        %v1893 = vld [vmem:[%s1879 + $0x8] sm:$0xff]
        %v1894 = vld [vmem:[%s1879 + $0x10] sm:$0xff]
        %v1895 = vld [vmem:[%s1879 + $0x18] sm:$0xff]
        %s1896 = scalar_lea.vmem [#allocation3], 2592
        %v1897 = vld [vmem:[%s1896] sm:$0xff]
        %v1898 = vld [vmem:[%s1896 + $0x8] sm:$0xff]
        %v1899 = vld [vmem:[%s1896 + $0x10] sm:$0xff]
        %v1900 = vld [vmem:[%s1896 + $0x18] sm:$0xff]
        %v1901 = vmax.f32 %v1892, %v1897
        %v1902 = vmax.f32 %v1893, %v1898
        %v1903 = vmax.f32 %v1894, %v1899
        %v1904 = vmax.f32 %v1895, %v1900
        %s1905 = scalar_lea.vmem [#allocation3], 2624
        %v1906 = vld [vmem:[%s1905] sm:$0xff]
        %v1907 = vld [vmem:[%s1905 + $0x8] sm:$0xff]
        %v1908 = vld [vmem:[%s1905 + $0x10] sm:$0xff]
        %v1909 = vld [vmem:[%s1905 + $0x18] sm:$0xff]
        %v1910 = vmax.f32 %v1901, %v1906
        %v1911 = vmax.f32 %v1902, %v1907
        %v1912 = vmax.f32 %v1903, %v1908
        %v1913 = vmax.f32 %v1904, %v1909
        %1914 = vst [vmem:[#allocation4 + $0x500] sm:$0xff] %v1910
        %1915 = vst [vmem:[#allocation4 + $0x508] sm:$0xff] %v1911
        %1916 = vst [vmem:[#allocation4 + $0x510] sm:$0xff] %v1912
        %1917 = vst [vmem:[#allocation4 + $0x518] sm:$0xff] %v1913
        %v1918 = vld [vmem:[%s1905] sm:$0xff]
        %v1919 = vld [vmem:[%s1905 + $0x8] sm:$0xff]
        %v1920 = vld [vmem:[%s1905 + $0x10] sm:$0xff]
        %v1921 = vld [vmem:[%s1905 + $0x18] sm:$0xff]
        %s1922 = scalar_lea.vmem [#allocation3], 2656
        %v1923 = vld [vmem:[%s1922] sm:$0xff]
        %v1924 = vld [vmem:[%s1922 + $0x8] sm:$0xff]
        %v1925 = vld [vmem:[%s1922 + $0x10] sm:$0xff]
        %v1926 = vld [vmem:[%s1922 + $0x18] sm:$0xff]
        %v1927 = vmax.f32 %v1918, %v1923
        %v1928 = vmax.f32 %v1919, %v1924
        %v1929 = vmax.f32 %v1920, %v1925
        %v1930 = vmax.f32 %v1921, %v1926
        %s1931 = scalar_lea.vmem [#allocation3], 2688
        %v1932 = vld [vmem:[%s1931] sm:$0xff]
        %v1933 = vld [vmem:[%s1931 + $0x8] sm:$0xff]
        %v1934 = vld [vmem:[%s1931 + $0x10] sm:$0xff]
        %v1935 = vld [vmem:[%s1931 + $0x18] sm:$0xff]
        %v1936 = vmax.f32 %v1927, %v1932
        %v1937 = vmax.f32 %v1928, %v1933
        %v1938 = vmax.f32 %v1929, %v1934
        %v1939 = vmax.f32 %v1930, %v1935
        %1940 = vst [vmem:[#allocation4 + $0x520] sm:$0xff] %v1936
        %1941 = vst [vmem:[#allocation4 + $0x528] sm:$0xff] %v1937
        %1942 = vst [vmem:[#allocation4 + $0x530] sm:$0xff] %v1938
        %1943 = vst [vmem:[#allocation4 + $0x538] sm:$0xff] %v1939
        %v1944 = vld [vmem:[%s1931] sm:$0xff]
        %v1945 = vld [vmem:[%s1931 + $0x8] sm:$0xff]
        %v1946 = vld [vmem:[%s1931 + $0x10] sm:$0xff]
        %v1947 = vld [vmem:[%s1931 + $0x18] sm:$0xff]
        %s1948 = scalar_lea.vmem [#allocation3], 2720
        %v1949 = vld [vmem:[%s1948] sm:$0xff]
        %v1950 = vld [vmem:[%s1948 + $0x8] sm:$0xff]
        %v1951 = vld [vmem:[%s1948 + $0x10] sm:$0xff]
        %v1952 = vld [vmem:[%s1948 + $0x18] sm:$0xff]
        %v1953 = vmax.f32 %v1944, %v1949
        %v1954 = vmax.f32 %v1945, %v1950
        %v1955 = vmax.f32 %v1946, %v1951
        %v1956 = vmax.f32 %v1947, %v1952
        %s1957 = scalar_lea.vmem [#allocation3], 2752
        %v1958 = vld [vmem:[%s1957] sm:$0xff]
        %v1959 = vld [vmem:[%s1957 + $0x8] sm:$0xff]
        %v1960 = vld [vmem:[%s1957 + $0x10] sm:$0xff]
        %v1961 = vld [vmem:[%s1957 + $0x18] sm:$0xff]
        %v1962 = vmax.f32 %v1953, %v1958
        %v1963 = vmax.f32 %v1954, %v1959
        %v1964 = vmax.f32 %v1955, %v1960
        %v1965 = vmax.f32 %v1956, %v1961
        %1966 = vst [vmem:[#allocation4 + $0x540] sm:$0xff] %v1962
        %1967 = vst [vmem:[#allocation4 + $0x548] sm:$0xff] %v1963
        %1968 = vst [vmem:[#allocation4 + $0x550] sm:$0xff] %v1964
        %1969 = vst [vmem:[#allocation4 + $0x558] sm:$0xff] %v1965
        %v1970 = vld [vmem:[%s1957] sm:$0xff]
        %v1971 = vld [vmem:[%s1957 + $0x8] sm:$0xff]
        %v1972 = vld [vmem:[%s1957 + $0x10] sm:$0xff]
        %v1973 = vld [vmem:[%s1957 + $0x18] sm:$0xff]
        %s1974 = scalar_lea.vmem [#allocation3], 2784
        %v1975 = vld [vmem:[%s1974] sm:$0xff]
        %v1976 = vld [vmem:[%s1974 + $0x8] sm:$0xff]
        %v1977 = vld [vmem:[%s1974 + $0x10] sm:$0xff]
        %v1978 = vld [vmem:[%s1974 + $0x18] sm:$0xff]
        %v1979 = vmax.f32 %v1970, %v1975
        %v1980 = vmax.f32 %v1971, %v1976
        %v1981 = vmax.f32 %v1972, %v1977
        %v1982 = vmax.f32 %v1973, %v1978
        %s1983 = scalar_lea.vmem [#allocation3], 2816
        %v1984 = vld [vmem:[%s1983] sm:$0xff]
        %v1985 = vld [vmem:[%s1983 + $0x8] sm:$0xff]
        %v1986 = vld [vmem:[%s1983 + $0x10] sm:$0xff]
        %v1987 = vld [vmem:[%s1983 + $0x18] sm:$0xff]
        %v1988 = vmax.f32 %v1979, %v1984
        %v1989 = vmax.f32 %v1980, %v1985
        %v1990 = vmax.f32 %v1981, %v1986
        %v1991 = vmax.f32 %v1982, %v1987
        %1992 = vst [vmem:[#allocation4 + $0x560] sm:$0xff] %v1988
        %1993 = vst [vmem:[#allocation4 + $0x568] sm:$0xff] %v1989
        %1994 = vst [vmem:[#allocation4 + $0x570] sm:$0xff] %v1990
        %1995 = vst [vmem:[#allocation4 + $0x578] sm:$0xff] %v1991
        %v1996 = vld [vmem:[%s451] sm:$0x1]
        %v1997 = vld [vmem:[%s7] sm:$0xff]
        %v1998 = vld [vmem:[%s7 + $0x8] sm:$0xff]
        %v1999 = vld [vmem:[%s7 + $0x10] sm:$0xff]
        %v2000 = vld [vmem:[%s7 + $0x18] sm:$0xff]
        %v2001 = vld [vmem:[%s7 + $0x20] sm:$0xff]
        %v2002 = vld [vmem:[%s7 + $0x28] sm:$0xff]
        %v2003 = vld [vmem:[%s7 + $0x30] sm:$0xff]
        %v2004 = vld [vmem:[%s7 + $0x38] sm:$0xff]
        %v2005 = vld [vmem:[%s7 + $0x40] sm:$0xff]
        %v2006 = vld [vmem:[%s7 + $0x48] sm:$0xff]
        %v2007 = vld [vmem:[%s7 + $0x50] sm:$0xff]
        %v2008 = vld [vmem:[%s7 + $0x58] sm:$0xff]
        %v2009 = vld [vmem:[%s7 + $0x60] sm:$0xff]
        %v2010 = vld [vmem:[%s7 + $0x68] sm:$0xff]
        %v2011 = vld [vmem:[%s7 + $0x70] sm:$0xff]
        %v2012 = vld [vmem:[%s7 + $0x78] sm:$0xff]
        %v2013 = vld [vmem:[%s7 + $0x80] sm:$0xff]
        %v2014 = vld [vmem:[%s7 + $0x88] sm:$0xff]
        %v2015 = vld [vmem:[%s7 + $0x90] sm:$0xff]
        %v2016 = vld [vmem:[%s7 + $0x98] sm:$0xff]
        %v2017 = vld [vmem:[%s7 + $0xa0] sm:$0xff]
        %v2018 = vld [vmem:[%s7 + $0xa8] sm:$0xff]
        %v2019 = vld [vmem:[%s7 + $0xb0] sm:$0xff]
        %v2020 = vld [vmem:[%s7 + $0xb8] sm:$0xff]
        %v2021 = vld [vmem:[%s7 + $0xc0] sm:$0xff]
        %v2022 = vld [vmem:[%s7 + $0xc8] sm:$0xff]
        %v2023 = vld [vmem:[%s7 + $0xd0] sm:$0xff]
        %v2024 = vld [vmem:[%s7 + $0xd8] sm:$0xff]
        %v2025 = vld [vmem:[%s7 + $0xe0] sm:$0xff]
        %v2026 = vld [vmem:[%s7 + $0xe8] sm:$0xff]
        %v2027 = vld [vmem:[%s7 + $0xf0] sm:$0xff]
        %v2028 = vld [vmem:[%s7 + $0xf8] sm:$0xff]
        %v2029 = vld [vmem:[%s7 + $0x100] sm:$0xff]
        %v2030 = vld [vmem:[%s7 + $0x108] sm:$0xff]
        %v2031 = vld [vmem:[%s7 + $0x110] sm:$0xff]
        %v2032 = vld [vmem:[%s7 + $0x118] sm:$0xff]
        %v2033 = vld [vmem:[%s7 + $0x120] sm:$0xff]
        %v2034 = vld [vmem:[%s7 + $0x128] sm:$0xff]
        %v2035 = vld [vmem:[%s7 + $0x130] sm:$0xff]
        %v2036 = vld [vmem:[%s7 + $0x138] sm:$0xff]
        %v2037 = vld [vmem:[%s7 + $0x140] sm:$0xff]
        %v2038 = vld [vmem:[%s7 + $0x148] sm:$0xff]
        %v2039 = vld [vmem:[%s7 + $0x150] sm:$0xff]
        %v2040 = vld [vmem:[%s7 + $0x158] sm:$0xff]
        %v2041 = vld [vmem:[%s7 + $0x160] sm:$0xff]
        %v2042 = vld [vmem:[%s7 + $0x168] sm:$0xff]
        %v2043 = vld [vmem:[%s7 + $0x170] sm:$0xff]
        %v2044 = vld [vmem:[%s7 + $0x178] sm:$0xff]
        %v2045 = vld [vmem:[%s7 + $0x180] sm:$0xff]
        %v2046 = vld [vmem:[%s7 + $0x188] sm:$0xff]
        %v2047 = vld [vmem:[%s7 + $0x190] sm:$0xff]
        %v2048 = vld [vmem:[%s7 + $0x198] sm:$0xff]
        %v2049 = vld [vmem:[%s7 + $0x1a0] sm:$0xff]
        %v2050 = vld [vmem:[%s7 + $0x1a8] sm:$0xff]
        %v2051 = vld [vmem:[%s7 + $0x1b0] sm:$0xff]
        %v2052 = vld [vmem:[%s7 + $0x1b8] sm:$0xff]
        %v2053 = vld [vmem:[%s7 + $0x1c0] sm:$0xff]
        %v2054 = vld [vmem:[%s7 + $0x1c8] sm:$0xff]
        %v2055 = vld [vmem:[%s7 + $0x1d0] sm:$0xff]
        %v2056 = vld [vmem:[%s7 + $0x1d8] sm:$0xff]
        %v2057 = vld [vmem:[%s7 + $0x1e0] sm:$0xff]
        %v2058 = vld [vmem:[%s7 + $0x1e8] sm:$0xff]
        %v2059 = vld [vmem:[%s7 + $0x1f0] sm:$0xff]
        %v2060 = vld [vmem:[%s7 + $0x1f8] sm:$0xff]
        %v2061 = vld [vmem:[%s7 + $0x200] sm:$0xff]
        %v2062 = vld [vmem:[%s7 + $0x208] sm:$0xff]
        %v2063 = vld [vmem:[%s7 + $0x210] sm:$0xff]
        %v2064 = vld [vmem:[%s7 + $0x218] sm:$0xff]
        %v2065 = vld [vmem:[%s7 + $0x220] sm:$0xff]
        %v2066 = vld [vmem:[%s7 + $0x228] sm:$0xff]
        %v2067 = vld [vmem:[%s7 + $0x230] sm:$0xff]
        %v2068 = vld [vmem:[%s7 + $0x238] sm:$0xff]
        %v2069 = vld [vmem:[%s7 + $0x240] sm:$0xff]
        %v2070 = vld [vmem:[%s7 + $0x248] sm:$0xff]
        %v2071 = vld [vmem:[%s7 + $0x250] sm:$0xff]
        %v2072 = vld [vmem:[%s7 + $0x258] sm:$0xff]
        %v2073 = vld [vmem:[%s7 + $0x260] sm:$0xff]
        %v2074 = vld [vmem:[%s7 + $0x268] sm:$0xff]
        %v2075 = vld [vmem:[%s7 + $0x270] sm:$0xff]
        %v2076 = vld [vmem:[%s7 + $0x278] sm:$0xff]
        %v2077 = vld [vmem:[%s7 + $0x280] sm:$0xff]
        %v2078 = vld [vmem:[%s7 + $0x288] sm:$0xff]
        %v2079 = vld [vmem:[%s7 + $0x290] sm:$0xff]
        %v2080 = vld [vmem:[%s7 + $0x298] sm:$0xff]
        %v2081 = vld [vmem:[%s7 + $0x2a0] sm:$0xff]
        %v2082 = vld [vmem:[%s7 + $0x2a8] sm:$0xff]
        %v2083 = vld [vmem:[%s7 + $0x2b0] sm:$0xff]
        %v2084 = vld [vmem:[%s7 + $0x2b8] sm:$0xff]
        %v2085 = vld [vmem:[%s7 + $0x2c0] sm:$0xff]
        %v2086 = vld [vmem:[%s7 + $0x2c8] sm:$0xff]
        %v2087 = vld [vmem:[%s7 + $0x2d0] sm:$0xff]
        %v2088 = vld [vmem:[%s7 + $0x2d8] sm:$0xff]
        %v2089 = vld [vmem:[%s7 + $0x2e0] sm:$0xff]
        %v2090 = vld [vmem:[%s7 + $0x2e8] sm:$0xff]
        %v2091 = vld [vmem:[%s7 + $0x2f0] sm:$0xff]
        %v2092 = vld [vmem:[%s7 + $0x2f8] sm:$0xff]
        %v2093 = vld [vmem:[%s7 + $0x300] sm:$0xff]
        %v2094 = vld [vmem:[%s7 + $0x308] sm:$0xff]
        %v2095 = vld [vmem:[%s7 + $0x310] sm:$0xff]
        %v2096 = vld [vmem:[%s7 + $0x318] sm:$0xff]
        %v2097 = vld [vmem:[%s7 + $0x320] sm:$0xff]
        %v2098 = vld [vmem:[%s7 + $0x328] sm:$0xff]
        %v2099 = vld [vmem:[%s7 + $0x330] sm:$0xff]
        %v2100 = vld [vmem:[%s7 + $0x338] sm:$0xff]
        %v2101 = vld [vmem:[%s7 + $0x340] sm:$0xff]
        %v2102 = vld [vmem:[%s7 + $0x348] sm:$0xff]
        %v2103 = vld [vmem:[%s7 + $0x350] sm:$0xff]
        %v2104 = vld [vmem:[%s7 + $0x358] sm:$0xff]
        %v2105 = vld [vmem:[%s7 + $0x360] sm:$0xff]
        %v2106 = vld [vmem:[%s7 + $0x368] sm:$0xff]
        %v2107 = vld [vmem:[%s7 + $0x370] sm:$0xff]
        %v2108 = vld [vmem:[%s7 + $0x378] sm:$0xff]
        %v2109 = vld [vmem:[%s7 + $0x380] sm:$0xff]
        %v2110 = vld [vmem:[%s7 + $0x388] sm:$0xff]
        %v2111 = vld [vmem:[%s7 + $0x390] sm:$0xff]
        %v2112 = vld [vmem:[%s7 + $0x398] sm:$0xff]
        %v2113 = vld [vmem:[%s7 + $0x3a0] sm:$0xff]
        %v2114 = vld [vmem:[%s7 + $0x3a8] sm:$0xff]
        %v2115 = vld [vmem:[%s7 + $0x3b0] sm:$0xff]
        %v2116 = vld [vmem:[%s7 + $0x3b8] sm:$0xff]
        %v2117 = vld [vmem:[%s7 + $0x3c0] sm:$0xff]
        %v2118 = vld [vmem:[%s7 + $0x3c8] sm:$0xff]
        %v2119 = vld [vmem:[%s7 + $0x3d0] sm:$0xff]
        %v2120 = vld [vmem:[%s7 + $0x3d8] sm:$0xff]
        %v2121 = vld [vmem:[%s7 + $0x3e0] sm:$0xff]
        %v2122 = vld [vmem:[%s7 + $0x3e8] sm:$0xff]
        %v2123 = vld [vmem:[%s7 + $0x3f0] sm:$0xff]
        %v2124 = vld [vmem:[%s7 + $0x3f8] sm:$0xff]
        %v2125 = vld [vmem:[%s7 + $0x400] sm:$0xff]
        %v2126 = vld [vmem:[%s7 + $0x408] sm:$0xff]
        %v2127 = vld [vmem:[%s7 + $0x410] sm:$0xff]
        %v2128 = vld [vmem:[%s7 + $0x418] sm:$0xff]
        %v2129 = vld [vmem:[%s7 + $0x420] sm:$0xff]
        %v2130 = vld [vmem:[%s7 + $0x428] sm:$0xff]
        %v2131 = vld [vmem:[%s7 + $0x430] sm:$0xff]
        %v2132 = vld [vmem:[%s7 + $0x438] sm:$0xff]
        %v2133 = vld [vmem:[%s7 + $0x440] sm:$0xff]
        %v2134 = vld [vmem:[%s7 + $0x448] sm:$0xff]
        %v2135 = vld [vmem:[%s7 + $0x450] sm:$0xff]
        %v2136 = vld [vmem:[%s7 + $0x458] sm:$0xff]
        %v2137 = vld [vmem:[%s7 + $0x460] sm:$0xff]
        %v2138 = vld [vmem:[%s7 + $0x468] sm:$0xff]
        %v2139 = vld [vmem:[%s7 + $0x470] sm:$0xff]
        %v2140 = vld [vmem:[%s7 + $0x478] sm:$0xff]
        %v2141 = vld [vmem:[%s7 + $0x480] sm:$0xff]
        %v2142 = vld [vmem:[%s7 + $0x488] sm:$0xff]
        %v2143 = vld [vmem:[%s7 + $0x490] sm:$0xff]
        %v2144 = vld [vmem:[%s7 + $0x498] sm:$0xff]
        %v2145 = vld [vmem:[%s7 + $0x4a0] sm:$0xff]
        %v2146 = vld [vmem:[%s7 + $0x4a8] sm:$0xff]
        %v2147 = vld [vmem:[%s7 + $0x4b0] sm:$0xff]
        %v2148 = vld [vmem:[%s7 + $0x4b8] sm:$0xff]
        %v2149 = vld [vmem:[%s7 + $0x4c0] sm:$0xff]
        %v2150 = vld [vmem:[%s7 + $0x4c8] sm:$0xff]
        %v2151 = vld [vmem:[%s7 + $0x4d0] sm:$0xff]
        %v2152 = vld [vmem:[%s7 + $0x4d8] sm:$0xff]
        %v2153 = vld [vmem:[%s7 + $0x4e0] sm:$0xff]
        %v2154 = vld [vmem:[%s7 + $0x4e8] sm:$0xff]
        %v2155 = vld [vmem:[%s7 + $0x4f0] sm:$0xff]
        %v2156 = vld [vmem:[%s7 + $0x4f8] sm:$0xff]
        %v2157 = vld [vmem:[%s7 + $0x500] sm:$0xff]
        %v2158 = vld [vmem:[%s7 + $0x508] sm:$0xff]
        %v2159 = vld [vmem:[%s7 + $0x510] sm:$0xff]
        %v2160 = vld [vmem:[%s7 + $0x518] sm:$0xff]
        %v2161 = vld [vmem:[%s7 + $0x520] sm:$0xff]
        %v2162 = vld [vmem:[%s7 + $0x528] sm:$0xff]
        %v2163 = vld [vmem:[%s7 + $0x530] sm:$0xff]
        %v2164 = vld [vmem:[%s7 + $0x538] sm:$0xff]
        %v2165 = vld [vmem:[%s7 + $0x540] sm:$0xff]
        %v2166 = vld [vmem:[%s7 + $0x548] sm:$0xff]
        %v2167 = vld [vmem:[%s7 + $0x550] sm:$0xff]
        %v2168 = vld [vmem:[%s7 + $0x558] sm:$0xff]
        %v2169 = vld [vmem:[%s7 + $0x560] sm:$0xff]
        %v2170 = vld [vmem:[%s7 + $0x568] sm:$0xff]
        %v2171 = vld [vmem:[%s7 + $0x570] sm:$0xff]
        %v2172 = vld [vmem:[%s7 + $0x578] sm:$0xff]
        %v2173 = vld [vmem:[#allocation4] sm:$0xff]
        %v2174 = vld [vmem:[#allocation4 + $0x8] sm:$0xff]
        %v2175 = vld [vmem:[#allocation4 + $0x10] sm:$0xff]
        %v2176 = vld [vmem:[#allocation4 + $0x18] sm:$0xff]
        %v2177 = vld [vmem:[#allocation4 + $0x20] sm:$0xff]
        %v2178 = vld [vmem:[#allocation4 + $0x28] sm:$0xff]
        %v2179 = vld [vmem:[#allocation4 + $0x30] sm:$0xff]
        %v2180 = vld [vmem:[#allocation4 + $0x38] sm:$0xff]
        %v2181 = vld [vmem:[#allocation4 + $0x40] sm:$0xff]
        %v2182 = vld [vmem:[#allocation4 + $0x48] sm:$0xff]
        %v2183 = vld [vmem:[#allocation4 + $0x50] sm:$0xff]
        %v2184 = vld [vmem:[#allocation4 + $0x58] sm:$0xff]
        %v2185 = vld [vmem:[#allocation4 + $0x60] sm:$0xff]
        %v2186 = vld [vmem:[#allocation4 + $0x68] sm:$0xff]
        %v2187 = vld [vmem:[#allocation4 + $0x70] sm:$0xff]
        %v2188 = vld [vmem:[#allocation4 + $0x78] sm:$0xff]
        %v2189 = vld [vmem:[#allocation4 + $0x80] sm:$0xff]
        %v2190 = vld [vmem:[#allocation4 + $0x88] sm:$0xff]
        %v2191 = vld [vmem:[#allocation4 + $0x90] sm:$0xff]
        %v2192 = vld [vmem:[#allocation4 + $0x98] sm:$0xff]
        %v2193 = vld [vmem:[#allocation4 + $0xa0] sm:$0xff]
        %v2194 = vld [vmem:[#allocation4 + $0xa8] sm:$0xff]
        %v2195 = vld [vmem:[#allocation4 + $0xb0] sm:$0xff]
        %v2196 = vld [vmem:[#allocation4 + $0xb8] sm:$0xff]
        %v2197 = vld [vmem:[#allocation4 + $0xc0] sm:$0xff]
        %v2198 = vld [vmem:[#allocation4 + $0xc8] sm:$0xff]
        %v2199 = vld [vmem:[#allocation4 + $0xd0] sm:$0xff]
        %v2200 = vld [vmem:[#allocation4 + $0xd8] sm:$0xff]
        %v2201 = vld [vmem:[#allocation4 + $0xe0] sm:$0xff]
        %v2202 = vld [vmem:[#allocation4 + $0xe8] sm:$0xff]
        %v2203 = vld [vmem:[#allocation4 + $0xf0] sm:$0xff]
        %v2204 = vld [vmem:[#allocation4 + $0xf8] sm:$0xff]
        %v2205 = vld [vmem:[#allocation4 + $0x100] sm:$0xff]
        %v2206 = vld [vmem:[#allocation4 + $0x108] sm:$0xff]
        %v2207 = vld [vmem:[#allocation4 + $0x110] sm:$0xff]
        %v2208 = vld [vmem:[#allocation4 + $0x118] sm:$0xff]
        %v2209 = vld [vmem:[#allocation4 + $0x120] sm:$0xff]
        %v2210 = vld [vmem:[#allocation4 + $0x128] sm:$0xff]
        %v2211 = vld [vmem:[#allocation4 + $0x130] sm:$0xff]
        %v2212 = vld [vmem:[#allocation4 + $0x138] sm:$0xff]
        %v2213 = vld [vmem:[#allocation4 + $0x140] sm:$0xff]
        %v2214 = vld [vmem:[#allocation4 + $0x148] sm:$0xff]
        %v2215 = vld [vmem:[#allocation4 + $0x150] sm:$0xff]
        %v2216 = vld [vmem:[#allocation4 + $0x158] sm:$0xff]
        %v2217 = vld [vmem:[#allocation4 + $0x160] sm:$0xff]
        %v2218 = vld [vmem:[#allocation4 + $0x168] sm:$0xff]
        %v2219 = vld [vmem:[#allocation4 + $0x170] sm:$0xff]
        %v2220 = vld [vmem:[#allocation4 + $0x178] sm:$0xff]
        %v2221 = vld [vmem:[#allocation4 + $0x180] sm:$0xff]
        %v2222 = vld [vmem:[#allocation4 + $0x188] sm:$0xff]
        %v2223 = vld [vmem:[#allocation4 + $0x190] sm:$0xff]
        %v2224 = vld [vmem:[#allocation4 + $0x198] sm:$0xff]
        %v2225 = vld [vmem:[#allocation4 + $0x1a0] sm:$0xff]
        %v2226 = vld [vmem:[#allocation4 + $0x1a8] sm:$0xff]
        %v2227 = vld [vmem:[#allocation4 + $0x1b0] sm:$0xff]
        %v2228 = vld [vmem:[#allocation4 + $0x1b8] sm:$0xff]
        %v2229 = vld [vmem:[#allocation4 + $0x1c0] sm:$0xff]
        %v2230 = vld [vmem:[#allocation4 + $0x1c8] sm:$0xff]
        %v2231 = vld [vmem:[#allocation4 + $0x1d0] sm:$0xff]
        %v2232 = vld [vmem:[#allocation4 + $0x1d8] sm:$0xff]
        %v2233 = vld [vmem:[#allocation4 + $0x1e0] sm:$0xff]
        %v2234 = vld [vmem:[#allocation4 + $0x1e8] sm:$0xff]
        %v2235 = vld [vmem:[#allocation4 + $0x1f0] sm:$0xff]
        %v2236 = vld [vmem:[#allocation4 + $0x1f8] sm:$0xff]
        %v2237 = vld [vmem:[#allocation4 + $0x200] sm:$0xff]
        %v2238 = vld [vmem:[#allocation4 + $0x208] sm:$0xff]
        %v2239 = vld [vmem:[#allocation4 + $0x210] sm:$0xff]
        %v2240 = vld [vmem:[#allocation4 + $0x218] sm:$0xff]
        %v2241 = vld [vmem:[#allocation4 + $0x220] sm:$0xff]
        %v2242 = vld [vmem:[#allocation4 + $0x228] sm:$0xff]
        %v2243 = vld [vmem:[#allocation4 + $0x230] sm:$0xff]
        %v2244 = vld [vmem:[#allocation4 + $0x238] sm:$0xff]
        %v2245 = vld [vmem:[#allocation4 + $0x240] sm:$0xff]
        %v2246 = vld [vmem:[#allocation4 + $0x248] sm:$0xff]
        %v2247 = vld [vmem:[#allocation4 + $0x250] sm:$0xff]
        %v2248 = vld [vmem:[#allocation4 + $0x258] sm:$0xff]
        %v2249 = vld [vmem:[#allocation4 + $0x260] sm:$0xff]
        %v2250 = vld [vmem:[#allocation4 + $0x268] sm:$0xff]
        %v2251 = vld [vmem:[#allocation4 + $0x270] sm:$0xff]
        %v2252 = vld [vmem:[#allocation4 + $0x278] sm:$0xff]
        %v2253 = vld [vmem:[#allocation4 + $0x280] sm:$0xff]
        %v2254 = vld [vmem:[#allocation4 + $0x288] sm:$0xff]
        %v2255 = vld [vmem:[#allocation4 + $0x290] sm:$0xff]
        %v2256 = vld [vmem:[#allocation4 + $0x298] sm:$0xff]
        %v2257 = vld [vmem:[#allocation4 + $0x2a0] sm:$0xff]
        %v2258 = vld [vmem:[#allocation4 + $0x2a8] sm:$0xff]
        %v2259 = vld [vmem:[#allocation4 + $0x2b0] sm:$0xff]
        %v2260 = vld [vmem:[#allocation4 + $0x2b8] sm:$0xff]
        %v2261 = vld [vmem:[#allocation4 + $0x2c0] sm:$0xff]
        %v2262 = vld [vmem:[#allocation4 + $0x2c8] sm:$0xff]
        %v2263 = vld [vmem:[#allocation4 + $0x2d0] sm:$0xff]
        %v2264 = vld [vmem:[#allocation4 + $0x2d8] sm:$0xff]
        %v2265 = vld [vmem:[#allocation4 + $0x2e0] sm:$0xff]
        %v2266 = vld [vmem:[#allocation4 + $0x2e8] sm:$0xff]
        %v2267 = vld [vmem:[#allocation4 + $0x2f0] sm:$0xff]
        %v2268 = vld [vmem:[#allocation4 + $0x2f8] sm:$0xff]
        %v2269 = vld [vmem:[#allocation4 + $0x300] sm:$0xff]
        %v2270 = vld [vmem:[#allocation4 + $0x308] sm:$0xff]
        %v2271 = vld [vmem:[#allocation4 + $0x310] sm:$0xff]
        %v2272 = vld [vmem:[#allocation4 + $0x318] sm:$0xff]
        %v2273 = vld [vmem:[#allocation4 + $0x320] sm:$0xff]
        %v2274 = vld [vmem:[#allocation4 + $0x328] sm:$0xff]
        %v2275 = vld [vmem:[#allocation4 + $0x330] sm:$0xff]
        %v2276 = vld [vmem:[#allocation4 + $0x338] sm:$0xff]
        %v2277 = vld [vmem:[#allocation4 + $0x340] sm:$0xff]
        %v2278 = vld [vmem:[#allocation4 + $0x348] sm:$0xff]
        %v2279 = vld [vmem:[#allocation4 + $0x350] sm:$0xff]
        %v2280 = vld [vmem:[#allocation4 + $0x358] sm:$0xff]
        %v2281 = vld [vmem:[#allocation4 + $0x360] sm:$0xff]
        %v2282 = vld [vmem:[#allocation4 + $0x368] sm:$0xff]
        %v2283 = vld [vmem:[#allocation4 + $0x370] sm:$0xff]
        %v2284 = vld [vmem:[#allocation4 + $0x378] sm:$0xff]
        %v2285 = vld [vmem:[#allocation4 + $0x380] sm:$0xff]
        %v2286 = vld [vmem:[#allocation4 + $0x388] sm:$0xff]
        %v2287 = vld [vmem:[#allocation4 + $0x390] sm:$0xff]
        %v2288 = vld [vmem:[#allocation4 + $0x398] sm:$0xff]
        %v2289 = vld [vmem:[#allocation4 + $0x3a0] sm:$0xff]
        %v2290 = vld [vmem:[#allocation4 + $0x3a8] sm:$0xff]
        %v2291 = vld [vmem:[#allocation4 + $0x3b0] sm:$0xff]
        %v2292 = vld [vmem:[#allocation4 + $0x3b8] sm:$0xff]
        %v2293 = vld [vmem:[#allocation4 + $0x3c0] sm:$0xff]
        %v2294 = vld [vmem:[#allocation4 + $0x3c8] sm:$0xff]
        %v2295 = vld [vmem:[#allocation4 + $0x3d0] sm:$0xff]
        %v2296 = vld [vmem:[#allocation4 + $0x3d8] sm:$0xff]
        %v2297 = vld [vmem:[#allocation4 + $0x3e0] sm:$0xff]
        %v2298 = vld [vmem:[#allocation4 + $0x3e8] sm:$0xff]
        %v2299 = vld [vmem:[#allocation4 + $0x3f0] sm:$0xff]
        %v2300 = vld [vmem:[#allocation4 + $0x3f8] sm:$0xff]
        %v2301 = vld [vmem:[#allocation4 + $0x400] sm:$0xff]
        %v2302 = vld [vmem:[#allocation4 + $0x408] sm:$0xff]
        %v2303 = vld [vmem:[#allocation4 + $0x410] sm:$0xff]
        %v2304 = vld [vmem:[#allocation4 + $0x418] sm:$0xff]
        %v2305 = vld [vmem:[#allocation4 + $0x420] sm:$0xff]
        %v2306 = vld [vmem:[#allocation4 + $0x428] sm:$0xff]
        %v2307 = vld [vmem:[#allocation4 + $0x430] sm:$0xff]
        %v2308 = vld [vmem:[#allocation4 + $0x438] sm:$0xff]
        %v2309 = vld [vmem:[#allocation4 + $0x440] sm:$0xff]
        %v2310 = vld [vmem:[#allocation4 + $0x448] sm:$0xff]
        %v2311 = vld [vmem:[#allocation4 + $0x450] sm:$0xff]
        %v2312 = vld [vmem:[#allocation4 + $0x458] sm:$0xff]
        %v2313 = vld [vmem:[#allocation4 + $0x460] sm:$0xff]
        %v2314 = vld [vmem:[#allocation4 + $0x468] sm:$0xff]
        %v2315 = vld [vmem:[#allocation4 + $0x470] sm:$0xff]
        %v2316 = vld [vmem:[#allocation4 + $0x478] sm:$0xff]
        %v2317 = vld [vmem:[#allocation4 + $0x480] sm:$0xff]
        %v2318 = vld [vmem:[#allocation4 + $0x488] sm:$0xff]
        %v2319 = vld [vmem:[#allocation4 + $0x490] sm:$0xff]
        %v2320 = vld [vmem:[#allocation4 + $0x498] sm:$0xff]
        %v2321 = vld [vmem:[#allocation4 + $0x4a0] sm:$0xff]
        %v2322 = vld [vmem:[#allocation4 + $0x4a8] sm:$0xff]
        %v2323 = vld [vmem:[#allocation4 + $0x4b0] sm:$0xff]
        %v2324 = vld [vmem:[#allocation4 + $0x4b8] sm:$0xff]
        %v2325 = vld [vmem:[#allocation4 + $0x4c0] sm:$0xff]
        %v2326 = vld [vmem:[#allocation4 + $0x4c8] sm:$0xff]
        %v2327 = vld [vmem:[#allocation4 + $0x4d0] sm:$0xff]
        %v2328 = vld [vmem:[#allocation4 + $0x4d8] sm:$0xff]
        %v2329 = vld [vmem:[#allocation4 + $0x4e0] sm:$0xff]
        %v2330 = vld [vmem:[#allocation4 + $0x4e8] sm:$0xff]
        %v2331 = vld [vmem:[#allocation4 + $0x4f0] sm:$0xff]
        %v2332 = vld [vmem:[#allocation4 + $0x4f8] sm:$0xff]
        %v2333 = vld [vmem:[#allocation4 + $0x500] sm:$0xff]
        %v2334 = vld [vmem:[#allocation4 + $0x508] sm:$0xff]
        %v2335 = vld [vmem:[#allocation4 + $0x510] sm:$0xff]
        %v2336 = vld [vmem:[#allocation4 + $0x518] sm:$0xff]
        %v2337 = vld [vmem:[#allocation4 + $0x520] sm:$0xff]
        %v2338 = vld [vmem:[#allocation4 + $0x528] sm:$0xff]
        %v2339 = vld [vmem:[#allocation4 + $0x530] sm:$0xff]
        %v2340 = vld [vmem:[#allocation4 + $0x538] sm:$0xff]
        %v2341 = vld [vmem:[#allocation4 + $0x540] sm:$0xff]
        %v2342 = vld [vmem:[#allocation4 + $0x548] sm:$0xff]
        %v2343 = vld [vmem:[#allocation4 + $0x550] sm:$0xff]
        %v2344 = vld [vmem:[#allocation4 + $0x558] sm:$0xff]
        %v2345 = vld [vmem:[#allocation4 + $0x560] sm:$0xff]
        %v2346 = vld [vmem:[#allocation4 + $0x568] sm:$0xff]
        %v2347 = vld [vmem:[#allocation4 + $0x570] sm:$0xff]
        %v2348 = vld [vmem:[#allocation4 + $0x578] sm:$0xff]
        %v2349 = vld [vmem:[%s8] sm:$0xff]
        %v2350 = vld [vmem:[%s8 + $0x8] sm:$0xff]
        %v2351 = vld [vmem:[%s8 + $0x10] sm:$0xff]
        %v2352 = vld [vmem:[%s8 + $0x18] sm:$0xff]
        %v2353 = vld [vmem:[%s8 + $0x20] sm:$0xff]
        %v2354 = vld [vmem:[%s8 + $0x28] sm:$0xff]
        %v2355 = vld [vmem:[%s8 + $0x30] sm:$0xff]
        %v2356 = vld [vmem:[%s8 + $0x38] sm:$0xff]
        %v2357 = vld [vmem:[%s8 + $0x40] sm:$0xff]
        %v2358 = vld [vmem:[%s8 + $0x48] sm:$0xff]
        %v2359 = vld [vmem:[%s8 + $0x50] sm:$0xff]
        %v2360 = vld [vmem:[%s8 + $0x58] sm:$0xff]
        %v2361 = vld [vmem:[%s8 + $0x60] sm:$0xff]
        %v2362 = vld [vmem:[%s8 + $0x68] sm:$0xff]
        %v2363 = vld [vmem:[%s8 + $0x70] sm:$0xff]
        %v2364 = vld [vmem:[%s8 + $0x78] sm:$0xff]
        %2366 = vset.pattern.permute.xlu0 0
        %2367 = vperm.xlu0 %2366, %v2349
        %v2368 = vpop.permute.xlu0 %2367
        %2371 = vset.pattern.permute.xlu0 0
        %2372 = vperm.xlu0 %2371, %v2350
        %v2373 = vpop.permute.xlu0 %2372
        %2376 = vset.pattern.permute.xlu0 0
        %2377 = vperm.xlu0 %2376, %v2351
        %v2378 = vpop.permute.xlu0 %2377
        %2381 = vset.pattern.permute.xlu0 0
        %2382 = vperm.xlu0 %2381, %v2352
        %v2383 = vpop.permute.xlu0 %2382
        %2386 = vset.pattern.permute.xlu0 0
        %2387 = vperm.xlu0 %2386, %v2353
        %v2388 = vpop.permute.xlu0 %2387
        %2391 = vset.pattern.permute.xlu0 0
        %2392 = vperm.xlu0 %2391, %v2354
        %v2393 = vpop.permute.xlu0 %2392
        %2396 = vset.pattern.permute.xlu0 0
        %2397 = vperm.xlu0 %2396, %v2355
        %v2398 = vpop.permute.xlu0 %2397
        %2401 = vset.pattern.permute.xlu0 0
        %2402 = vperm.xlu0 %2401, %v2356
        %v2403 = vpop.permute.xlu0 %2402
        %2406 = vset.pattern.permute.xlu0 0
        %2407 = vperm.xlu0 %2406, %v2357
        %v2408 = vpop.permute.xlu0 %2407
        %2411 = vset.pattern.permute.xlu0 0
        %2412 = vperm.xlu0 %2411, %v2358
        %v2413 = vpop.permute.xlu0 %2412
        %2416 = vset.pattern.permute.xlu0 0
        %2417 = vperm.xlu0 %2416, %v2359
        %v2418 = vpop.permute.xlu0 %2417
        %2421 = vset.pattern.permute.xlu0 0
        %2422 = vperm.xlu0 %2421, %v2360
        %v2423 = vpop.permute.xlu0 %2422
        %2426 = vset.pattern.permute.xlu0 0
        %2427 = vperm.xlu0 %2426, %v2361
        %v2428 = vpop.permute.xlu0 %2427
        %2431 = vset.pattern.permute.xlu0 0
        %2432 = vperm.xlu0 %2431, %v2362
        %v2433 = vpop.permute.xlu0 %2432
        %2436 = vset.pattern.permute.xlu0 0
        %2437 = vperm.xlu0 %2436, %v2363
        %v2438 = vpop.permute.xlu0 %2437
        %2441 = vset.pattern.permute.xlu0 0
        %2442 = vperm.xlu0 %2441, %v2364
        %v2443 = vpop.permute.xlu0 %2442
        %v2445 = vlaneseq
        %v2446 = vshrl.u32 %v2445, 7
        %v2447 = vsub.s32 0, %v2446
        %v2448 = vrot.slane %v1996, %v2447
        %v2449 = vmul.f32 %v2368, %v2448
        %v2450 = vmul.f32 %v2373, %v2448
        %v2451 = vmul.f32 %v2378, %v2448
        %v2452 = vmul.f32 %v2383, %v2448
        %v2453 = vmul.f32 %v2388, %v2448
        %v2454 = vmul.f32 %v2393, %v2448
        %v2455 = vmul.f32 %v2398, %v2448
        %v2456 = vmul.f32 %v2403, %v2448
        %v2457 = vmul.f32 %v2408, %v2448
        %v2458 = vmul.f32 %v2413, %v2448
        %v2459 = vmul.f32 %v2418, %v2448
        %v2460 = vmul.f32 %v2423, %v2448
        %v2461 = vmul.f32 %v2428, %v2448
        %v2462 = vmul.f32 %v2433, %v2448
        %v2463 = vmul.f32 %v2438, %v2448
        %v2464 = vmul.f32 %v2443, %v2448
        %2465 = vmatprep.subr.mxu0 0.0
        %2466 = vmatpush1.msra.mxu0 %v2173
        %2467 = vmatprep.subr.mxu0 0.0
        %2468 = vmatpush1.msra.mxu0 %v2174
        %2469 = vmatprep.subr.mxu0 0.0
        %2470 = vmatpush1.msra.mxu0 %v2175
        %2471 = vmatprep.subr.mxu0 0.0
        %2472 = vmatpush1.msra.mxu0 %v2176
        %2473 = vmatprep.subr.mxu0 0.0
        %2474 = vmatpush1.msra.mxu0 %v2177
        %2475 = vmatprep.subr.mxu0 0.0
        %2476 = vmatpush1.msra.mxu0 %v2178
        %2477 = vmatprep.subr.mxu0 0.0
        %2478 = vmatpush1.msra.mxu0 %v2179
        %2479 = vmatprep.subr.mxu0 0.0
        %2480 = vmatpush1.msra.mxu0 %v2180
        %2481 = vmatprep.subr.mxu0 0.0
        %2482 = vmatpush1.msra.mxu0 %v2181
        %2483 = vmatprep.subr.mxu0 0.0
        %2484 = vmatpush1.msra.mxu0 %v2182
        %2485 = vmatprep.subr.mxu0 0.0
        %2486 = vmatpush1.msra.mxu0 %v2183
        %2487 = vmatprep.subr.mxu0 0.0
        %2488 = vmatpush1.msra.mxu0 %v2184
        %2489 = vmatprep.subr.mxu0 0.0
        %2490 = vmatpush1.msra.mxu0 %v2185
        %2491 = vmatprep.subr.mxu0 0.0
        %2492 = vmatpush1.msra.mxu0 %v2186
        %2493 = vmatprep.subr.mxu0 0.0
        %2494 = vmatpush1.msra.mxu0 %v2187
        %2495 = vmatprep.subr.mxu0 0.0
        %2496 = vmatpush1.msra.mxu0 %v2188
        %2497 = vmatprep.subr.mxu0 0.0
        %2498 = vmatpush1.msra.mxu0 %v2189
        %2499 = vmatprep.subr.mxu0 0.0
        %2500 = vmatpush1.msra.mxu0 %v2190
        %2501 = vmatprep.subr.mxu0 0.0
        %2502 = vmatpush1.msra.mxu0 %v2191
        %2503 = vmatprep.subr.mxu0 0.0
        %2504 = vmatpush1.msra.mxu0 %v2192
        %2505 = vmatprep.subr.mxu0 0.0
        %2506 = vmatpush1.msra.mxu0 %v2193
        %2507 = vmatprep.subr.mxu0 0.0
        %2508 = vmatpush1.msra.mxu0 %v2194
        %2509 = vmatprep.subr.mxu0 0.0
        %2510 = vmatpush1.msra.mxu0 %v2195
        %2511 = vmatprep.subr.mxu0 0.0
        %2512 = vmatpush1.msra.mxu0 %v2196
        %2513 = vmatprep.subr.mxu0 0.0
        %2514 = vmatpush1.msra.mxu0 %v2197
        %2515 = vmatprep.subr.mxu0 0.0
        %2516 = vmatpush1.msra.mxu0 %v2198
        %2517 = vmatprep.subr.mxu0 0.0
        %2518 = vmatpush1.msra.mxu0 %v2199
        %2519 = vmatprep.subr.mxu0 0.0
        %2520 = vmatpush1.msra.mxu0 %v2200
        %2521 = vmatprep.subr.mxu0 0.0
        %2522 = vmatpush1.msra.mxu0 %v2201
        %2523 = vmatprep.subr.mxu0 0.0
        %2524 = vmatpush1.msra.mxu0 %v2202
        %2525 = vmatprep.subr.mxu0 0.0
        %2526 = vmatpush1.msra.mxu0 %v2203
        %2527 = vmatprep.subr.mxu0 0.0
        %2528 = vmatpush1.msra.mxu0 %v2204
        %2529 = vmatprep.mubr.f32.mxu0 %v1998
        %2530 = vmatmul.mubr.f32.gmra.mrb[0].mxu0 %v1997
        %v2531 = vpop.f32.mrb[0].mxu0
        %v2532 = vadd.f32 %v2449, %v2531
        %v2533 = vpop.f32.mrb[0].mxu0
        %2534 = vmatprep.mubr.f32.mxu0 %v2009
        %2535 = vmatmul.mubr.f32.gmra.mrb[0].mxu0 %v2008
        %v2536 = vpop.f32.mrb[0].mxu0
        %v2537 = vadd.f32 %v2450, %v2536
        %v2538 = vpop.f32.mrb[0].mxu0
        %2539 = vmatprep.mubr.f32.mxu0 %v2020
        %2540 = vmatmul.mubr.f32.gmra.mrb[0].mxu0 %v2019
        %v2541 = vpop.f32.mrb[0].mxu0
        %v2542 = vadd.f32 %v2451, %v2541
        %v2543 = vpop.f32.mrb[0].mxu0
        %2544 = vmatprep.mubr.f32.mxu0 %v2031
        %2545 = vmatmul.mubr.f32.gmra.mrb[0].mxu0 %v2030
        %v2546 = vpop.f32.mrb[0].mxu0
        %v2547 = vadd.f32 %v2452, %v2546
        %v2548 = vpop.f32.mrb[0].mxu0
        %2549 = vmatprep.mubr.f32.mxu0 %v2042
        %2550 = vmatmul.mubr.f32.gmra.mrb[0].mxu0 %v2041
        %v2551 = vpop.f32.mrb[0].mxu0
        %v2552 = vadd.f32 %v2453, %v2551
        %v2553 = vpop.f32.mrb[0].mxu0
        %2554 = vmatprep.mubr.f32.mxu0 %v2053
        %2555 = vmatmul.mubr.f32.gmra.mrb[0].mxu0 %v2052
        %v2556 = vpop.f32.mrb[0].mxu0
        %v2557 = vadd.f32 %v2454, %v2556
        %v2558 = vpop.f32.mrb[0].mxu0
        %2559 = vmatprep.mubr.f32.mxu0 %v2064
        %2560 = vmatmul.mubr.f32.gmra.mrb[0].mxu0 %v2063
        %v2561 = vpop.f32.mrb[0].mxu0
        %v2562 = vadd.f32 %v2455, %v2561
        %v2563 = vpop.f32.mrb[0].mxu0
        %2564 = vmatprep.mubr.f32.mxu0 %v2075
        %2565 = vmatmul.mubr.f32.gmra.mrb[0].mxu0 %v2074
        %v2566 = vpop.f32.mrb[0].mxu0
        %v2567 = vadd.f32 %v2456, %v2566
        %v2568 = vpop.f32.mrb[0].mxu0
        %2569 = vmatprep.mubr.f32.mxu0 %v2086
        %2570 = vmatmul.mubr.f32.gmra.mrb[0].mxu0 %v2085
        %v2571 = vpop.f32.mrb[0].mxu0
        %v2572 = vadd.f32 %v2457, %v2571
        %v2573 = vpop.f32.mrb[0].mxu0
        %2574 = vmatprep.mubr.f32.mxu0 %v2097
        %2575 = vmatmul.mubr.f32.gmra.mrb[0].mxu0 %v2096
        %v2576 = vpop.f32.mrb[0].mxu0
        %v2577 = vadd.f32 %v2458, %v2576
        %v2578 = vpop.f32.mrb[0].mxu0
        %2579 = vmatprep.mubr.f32.mxu0 %v2108
        %2580 = vmatmul.mubr.f32.gmra.mrb[0].mxu0 %v2107
        %v2581 = vpop.f32.mrb[0].mxu0
        %v2582 = vadd.f32 %v2459, %v2581
        %v2583 = vpop.f32.mrb[0].mxu0
        %2584 = vmatprep.mubr.f32.mxu0 %v2119
        %2585 = vmatmul.mubr.f32.gmra.mrb[0].mxu0 %v2118
        %v2586 = vpop.f32.mrb[0].mxu0
        %v2587 = vadd.f32 %v2460, %v2586
        %v2588 = vpop.f32.mrb[0].mxu0
        %2589 = vmatprep.mubr.f32.mxu0 %v2130
        %2590 = vmatmul.mubr.f32.gmra.mrb[0].mxu0 %v2129
        %v2591 = vpop.f32.mrb[0].mxu0
        %v2592 = vadd.f32 %v2461, %v2591
        %v2593 = vpop.f32.mrb[0].mxu0
        %2594 = vmatprep.mubr.f32.mxu0 %v2141
        %2595 = vmatmul.mubr.f32.gmra.mrb[0].mxu0 %v2140
        %v2596 = vpop.f32.mrb[0].mxu0
        %v2597 = vadd.f32 %v2462, %v2596
        %v2598 = vpop.f32.mrb[0].mxu0
        %2599 = vmatprep.mubr.f32.mxu0 %v2152
        %2600 = vmatmul.mubr.f32.gmra.mrb[0].mxu0 %v2151
        %v2601 = vpop.f32.mrb[0].mxu0
        %v2602 = vadd.f32 %v2463, %v2601
        %v2603 = vpop.f32.mrb[0].mxu0
        %2604 = vmatprep.mubr.f32.mxu0 %v2163
        %2605 = vmatmul.mubr.f32.gmra.mrb[0].mxu0 %v2162
        %v2606 = vpop.f32.mrb[0].mxu0
        %v2607 = vadd.f32 %v2464, %v2606
        %v2608 = vpop.f32.mrb[0].mxu0
        %2609 = vdwg.mxu0
        %2610 = vmatprep.subr.mxu0 0.0
        %2611 = vmatpush1.msra.mxu0 %v2205
        %2612 = vmatprep.subr.mxu0 0.0
        %2613 = vmatpush1.msra.mxu0 %v2206
        %2614 = vmatprep.subr.mxu0 0.0
        %2615 = vmatpush1.msra.mxu0 %v2207
        %2616 = vmatprep.subr.mxu0 0.0
        %2617 = vmatpush1.msra.mxu0 %v2208
        %2618 = vmatprep.subr.mxu0 0.0
        %2619 = vmatpush1.msra.mxu0 %v2209
        %2620 = vmatprep.subr.mxu0 0.0
        %2621 = vmatpush1.msra.mxu0 %v2210
        %2622 = vmatprep.subr.mxu0 0.0
        %2623 = vmatpush1.msra.mxu0 %v2211
        %2624 = vmatprep.subr.mxu0 0.0
        %2625 = vmatpush1.msra.mxu0 %v2212
        %2626 = vmatprep.subr.mxu0 0.0
        %2627 = vmatpush1.msra.mxu0 %v2213
        %2628 = vmatprep.subr.mxu0 0.0
        %2629 = vmatpush1.msra.mxu0 %v2214
        %2630 = vmatprep.subr.mxu0 0.0
        %2631 = vmatpush1.msra.mxu0 %v2215
        %2632 = vmatprep.subr.mxu0 0.0
        %2633 = vmatpush1.msra.mxu0 %v2216
        %2634 = vmatprep.subr.mxu0 0.0
        %2635 = vmatpush1.msra.mxu0 %v2217
        %2636 = vmatprep.subr.mxu0 0.0
        %2637 = vmatpush1.msra.mxu0 %v2218
        %2638 = vmatprep.subr.mxu0 0.0
        %2639 = vmatpush1.msra.mxu0 %v2219
        %2640 = vmatprep.subr.mxu0 0.0
        %2641 = vmatpush1.msra.mxu0 %v2220
        %2642 = vmatprep.subr.mxu0 0.0
        %2643 = vmatpush1.msra.mxu0 %v2221
        %2644 = vmatprep.subr.mxu0 0.0
        %2645 = vmatpush1.msra.mxu0 %v2222
        %2646 = vmatprep.subr.mxu0 0.0
        %2647 = vmatpush1.msra.mxu0 %v2223
        %2648 = vmatprep.subr.mxu0 0.0
        %2649 = vmatpush1.msra.mxu0 %v2224
        %2650 = vmatprep.subr.mxu0 0.0
        %2651 = vmatpush1.msra.mxu0 %v2225
        %2652 = vmatprep.subr.mxu0 0.0
        %2653 = vmatpush1.msra.mxu0 %v2226
        %2654 = vmatprep.subr.mxu0 0.0
        %2655 = vmatpush1.msra.mxu0 %v2227
        %2656 = vmatprep.subr.mxu0 0.0
        %2657 = vmatpush1.msra.mxu0 %v2228
        %2658 = vmatprep.subr.mxu0 0.0
        %2659 = vmatpush1.msra.mxu0 %v2229
        %2660 = vmatprep.subr.mxu0 0.0
        %2661 = vmatpush1.msra.mxu0 %v2230
        %2662 = vmatprep.subr.mxu0 0.0
        %2663 = vmatpush1.msra.mxu0 %v2231
        %2664 = vmatprep.subr.mxu0 0.0
        %2665 = vmatpush1.msra.mxu0 %v2232
        %2666 = vmatprep.subr.mxu0 0.0
        %2667 = vmatpush1.msra.mxu0 %v2233
        %2668 = vmatprep.subr.mxu0 0.0
        %2669 = vmatpush1.msra.mxu0 %v2234
        %2670 = vmatprep.subr.mxu0 0.0
        %2671 = vmatpush1.msra.mxu0 %v2235
        %2672 = vmatprep.subr.mxu0 0.0
        %2673 = vmatpush1.msra.mxu0 %v2236
        %2674 = vmatprep.mubr.f32.mxu0 %v2000
        %2675 = vmatmul.mubr.f32.gmra.mrb[0].mxu0 %v1999
        %v2676 = vpop.f32.mrb[0].mxu0
        %v2677 = vadd.f32 %v2532, %v2676
        %v2678 = vpop.f32.mrb[0].mxu0
        %2679 = vmatprep.mubr.f32.mxu0 %v2011
        %2680 = vmatmul.mubr.f32.gmra.mrb[0].mxu0 %v2010
        %v2681 = vpop.f32.mrb[0].mxu0
        %v2682 = vadd.f32 %v2537, %v2681
        %v2683 = vpop.f32.mrb[0].mxu0
        %2684 = vmatprep.mubr.f32.mxu0 %v2022
        %2685 = vmatmul.mubr.f32.gmra.mrb[0].mxu0 %v2021
        %v2686 = vpop.f32.mrb[0].mxu0
        %v2687 = vadd.f32 %v2542, %v2686
        %v2688 = vpop.f32.mrb[0].mxu0
        %2689 = vmatprep.mubr.f32.mxu0 %v2033
        %2690 = vmatmul.mubr.f32.gmra.mrb[0].mxu0 %v2032
        %v2691 = vpop.f32.mrb[0].mxu0
        %v2692 = vadd.f32 %v2547, %v2691
        %v2693 = vpop.f32.mrb[0].mxu0
        %2694 = vmatprep.mubr.f32.mxu0 %v2044
        %2695 = vmatmul.mubr.f32.gmra.mrb[0].mxu0 %v2043
        %v2696 = vpop.f32.mrb[0].mxu0
        %v2697 = vadd.f32 %v2552, %v2696
        %v2698 = vpop.f32.mrb[0].mxu0
        %2699 = vmatprep.mubr.f32.mxu0 %v2055
        %2700 = vmatmul.mubr.f32.gmra.mrb[0].mxu0 %v2054
        %v2701 = vpop.f32.mrb[0].mxu0
        %v2702 = vadd.f32 %v2557, %v2701
        %v2703 = vpop.f32.mrb[0].mxu0
        %2704 = vmatprep.mubr.f32.mxu0 %v2066
        %2705 = vmatmul.mubr.f32.gmra.mrb[0].mxu0 %v2065
        %v2706 = vpop.f32.mrb[0].mxu0
        %v2707 = vadd.f32 %v2562, %v2706
        %v2708 = vpop.f32.mrb[0].mxu0
        %2709 = vmatprep.mubr.f32.mxu0 %v2077
        %2710 = vmatmul.mubr.f32.gmra.mrb[0].mxu0 %v2076
        %v2711 = vpop.f32.mrb[0].mxu0
        %v2712 = vadd.f32 %v2567, %v2711
        %v2713 = vpop.f32.mrb[0].mxu0
        %2714 = vmatprep.mubr.f32.mxu0 %v2088
        %2715 = vmatmul.mubr.f32.gmra.mrb[0].mxu0 %v2087
        %v2716 = vpop.f32.mrb[0].mxu0
        %v2717 = vadd.f32 %v2572, %v2716
        %v2718 = vpop.f32.mrb[0].mxu0
        %2719 = vmatprep.mubr.f32.mxu0 %v2099
        %2720 = vmatmul.mubr.f32.gmra.mrb[0].mxu0 %v2098
        %v2721 = vpop.f32.mrb[0].mxu0
        %v2722 = vadd.f32 %v2577, %v2721
        %v2723 = vpop.f32.mrb[0].mxu0
        %2724 = vmatprep.mubr.f32.mxu0 %v2110
        %2725 = vmatmul.mubr.f32.gmra.mrb[0].mxu0 %v2109
        %v2726 = vpop.f32.mrb[0].mxu0
        %v2727 = vadd.f32 %v2582, %v2726
        %v2728 = vpop.f32.mrb[0].mxu0
        %2729 = vmatprep.mubr.f32.mxu0 %v2121
        %2730 = vmatmul.mubr.f32.gmra.mrb[0].mxu0 %v2120
        %v2731 = vpop.f32.mrb[0].mxu0
        %v2732 = vadd.f32 %v2587, %v2731
        %v2733 = vpop.f32.mrb[0].mxu0
        %2734 = vmatprep.mubr.f32.mxu0 %v2132
        %2735 = vmatmul.mubr.f32.gmra.mrb[0].mxu0 %v2131
        %v2736 = vpop.f32.mrb[0].mxu0
        %v2737 = vadd.f32 %v2592, %v2736
        %v2738 = vpop.f32.mrb[0].mxu0
        %2739 = vmatprep.mubr.f32.mxu0 %v2143
        %2740 = vmatmul.mubr.f32.gmra.mrb[0].mxu0 %v2142
        %v2741 = vpop.f32.mrb[0].mxu0
        %v2742 = vadd.f32 %v2597, %v2741
        %v2743 = vpop.f32.mrb[0].mxu0
        %2744 = vmatprep.mubr.f32.mxu0 %v2154
        %2745 = vmatmul.mubr.f32.gmra.mrb[0].mxu0 %v2153
        %v2746 = vpop.f32.mrb[0].mxu0
        %v2747 = vadd.f32 %v2602, %v2746
        %v2748 = vpop.f32.mrb[0].mxu0
        %2749 = vmatprep.mubr.f32.mxu0 %v2165
        %2750 = vmatmul.mubr.f32.gmra.mrb[0].mxu0 %v2164
        %v2751 = vpop.f32.mrb[0].mxu0
        %v2752 = vadd.f32 %v2607, %v2751
        %v2753 = vpop.f32.mrb[0].mxu0
        %2754 = vdwg.mxu0
        %2755 = vmatprep.subr.mxu0 0.0
        %2756 = vmatpush1.msra.mxu0 %v2237
        %2757 = vmatprep.subr.mxu0 0.0
        %2758 = vmatpush1.msra.mxu0 %v2238
        %2759 = vmatprep.subr.mxu0 0.0
        %2760 = vmatpush1.msra.mxu0 %v2239
        %2761 = vmatprep.subr.mxu0 0.0
        %2762 = vmatpush1.msra.mxu0 %v2240
        %2763 = vmatprep.subr.mxu0 0.0
        %2764 = vmatpush1.msra.mxu0 %v2241
        %2765 = vmatprep.subr.mxu0 0.0
        %2766 = vmatpush1.msra.mxu0 %v2242
        %2767 = vmatprep.subr.mxu0 0.0
        %2768 = vmatpush1.msra.mxu0 %v2243
        %2769 = vmatprep.subr.mxu0 0.0
        %2770 = vmatpush1.msra.mxu0 %v2244
        %2771 = vmatprep.subr.mxu0 0.0
        %2772 = vmatpush1.msra.mxu0 %v2245
        %2773 = vmatprep.subr.mxu0 0.0
        %2774 = vmatpush1.msra.mxu0 %v2246
        %2775 = vmatprep.subr.mxu0 0.0
        %2776 = vmatpush1.msra.mxu0 %v2247
        %2777 = vmatprep.subr.mxu0 0.0
        %2778 = vmatpush1.msra.mxu0 %v2248
        %2779 = vmatprep.subr.mxu0 0.0
        %2780 = vmatpush1.msra.mxu0 %v2249
        %2781 = vmatprep.subr.mxu0 0.0
        %2782 = vmatpush1.msra.mxu0 %v2250
        %2783 = vmatprep.subr.mxu0 0.0
        %2784 = vmatpush1.msra.mxu0 %v2251
        %2785 = vmatprep.subr.mxu0 0.0
        %2786 = vmatpush1.msra.mxu0 %v2252
        %2787 = vmatprep.subr.mxu0 0.0
        %2788 = vmatpush1.msra.mxu0 %v2253
        %2789 = vmatprep.subr.mxu0 0.0
        %2790 = vmatpush1.msra.mxu0 %v2254
        %2791 = vmatprep.subr.mxu0 0.0
        %2792 = vmatpush1.msra.mxu0 %v2255
        %2793 = vmatprep.subr.mxu0 0.0
        %2794 = vmatpush1.msra.mxu0 %v2256
        %2795 = vmatprep.subr.mxu0 0.0
        %2796 = vmatpush1.msra.mxu0 %v2257
        %2797 = vmatprep.subr.mxu0 0.0
        %2798 = vmatpush1.msra.mxu0 %v2258
        %2799 = vmatprep.subr.mxu0 0.0
        %2800 = vmatpush1.msra.mxu0 %v2259
        %2801 = vmatprep.subr.mxu0 0.0
        %2802 = vmatpush1.msra.mxu0 %v2260
        %2803 = vmatprep.subr.mxu0 0.0
        %2804 = vmatpush1.msra.mxu0 %v2261
        %2805 = vmatprep.subr.mxu0 0.0
        %2806 = vmatpush1.msra.mxu0 %v2262
        %2807 = vmatprep.subr.mxu0 0.0
        %2808 = vmatpush1.msra.mxu0 %v2263
        %2809 = vmatprep.subr.mxu0 0.0
        %2810 = vmatpush1.msra.mxu0 %v2264
        %2811 = vmatprep.subr.mxu0 0.0
        %2812 = vmatpush1.msra.mxu0 %v2265
        %2813 = vmatprep.subr.mxu0 0.0
        %2814 = vmatpush1.msra.mxu0 %v2266
        %2815 = vmatprep.subr.mxu0 0.0
        %2816 = vmatpush1.msra.mxu0 %v2267
        %2817 = vmatprep.subr.mxu0 0.0
        %2818 = vmatpush1.msra.mxu0 %v2268
        %2819 = vmatprep.mubr.f32.mxu0 %v2002
        %2820 = vmatmul.mubr.f32.gmra.mrb[0].mxu0 %v2001
        %v2821 = vpop.f32.mrb[0].mxu0
        %v2822 = vadd.f32 %v2677, %v2821
        %v2823 = vpop.f32.mrb[0].mxu0
        %2824 = vmatprep.mubr.f32.mxu0 %v2013
        %2825 = vmatmul.mubr.f32.gmra.mrb[0].mxu0 %v2012
        %v2826 = vpop.f32.mrb[0].mxu0
        %v2827 = vadd.f32 %v2682, %v2826
        %v2828 = vpop.f32.mrb[0].mxu0
        %2829 = vmatprep.mubr.f32.mxu0 %v2024
        %2830 = vmatmul.mubr.f32.gmra.mrb[0].mxu0 %v2023
        %v2831 = vpop.f32.mrb[0].mxu0
        %v2832 = vadd.f32 %v2687, %v2831
        %v2833 = vpop.f32.mrb[0].mxu0
        %2834 = vmatprep.mubr.f32.mxu0 %v2035
        %2835 = vmatmul.mubr.f32.gmra.mrb[0].mxu0 %v2034
        %v2836 = vpop.f32.mrb[0].mxu0
        %v2837 = vadd.f32 %v2692, %v2836
        %v2838 = vpop.f32.mrb[0].mxu0
        %2839 = vmatprep.mubr.f32.mxu0 %v2046
        %2840 = vmatmul.mubr.f32.gmra.mrb[0].mxu0 %v2045
        %v2841 = vpop.f32.mrb[0].mxu0
        %v2842 = vadd.f32 %v2697, %v2841
        %v2843 = vpop.f32.mrb[0].mxu0
        %2844 = vmatprep.mubr.f32.mxu0 %v2057
        %2845 = vmatmul.mubr.f32.gmra.mrb[0].mxu0 %v2056
        %v2846 = vpop.f32.mrb[0].mxu0
        %v2847 = vadd.f32 %v2702, %v2846
        %v2848 = vpop.f32.mrb[0].mxu0
        %2849 = vmatprep.mubr.f32.mxu0 %v2068
        %2850 = vmatmul.mubr.f32.gmra.mrb[0].mxu0 %v2067
        %v2851 = vpop.f32.mrb[0].mxu0
        %v2852 = vadd.f32 %v2707, %v2851
        %v2853 = vpop.f32.mrb[0].mxu0
        %2854 = vmatprep.mubr.f32.mxu0 %v2079
        %2855 = vmatmul.mubr.f32.gmra.mrb[0].mxu0 %v2078
        %v2856 = vpop.f32.mrb[0].mxu0
        %v2857 = vadd.f32 %v2712, %v2856
        %v2858 = vpop.f32.mrb[0].mxu0
        %2859 = vmatprep.mubr.f32.mxu0 %v2090
        %2860 = vmatmul.mubr.f32.gmra.mrb[0].mxu0 %v2089
        %v2861 = vpop.f32.mrb[0].mxu0
        %v2862 = vadd.f32 %v2717, %v2861
        %v2863 = vpop.f32.mrb[0].mxu0
        %2864 = vmatprep.mubr.f32.mxu0 %v2101
        %2865 = vmatmul.mubr.f32.gmra.mrb[0].mxu0 %v2100
        %v2866 = vpop.f32.mrb[0].mxu0
        %v2867 = vadd.f32 %v2722, %v2866
        %v2868 = vpop.f32.mrb[0].mxu0
        %2869 = vmatprep.mubr.f32.mxu0 %v2112
        %2870 = vmatmul.mubr.f32.gmra.mrb[0].mxu0 %v2111
        %v2871 = vpop.f32.mrb[0].mxu0
        %v2872 = vadd.f32 %v2727, %v2871
        %v2873 = vpop.f32.mrb[0].mxu0
        %2874 = vmatprep.mubr.f32.mxu0 %v2123
        %2875 = vmatmul.mubr.f32.gmra.mrb[0].mxu0 %v2122
        %v2876 = vpop.f32.mrb[0].mxu0
        %v2877 = vadd.f32 %v2732, %v2876
        %v2878 = vpop.f32.mrb[0].mxu0
        %2879 = vmatprep.mubr.f32.mxu0 %v2134
        %2880 = vmatmul.mubr.f32.gmra.mrb[0].mxu0 %v2133
        %v2881 = vpop.f32.mrb[0].mxu0
        %v2882 = vadd.f32 %v2737, %v2881
        %v2883 = vpop.f32.mrb[0].mxu0
        %2884 = vmatprep.mubr.f32.mxu0 %v2145
        %2885 = vmatmul.mubr.f32.gmra.mrb[0].mxu0 %v2144
        %v2886 = vpop.f32.mrb[0].mxu0
        %v2887 = vadd.f32 %v2742, %v2886
        %v2888 = vpop.f32.mrb[0].mxu0
        %2889 = vmatprep.mubr.f32.mxu0 %v2156
        %2890 = vmatmul.mubr.f32.gmra.mrb[0].mxu0 %v2155
        %v2891 = vpop.f32.mrb[0].mxu0
        %v2892 = vadd.f32 %v2747, %v2891
        %v2893 = vpop.f32.mrb[0].mxu0
        %2894 = vmatprep.mubr.f32.mxu0 %v2167
        %2895 = vmatmul.mubr.f32.gmra.mrb[0].mxu0 %v2166
        %v2896 = vpop.f32.mrb[0].mxu0
        %v2897 = vadd.f32 %v2752, %v2896
        %v2898 = vpop.f32.mrb[0].mxu0
        %2899 = vdwg.mxu0
        %2900 = vmatprep.subr.mxu0 0.0
        %2901 = vmatpush1.msra.mxu0 %v2269
        %2902 = vmatprep.subr.mxu0 0.0
        %2903 = vmatpush1.msra.mxu0 %v2270
        %2904 = vmatprep.subr.mxu0 0.0
        %2905 = vmatpush1.msra.mxu0 %v2271
        %2906 = vmatprep.subr.mxu0 0.0
        %2907 = vmatpush1.msra.mxu0 %v2272
        %2908 = vmatprep.subr.mxu0 0.0
        %2909 = vmatpush1.msra.mxu0 %v2273
        %2910 = vmatprep.subr.mxu0 0.0
        %2911 = vmatpush1.msra.mxu0 %v2274
        %2912 = vmatprep.subr.mxu0 0.0
        %2913 = vmatpush1.msra.mxu0 %v2275
        %2914 = vmatprep.subr.mxu0 0.0
        %2915 = vmatpush1.msra.mxu0 %v2276
        %2916 = vmatprep.subr.mxu0 0.0
        %2917 = vmatpush1.msra.mxu0 %v2277
        %2918 = vmatprep.subr.mxu0 0.0
        %2919 = vmatpush1.msra.mxu0 %v2278
        %2920 = vmatprep.subr.mxu0 0.0
        %2921 = vmatpush1.msra.mxu0 %v2279
        %2922 = vmatprep.subr.mxu0 0.0
        %2923 = vmatpush1.msra.mxu0 %v2280
        %2924 = vmatprep.subr.mxu0 0.0
        %2925 = vmatpush1.msra.mxu0 %v2281
        %2926 = vmatprep.subr.mxu0 0.0
        %2927 = vmatpush1.msra.mxu0 %v2282
        %2928 = vmatprep.subr.mxu0 0.0
        %2929 = vmatpush1.msra.mxu0 %v2283
        %2930 = vmatprep.subr.mxu0 0.0
        %2931 = vmatpush1.msra.mxu0 %v2284
        %2932 = vmatprep.subr.mxu0 0.0
        %2933 = vmatpush1.msra.mxu0 %v2285
        %2934 = vmatprep.subr.mxu0 0.0
        %2935 = vmatpush1.msra.mxu0 %v2286
        %2936 = vmatprep.subr.mxu0 0.0
        %2937 = vmatpush1.msra.mxu0 %v2287
        %2938 = vmatprep.subr.mxu0 0.0
        %2939 = vmatpush1.msra.mxu0 %v2288
        %2940 = vmatprep.subr.mxu0 0.0
        %2941 = vmatpush1.msra.mxu0 %v2289
        %2942 = vmatprep.subr.mxu0 0.0
        %2943 = vmatpush1.msra.mxu0 %v2290
        %2944 = vmatprep.subr.mxu0 0.0
        %2945 = vmatpush1.msra.mxu0 %v2291
        %2946 = vmatprep.subr.mxu0 0.0
        %2947 = vmatpush1.msra.mxu0 %v2292
        %2948 = vmatprep.subr.mxu0 0.0
        %2949 = vmatpush1.msra.mxu0 %v2293
        %2950 = vmatprep.subr.mxu0 0.0
        %2951 = vmatpush1.msra.mxu0 %v2294
        %2952 = vmatprep.subr.mxu0 0.0
        %2953 = vmatpush1.msra.mxu0 %v2295
        %2954 = vmatprep.subr.mxu0 0.0
        %2955 = vmatpush1.msra.mxu0 %v2296
        %2956 = vmatprep.subr.mxu0 0.0
        %2957 = vmatpush1.msra.mxu0 %v2297
        %2958 = vmatprep.subr.mxu0 0.0
        %2959 = vmatpush1.msra.mxu0 %v2298
        %2960 = vmatprep.subr.mxu0 0.0
        %2961 = vmatpush1.msra.mxu0 %v2299
        %2962 = vmatprep.subr.mxu0 0.0
        %2963 = vmatpush1.msra.mxu0 %v2300
        %2964 = vmatprep.mubr.f32.mxu0 %v2004
        %2965 = vmatmul.mubr.f32.gmra.mrb[0].mxu0 %v2003
        %v2966 = vpop.f32.mrb[0].mxu0
        %v2967 = vadd.f32 %v2822, %v2966
        %v2968 = vpop.f32.mrb[0].mxu0
        %2969 = vmatprep.mubr.f32.mxu0 %v2015
        %2970 = vmatmul.mubr.f32.gmra.mrb[0].mxu0 %v2014
        %v2971 = vpop.f32.mrb[0].mxu0
        %v2972 = vadd.f32 %v2827, %v2971
        %v2973 = vpop.f32.mrb[0].mxu0
        %2974 = vmatprep.mubr.f32.mxu0 %v2026
        %2975 = vmatmul.mubr.f32.gmra.mrb[0].mxu0 %v2025
        %v2976 = vpop.f32.mrb[0].mxu0
        %v2977 = vadd.f32 %v2832, %v2976
        %v2978 = vpop.f32.mrb[0].mxu0
        %2979 = vmatprep.mubr.f32.mxu0 %v2037
        %2980 = vmatmul.mubr.f32.gmra.mrb[0].mxu0 %v2036
        %v2981 = vpop.f32.mrb[0].mxu0
        %v2982 = vadd.f32 %v2837, %v2981
        %v2983 = vpop.f32.mrb[0].mxu0
        %2984 = vmatprep.mubr.f32.mxu0 %v2048
        %2985 = vmatmul.mubr.f32.gmra.mrb[0].mxu0 %v2047
        %v2986 = vpop.f32.mrb[0].mxu0
        %v2987 = vadd.f32 %v2842, %v2986
        %v2988 = vpop.f32.mrb[0].mxu0
        %2989 = vmatprep.mubr.f32.mxu0 %v2059
        %2990 = vmatmul.mubr.f32.gmra.mrb[0].mxu0 %v2058
        %v2991 = vpop.f32.mrb[0].mxu0
        %v2992 = vadd.f32 %v2847, %v2991
        %v2993 = vpop.f32.mrb[0].mxu0
        %2994 = vmatprep.mubr.f32.mxu0 %v2070
        %2995 = vmatmul.mubr.f32.gmra.mrb[0].mxu0 %v2069
        %v2996 = vpop.f32.mrb[0].mxu0
        %v2997 = vadd.f32 %v2852, %v2996
        %v2998 = vpop.f32.mrb[0].mxu0
        %2999 = vmatprep.mubr.f32.mxu0 %v2081
        %3000 = vmatmul.mubr.f32.gmra.mrb[0].mxu0 %v2080
        %v3001 = vpop.f32.mrb[0].mxu0
        %v3002 = vadd.f32 %v2857, %v3001
        %v3003 = vpop.f32.mrb[0].mxu0
        %3004 = vmatprep.mubr.f32.mxu0 %v2092
        %3005 = vmatmul.mubr.f32.gmra.mrb[0].mxu0 %v2091
        %v3006 = vpop.f32.mrb[0].mxu0
        %v3007 = vadd.f32 %v2862, %v3006
        %v3008 = vpop.f32.mrb[0].mxu0
        %3009 = vmatprep.mubr.f32.mxu0 %v2103
        %3010 = vmatmul.mubr.f32.gmra.mrb[0].mxu0 %v2102
        %v3011 = vpop.f32.mrb[0].mxu0
        %v3012 = vadd.f32 %v2867, %v3011
        %v3013 = vpop.f32.mrb[0].mxu0
        %3014 = vmatprep.mubr.f32.mxu0 %v2114
        %3015 = vmatmul.mubr.f32.gmra.mrb[0].mxu0 %v2113
        %v3016 = vpop.f32.mrb[0].mxu0
        %v3017 = vadd.f32 %v2872, %v3016
        %v3018 = vpop.f32.mrb[0].mxu0
        %3019 = vmatprep.mubr.f32.mxu0 %v2125
        %3020 = vmatmul.mubr.f32.gmra.mrb[0].mxu0 %v2124
        %v3021 = vpop.f32.mrb[0].mxu0
        %v3022 = vadd.f32 %v2877, %v3021
        %v3023 = vpop.f32.mrb[0].mxu0
        %3024 = vmatprep.mubr.f32.mxu0 %v2136
        %3025 = vmatmul.mubr.f32.gmra.mrb[0].mxu0 %v2135
        %v3026 = vpop.f32.mrb[0].mxu0
        %v3027 = vadd.f32 %v2882, %v3026
        %v3028 = vpop.f32.mrb[0].mxu0
        %3029 = vmatprep.mubr.f32.mxu0 %v2147
        %3030 = vmatmul.mubr.f32.gmra.mrb[0].mxu0 %v2146
        %v3031 = vpop.f32.mrb[0].mxu0
        %v3032 = vadd.f32 %v2887, %v3031
        %v3033 = vpop.f32.mrb[0].mxu0
        %3034 = vmatprep.mubr.f32.mxu0 %v2158
        %3035 = vmatmul.mubr.f32.gmra.mrb[0].mxu0 %v2157
        %v3036 = vpop.f32.mrb[0].mxu0
        %v3037 = vadd.f32 %v2892, %v3036
        %v3038 = vpop.f32.mrb[0].mxu0
        %3039 = vmatprep.mubr.f32.mxu0 %v2169
        %3040 = vmatmul.mubr.f32.gmra.mrb[0].mxu0 %v2168
        %v3041 = vpop.f32.mrb[0].mxu0
        %v3042 = vadd.f32 %v2897, %v3041
        %v3043 = vpop.f32.mrb[0].mxu0
        %3044 = vdwg.mxu0
        %3045 = vmatprep.subr.mxu0 0.0
        %3046 = vmatpush1.msra.mxu0 %v2301
        %3047 = vmatprep.subr.mxu0 0.0
        %3048 = vmatpush1.msra.mxu0 %v2302
        %3049 = vmatprep.subr.mxu0 0.0
        %3050 = vmatpush1.msra.mxu0 %v2303
        %3051 = vmatprep.subr.mxu0 0.0
        %3052 = vmatpush1.msra.mxu0 %v2304
        %3053 = vmatprep.subr.mxu0 0.0
        %3054 = vmatpush1.msra.mxu0 %v2305
        %3055 = vmatprep.subr.mxu0 0.0
        %3056 = vmatpush1.msra.mxu0 %v2306
        %3057 = vmatprep.subr.mxu0 0.0
        %3058 = vmatpush1.msra.mxu0 %v2307
        %3059 = vmatprep.subr.mxu0 0.0
        %3060 = vmatpush1.msra.mxu0 %v2308
        %3061 = vmatprep.subr.mxu0 0.0
        %3062 = vmatpush1.msra.mxu0 %v2309
        %3063 = vmatprep.subr.mxu0 0.0
        %3064 = vmatpush1.msra.mxu0 %v2310
        %3065 = vmatprep.subr.mxu0 0.0
        %3066 = vmatpush1.msra.mxu0 %v2311
        %3067 = vmatprep.subr.mxu0 0.0
        %3068 = vmatpush1.msra.mxu0 %v2312
        %3069 = vmatprep.subr.mxu0 0.0
        %3070 = vmatpush1.msra.mxu0 %v2313
        %3071 = vmatprep.subr.mxu0 0.0
        %3072 = vmatpush1.msra.mxu0 %v2314
        %3073 = vmatprep.subr.mxu0 0.0
        %3074 = vmatpush1.msra.mxu0 %v2315
        %3075 = vmatprep.subr.mxu0 0.0
        %3076 = vmatpush1.msra.mxu0 %v2316
        %3077 = vmatprep.subr.mxu0 0.0
        %3078 = vmatpush1.msra.mxu0 %v2317
        %3079 = vmatprep.subr.mxu0 0.0
        %3080 = vmatpush1.msra.mxu0 %v2318
        %3081 = vmatprep.subr.mxu0 0.0
        %3082 = vmatpush1.msra.mxu0 %v2319
        %3083 = vmatprep.subr.mxu0 0.0
        %3084 = vmatpush1.msra.mxu0 %v2320
        %3085 = vmatprep.subr.mxu0 0.0
        %3086 = vmatpush1.msra.mxu0 %v2321
        %3087 = vmatprep.subr.mxu0 0.0
        %3088 = vmatpush1.msra.mxu0 %v2322
        %3089 = vmatprep.subr.mxu0 0.0
        %3090 = vmatpush1.msra.mxu0 %v2323
        %3091 = vmatprep.subr.mxu0 0.0
        %3092 = vmatpush1.msra.mxu0 %v2324
        %3093 = vmatprep.subr.mxu0 0.0
        %3094 = vmatpush1.msra.mxu0 %v2325
        %3095 = vmatprep.subr.mxu0 0.0
        %3096 = vmatpush1.msra.mxu0 %v2326
        %3097 = vmatprep.subr.mxu0 0.0
        %3098 = vmatpush1.msra.mxu0 %v2327
        %3099 = vmatprep.subr.mxu0 0.0
        %3100 = vmatpush1.msra.mxu0 %v2328
        %3101 = vmatprep.subr.mxu0 0.0
        %3102 = vmatpush1.msra.mxu0 %v2329
        %3103 = vmatprep.subr.mxu0 0.0
        %3104 = vmatpush1.msra.mxu0 %v2330
        %3105 = vmatprep.subr.mxu0 0.0
        %3106 = vmatpush1.msra.mxu0 %v2331
        %3107 = vmatprep.subr.mxu0 0.0
        %3108 = vmatpush1.msra.mxu0 %v2332
        %3109 = vmatprep.mubr.f32.mxu0 %v2006
        %3110 = vmatmul.mubr.f32.gmra.mrb[0].mxu0 %v2005
        %v3111 = vpop.f32.mrb[0].mxu0
        %v3112 = vadd.f32 %v2967, %v3111
        %v3113 = vpop.f32.mrb[0].mxu0
        %3114 = vmatprep.mubr.f32.mxu0 %v2017
        %3115 = vmatmul.mubr.f32.gmra.mrb[0].mxu0 %v2016
        %v3116 = vpop.f32.mrb[0].mxu0
        %v3117 = vadd.f32 %v2972, %v3116
        %v3118 = vpop.f32.mrb[0].mxu0
        %3119 = vmatprep.mubr.f32.mxu0 %v2028
        %3120 = vmatmul.mubr.f32.gmra.mrb[0].mxu0 %v2027
        %v3121 = vpop.f32.mrb[0].mxu0
        %v3122 = vadd.f32 %v2977, %v3121
        %v3123 = vpop.f32.mrb[0].mxu0
        %3124 = vmatprep.mubr.f32.mxu0 %v2039
        %3125 = vmatmul.mubr.f32.gmra.mrb[0].mxu0 %v2038
        %v3126 = vpop.f32.mrb[0].mxu0
        %v3127 = vadd.f32 %v2982, %v3126
        %v3128 = vpop.f32.mrb[0].mxu0
        %3129 = vmatprep.mubr.f32.mxu0 %v2050
        %3130 = vmatmul.mubr.f32.gmra.mrb[0].mxu0 %v2049
        %v3131 = vpop.f32.mrb[0].mxu0
        %v3132 = vadd.f32 %v2987, %v3131
        %v3133 = vpop.f32.mrb[0].mxu0
        %3134 = vmatprep.mubr.f32.mxu0 %v2061
        %3135 = vmatmul.mubr.f32.gmra.mrb[0].mxu0 %v2060
        %v3136 = vpop.f32.mrb[0].mxu0
        %v3137 = vadd.f32 %v2992, %v3136
        %v3138 = vpop.f32.mrb[0].mxu0
        %3139 = vmatprep.mubr.f32.mxu0 %v2072
        %3140 = vmatmul.mubr.f32.gmra.mrb[0].mxu0 %v2071
        %v3141 = vpop.f32.mrb[0].mxu0
        %v3142 = vadd.f32 %v2997, %v3141
        %v3143 = vpop.f32.mrb[0].mxu0
        %3144 = vmatprep.mubr.f32.mxu0 %v2083
        %3145 = vmatmul.mubr.f32.gmra.mrb[0].mxu0 %v2082
        %v3146 = vpop.f32.mrb[0].mxu0
        %v3147 = vadd.f32 %v3002, %v3146
        %v3148 = vpop.f32.mrb[0].mxu0
        %3149 = vmatprep.mubr.f32.mxu0 %v2094
        %3150 = vmatmul.mubr.f32.gmra.mrb[0].mxu0 %v2093
        %v3151 = vpop.f32.mrb[0].mxu0
        %v3152 = vadd.f32 %v3007, %v3151
        %v3153 = vpop.f32.mrb[0].mxu0
        %3154 = vmatprep.mubr.f32.mxu0 %v2105
        %3155 = vmatmul.mubr.f32.gmra.mrb[0].mxu0 %v2104
        %v3156 = vpop.f32.mrb[0].mxu0
        %v3157 = vadd.f32 %v3012, %v3156
        %v3158 = vpop.f32.mrb[0].mxu0
        %3159 = vmatprep.mubr.f32.mxu0 %v2116
        %3160 = vmatmul.mubr.f32.gmra.mrb[0].mxu0 %v2115
        %v3161 = vpop.f32.mrb[0].mxu0
        %v3162 = vadd.f32 %v3017, %v3161
        %v3163 = vpop.f32.mrb[0].mxu0
        %3164 = vmatprep.mubr.f32.mxu0 %v2127
        %3165 = vmatmul.mubr.f32.gmra.mrb[0].mxu0 %v2126
        %v3166 = vpop.f32.mrb[0].mxu0
        %v3167 = vadd.f32 %v3022, %v3166
        %v3168 = vpop.f32.mrb[0].mxu0
        %3169 = vmatprep.mubr.f32.mxu0 %v2138
        %3170 = vmatmul.mubr.f32.gmra.mrb[0].mxu0 %v2137
        %v3171 = vpop.f32.mrb[0].mxu0
        %v3172 = vadd.f32 %v3027, %v3171
        %v3173 = vpop.f32.mrb[0].mxu0
        %3174 = vmatprep.mubr.f32.mxu0 %v2149
        %3175 = vmatmul.mubr.f32.gmra.mrb[0].mxu0 %v2148
        %v3176 = vpop.f32.mrb[0].mxu0
        %v3177 = vadd.f32 %v3032, %v3176
        %v3178 = vpop.f32.mrb[0].mxu0
        %3179 = vmatprep.mubr.f32.mxu0 %v2160
        %3180 = vmatmul.mubr.f32.gmra.mrb[0].mxu0 %v2159
        %v3181 = vpop.f32.mrb[0].mxu0
        %v3182 = vadd.f32 %v3037, %v3181
        %v3183 = vpop.f32.mrb[0].mxu0
        %3184 = vmatprep.mubr.f32.mxu0 %v2171
        %3185 = vmatmul.mubr.f32.gmra.mrb[0].mxu0 %v2170
        %v3186 = vpop.f32.mrb[0].mxu0
        %v3187 = vadd.f32 %v3042, %v3186
        %v3188 = vpop.f32.mrb[0].mxu0
        %3189 = vdwg.mxu0
        %3190 = vmatprep.subr.mxu0 0.0
        %3191 = vmatpush1.msra.mxu0 %v2333
        %3192 = vmatprep.subr.mxu0 0.0
        %3193 = vmatpush1.msra.mxu0 %v2334
        %3194 = vmatprep.subr.mxu0 0.0
        %3195 = vmatpush1.msra.mxu0 %v2335
        %3196 = vmatprep.subr.mxu0 0.0
        %3197 = vmatpush1.msra.mxu0 %v2336
        %3198 = vmatprep.subr.mxu0 0.0
        %3199 = vmatpush1.msra.mxu0 %v2337
        %3200 = vmatprep.subr.mxu0 0.0
        %3201 = vmatpush1.msra.mxu0 %v2338
        %3202 = vmatprep.subr.mxu0 0.0
        %3203 = vmatpush1.msra.mxu0 %v2339
        %3204 = vmatprep.subr.mxu0 0.0
        %3205 = vmatpush1.msra.mxu0 %v2340
        %3206 = vmatprep.subr.mxu0 0.0
        %3207 = vmatpush1.msra.mxu0 %v2341
        %3208 = vmatprep.subr.mxu0 0.0
        %3209 = vmatpush1.msra.mxu0 %v2342
        %3210 = vmatprep.subr.mxu0 0.0
        %3211 = vmatpush1.msra.mxu0 %v2343
        %3212 = vmatprep.subr.mxu0 0.0
        %3213 = vmatpush1.msra.mxu0 %v2344
        %3214 = vmatprep.subr.mxu0 0.0
        %3215 = vmatpush1.msra.mxu0 %v2345
        %3216 = vmatprep.subr.mxu0 0.0
        %3217 = vmatpush1.msra.mxu0 %v2346
        %3218 = vmatprep.subr.mxu0 0.0
        %3219 = vmatpush1.msra.mxu0 %v2347
        %3220 = vmatprep.subr.mxu0 0.0
        %3221 = vmatpush1.msra.mxu0 %v2348
        %3222 = vmatprep.subr.mxu0 0.0
        %3223 = vmatpush1.msra.mxu0 0.0
        %3224 = vmatprep.subr.mxu0 0.0
        %3225 = vmatpush1.msra.mxu0 0.0
        %3226 = vmatprep.subr.mxu0 0.0
        %3227 = vmatpush1.msra.mxu0 0.0
        %3228 = vmatprep.subr.mxu0 0.0
        %3229 = vmatpush1.msra.mxu0 0.0
        %3230 = vmatprep.subr.mxu0 0.0
        %3231 = vmatpush1.msra.mxu0 0.0
        %3232 = vmatprep.subr.mxu0 0.0
        %3233 = vmatpush1.msra.mxu0 0.0
        %3234 = vmatprep.subr.mxu0 0.0
        %3235 = vmatpush1.msra.mxu0 0.0
        %3236 = vmatprep.subr.mxu0 0.0
        %3237 = vmatpush1.msra.mxu0 0.0
        %3238 = vmatprep.subr.mxu0 0.0
        %3239 = vmatpush1.msra.mxu0 0.0
        %3240 = vmatprep.subr.mxu0 0.0
        %3241 = vmatpush1.msra.mxu0 0.0
        %3242 = vmatprep.subr.mxu0 0.0
        %3243 = vmatpush1.msra.mxu0 0.0
        %3244 = vmatprep.subr.mxu0 0.0
        %3245 = vmatpush1.msra.mxu0 0.0
        %3246 = vmatprep.subr.mxu0 0.0
        %3247 = vmatpush1.msra.mxu0 0.0
        %3248 = vmatprep.subr.mxu0 0.0
        %3249 = vmatpush1.msra.mxu0 0.0
        %3250 = vmatprep.subr.mxu0 0.0
        %3251 = vmatpush1.msra.mxu0 0.0
        %3252 = vmatprep.subr.mxu0 0.0
        %3253 = vmatpush1.msra.mxu0 0.0
        %3254 = vmatprep.mubr.f32.mxu0 0.0
        %3255 = vmatmul.mubr.f32.gmra.mrb[0].mxu0 %v2007
        %v3256 = vpop.f32.mrb[0].mxu0
        %v3257 = vadd.f32 %v3112, %v3256
        %v3258 = vpop.f32.mrb[0].mxu0
        %3259 = vmatprep.mubr.f32.mxu0 0.0
        %3260 = vmatmul.mubr.f32.gmra.mrb[0].mxu0 %v2018
        %v3261 = vpop.f32.mrb[0].mxu0
        %v3262 = vadd.f32 %v3117, %v3261
        %v3263 = vpop.f32.mrb[0].mxu0
        %3264 = vmatprep.mubr.f32.mxu0 0.0
        %3265 = vmatmul.mubr.f32.gmra.mrb[0].mxu0 %v2029
        %v3266 = vpop.f32.mrb[0].mxu0
        %v3267 = vadd.f32 %v3122, %v3266
        %v3268 = vpop.f32.mrb[0].mxu0
        %3269 = vmatprep.mubr.f32.mxu0 0.0
        %3270 = vmatmul.mubr.f32.gmra.mrb[0].mxu0 %v2040
        %v3271 = vpop.f32.mrb[0].mxu0
        %v3272 = vadd.f32 %v3127, %v3271
        %v3273 = vpop.f32.mrb[0].mxu0
        %3274 = vmatprep.mubr.f32.mxu0 0.0
        %3275 = vmatmul.mubr.f32.gmra.mrb[0].mxu0 %v2051
        %v3276 = vpop.f32.mrb[0].mxu0
        %v3277 = vadd.f32 %v3132, %v3276
        %v3278 = vpop.f32.mrb[0].mxu0
        %3279 = vmatprep.mubr.f32.mxu0 0.0
        %3280 = vmatmul.mubr.f32.gmra.mrb[0].mxu0 %v2062
        %v3281 = vpop.f32.mrb[0].mxu0
        %v3282 = vadd.f32 %v3137, %v3281
        %v3283 = vpop.f32.mrb[0].mxu0
        %3284 = vmatprep.mubr.f32.mxu0 0.0
        %3285 = vmatmul.mubr.f32.gmra.mrb[0].mxu0 %v2073
        %v3286 = vpop.f32.mrb[0].mxu0
        %v3287 = vadd.f32 %v3142, %v3286
        %v3288 = vpop.f32.mrb[0].mxu0
        %3289 = vmatprep.mubr.f32.mxu0 0.0
        %3290 = vmatmul.mubr.f32.gmra.mrb[0].mxu0 %v2084
        %v3291 = vpop.f32.mrb[0].mxu0
        %v3292 = vadd.f32 %v3147, %v3291
        %v3293 = vpop.f32.mrb[0].mxu0
        %3294 = vmatprep.mubr.f32.mxu0 0.0
        %3295 = vmatmul.mubr.f32.gmra.mrb[0].mxu0 %v2095
        %v3296 = vpop.f32.mrb[0].mxu0
        %v3297 = vadd.f32 %v3152, %v3296
        %v3298 = vpop.f32.mrb[0].mxu0
        %3299 = vmatprep.mubr.f32.mxu0 0.0
        %3300 = vmatmul.mubr.f32.gmra.mrb[0].mxu0 %v2106
        %v3301 = vpop.f32.mrb[0].mxu0
        %v3302 = vadd.f32 %v3157, %v3301
        %v3303 = vpop.f32.mrb[0].mxu0
        %3304 = vmatprep.mubr.f32.mxu0 0.0
        %3305 = vmatmul.mubr.f32.gmra.mrb[0].mxu0 %v2117
        %v3306 = vpop.f32.mrb[0].mxu0
        %v3307 = vadd.f32 %v3162, %v3306
        %v3308 = vpop.f32.mrb[0].mxu0
        %3309 = vmatprep.mubr.f32.mxu0 0.0
        %3310 = vmatmul.mubr.f32.gmra.mrb[0].mxu0 %v2128
        %v3311 = vpop.f32.mrb[0].mxu0
        %v3312 = vadd.f32 %v3167, %v3311
        %v3313 = vpop.f32.mrb[0].mxu0
        %3314 = vmatprep.mubr.f32.mxu0 0.0
        %3315 = vmatmul.mubr.f32.gmra.mrb[0].mxu0 %v2139
        %v3316 = vpop.f32.mrb[0].mxu0
        %v3317 = vadd.f32 %v3172, %v3316
        %v3318 = vpop.f32.mrb[0].mxu0
        %3319 = vmatprep.mubr.f32.mxu0 0.0
        %3320 = vmatmul.mubr.f32.gmra.mrb[0].mxu0 %v2150
        %v3321 = vpop.f32.mrb[0].mxu0
        %v3322 = vadd.f32 %v3177, %v3321
        %v3323 = vpop.f32.mrb[0].mxu0
        %3324 = vmatprep.mubr.f32.mxu0 0.0
        %3325 = vmatmul.mubr.f32.gmra.mrb[0].mxu0 %v2161
        %v3326 = vpop.f32.mrb[0].mxu0
        %v3327 = vadd.f32 %v3182, %v3326
        %v3328 = vpop.f32.mrb[0].mxu0
        %3329 = vmatprep.mubr.f32.mxu0 0.0
        %3330 = vmatmul.mubr.f32.gmra.mrb[0].mxu0 %v2172
        %v3331 = vpop.f32.mrb[0].mxu0
        %v3332 = vadd.f32 %v3187, %v3331
        %v3333 = vpop.f32.mrb[0].mxu0
        %3334 = vdwg.mxu0
        %v3335 = vld [vmem:[%s9] sm:$0xff]
        %v3336 = vld [vmem:[%s9 + $0x8] sm:$0xff]
        %v3337 = vld [vmem:[%s9 + $0x10] sm:$0xff]
        %v3338 = vld [vmem:[%s9 + $0x18] sm:$0xff]
        %v3339 = vld [vmem:[%s9 + $0x20] sm:$0xff]
        %v3340 = vld [vmem:[%s9 + $0x28] sm:$0xff]
        %v3341 = vld [vmem:[%s9 + $0x30] sm:$0xff]
        %v3342 = vld [vmem:[%s9 + $0x38] sm:$0xff]
        %v3343 = vld [vmem:[%s9 + $0x40] sm:$0xff]
        %v3344 = vld [vmem:[%s9 + $0x48] sm:$0xff]
        %v3345 = vld [vmem:[%s9 + $0x50] sm:$0xff]
        %v3346 = vld [vmem:[%s9 + $0x58] sm:$0xff]
        %v3347 = vld [vmem:[%s9 + $0x60] sm:$0xff]
        %v3348 = vld [vmem:[%s9 + $0x68] sm:$0xff]
        %v3349 = vld [vmem:[%s9 + $0x70] sm:$0xff]
        %v3350 = vld [vmem:[%s9 + $0x78] sm:$0xff]
        %3352 = vset.pattern.permute.xlu0 0
        %3353 = vperm.xlu0 %3352, %v3335
        %v3354 = vpop.permute.xlu0 %3353
        %3357 = vset.pattern.permute.xlu0 0
        %3358 = vperm.xlu0 %3357, %v3336
        %v3359 = vpop.permute.xlu0 %3358
        %3362 = vset.pattern.permute.xlu0 0
        %3363 = vperm.xlu0 %3362, %v3337
        %v3364 = vpop.permute.xlu0 %3363
        %3367 = vset.pattern.permute.xlu0 0
        %3368 = vperm.xlu0 %3367, %v3338
        %v3369 = vpop.permute.xlu0 %3368
        %3372 = vset.pattern.permute.xlu0 0
        %3373 = vperm.xlu0 %3372, %v3339
        %v3374 = vpop.permute.xlu0 %3373
        %3377 = vset.pattern.permute.xlu0 0
        %3378 = vperm.xlu0 %3377, %v3340
        %v3379 = vpop.permute.xlu0 %3378
        %3382 = vset.pattern.permute.xlu0 0
        %3383 = vperm.xlu0 %3382, %v3341
        %v3384 = vpop.permute.xlu0 %3383
        %3387 = vset.pattern.permute.xlu0 0
        %3388 = vperm.xlu0 %3387, %v3342
        %v3389 = vpop.permute.xlu0 %3388
        %3392 = vset.pattern.permute.xlu0 0
        %3393 = vperm.xlu0 %3392, %v3343
        %v3394 = vpop.permute.xlu0 %3393
        %3397 = vset.pattern.permute.xlu0 0
        %3398 = vperm.xlu0 %3397, %v3344
        %v3399 = vpop.permute.xlu0 %3398
        %3402 = vset.pattern.permute.xlu0 0
        %3403 = vperm.xlu0 %3402, %v3345
        %v3404 = vpop.permute.xlu0 %3403
        %3407 = vset.pattern.permute.xlu0 0
        %3408 = vperm.xlu0 %3407, %v3346
        %v3409 = vpop.permute.xlu0 %3408
        %3412 = vset.pattern.permute.xlu0 0
        %3413 = vperm.xlu0 %3412, %v3347
        %v3414 = vpop.permute.xlu0 %3413
        %3417 = vset.pattern.permute.xlu0 0
        %3418 = vperm.xlu0 %3417, %v3348
        %v3419 = vpop.permute.xlu0 %3418
        %3422 = vset.pattern.permute.xlu0 0
        %3423 = vperm.xlu0 %3422, %v3349
        %v3424 = vpop.permute.xlu0 %3423
        %3427 = vset.pattern.permute.xlu0 0
        %3428 = vperm.xlu0 %3427, %v3350
        %v3429 = vpop.permute.xlu0 %3428
        %v3431 = vadd.f32 %v3257, %v3354
        %v3432 = vadd.f32 %v3262, %v3359
        %v3433 = vadd.f32 %v3267, %v3364
        %v3434 = vadd.f32 %v3272, %v3369
        %v3435 = vadd.f32 %v3277, %v3374
        %v3436 = vadd.f32 %v3282, %v3379
        %v3437 = vadd.f32 %v3287, %v3384
        %v3438 = vadd.f32 %v3292, %v3389
        %v3439 = vadd.f32 %v3297, %v3394
        %v3440 = vadd.f32 %v3302, %v3399
        %v3441 = vadd.f32 %v3307, %v3404
        %v3442 = vadd.f32 %v3312, %v3409
        %v3443 = vadd.f32 %v3317, %v3414
        %v3444 = vadd.f32 %v3322, %v3419
        %v3445 = vadd.f32 %v3327, %v3424
        %v3446 = vadd.f32 %v3332, %v3429
        %v3447 = vld [vmem:[%s10] sm:$0xff]
        %v3448 = vld [vmem:[%s10 + $0x8] sm:$0xff]
        %v3449 = vld [vmem:[%s10 + $0x10] sm:$0xff]
        %v3450 = vld [vmem:[%s10 + $0x18] sm:$0xff]
        %v3451 = vld [vmem:[%s10 + $0x20] sm:$0xff]
        %v3452 = vld [vmem:[%s10 + $0x28] sm:$0xff]
        %v3453 = vld [vmem:[%s10 + $0x30] sm:$0xff]
        %v3454 = vld [vmem:[%s10 + $0x38] sm:$0xff]
        %v3455 = vld [vmem:[%s10 + $0x40] sm:$0xff]
        %v3456 = vld [vmem:[%s10 + $0x48] sm:$0xff]
        %v3457 = vld [vmem:[%s10 + $0x50] sm:$0xff]
        %v3458 = vld [vmem:[%s10 + $0x58] sm:$0x3f]
        %v3459 = vld [vmem:[%s11] sm:$0xff]
        %v3460 = vld [vmem:[%s11 + $0x8] sm:$0xff]
        %v3461 = vld [vmem:[%s11 + $0x10] sm:$0xff]
        %v3462 = vld [vmem:[%s11 + $0x18] sm:$0xff]
        %v3463 = vld [vmem:[%s11 + $0x20] sm:$0xff]
        %v3464 = vld [vmem:[%s11 + $0x28] sm:$0xff]
        %v3465 = vld [vmem:[%s11 + $0x30] sm:$0xff]
        %v3466 = vld [vmem:[%s11 + $0x38] sm:$0xff]
        %v3467 = vld [vmem:[%s11 + $0x40] sm:$0xff]
        %v3468 = vld [vmem:[%s11 + $0x48] sm:$0xff]
        %v3469 = vld [vmem:[%s11 + $0x50] sm:$0xff]
        %v3470 = vld [vmem:[%s11 + $0x58] sm:$0x3f]
        %3472 = vset.pattern.permute.xlu0 0
        %3473 = vperm.xlu0 %3472, %v3459
        %v3474 = vpop.permute.xlu0 %3473
        %3477 = vset.pattern.permute.xlu0 0
        %3478 = vperm.xlu0 %3477, %v3460
        %v3479 = vpop.permute.xlu0 %3478
        %3482 = vset.pattern.permute.xlu0 0
        %3483 = vperm.xlu0 %3482, %v3461
        %v3484 = vpop.permute.xlu0 %3483
        %3487 = vset.pattern.permute.xlu0 0
        %3488 = vperm.xlu0 %3487, %v3462
        %v3489 = vpop.permute.xlu0 %3488
        %3492 = vset.pattern.permute.xlu0 0
        %3493 = vperm.xlu0 %3492, %v3463
        %v3494 = vpop.permute.xlu0 %3493
        %3497 = vset.pattern.permute.xlu0 0
        %3498 = vperm.xlu0 %3497, %v3464
        %v3499 = vpop.permute.xlu0 %3498
        %3502 = vset.pattern.permute.xlu0 0
        %3503 = vperm.xlu0 %3502, %v3465
        %v3504 = vpop.permute.xlu0 %3503
        %3507 = vset.pattern.permute.xlu0 0
        %3508 = vperm.xlu0 %3507, %v3466
        %v3509 = vpop.permute.xlu0 %3508
        %3512 = vset.pattern.permute.xlu0 0
        %3513 = vperm.xlu0 %3512, %v3467
        %v3514 = vpop.permute.xlu0 %3513
        %3517 = vset.pattern.permute.xlu0 0
        %3518 = vperm.xlu0 %3517, %v3468
        %v3519 = vpop.permute.xlu0 %3518
        %3522 = vset.pattern.permute.xlu0 0
        %3523 = vperm.xlu0 %3522, %v3469
        %v3524 = vpop.permute.xlu0 %3523
        %3527 = vset.pattern.permute.xlu0 0
        %3528 = vperm.xlu0 %3527, %v3470
        %v3529 = vpop.permute.xlu0 %3528
        %3531 = vmatprep.subr.mxu0 0.0
        %3532 = vmatpush1.msra.mxu0 %v3431
        %3533 = vmatprep.subr.mxu0 0.0
        %3534 = vmatpush1.msra.mxu0 %v3432
        %3535 = vmatprep.subr.mxu0 0.0
        %3536 = vmatpush1.msra.mxu0 %v3433
        %3537 = vmatprep.subr.mxu0 0.0
        %3538 = vmatpush1.msra.mxu0 %v3434
        %3539 = vmatprep.subr.mxu0 0.0
        %3540 = vmatpush1.msra.mxu0 %v3435
        %3541 = vmatprep.subr.mxu0 0.0
        %3542 = vmatpush1.msra.mxu0 %v3436
        %3543 = vmatprep.subr.mxu0 0.0
        %3544 = vmatpush1.msra.mxu0 %v3437
        %3545 = vmatprep.subr.mxu0 0.0
        %3546 = vmatpush1.msra.mxu0 %v3438
        %3547 = vmatprep.subr.mxu0 0.0
        %3548 = vmatpush1.msra.mxu0 %v3439
        %3549 = vmatprep.subr.mxu0 0.0
        %3550 = vmatpush1.msra.mxu0 %v3440
        %3551 = vmatprep.subr.mxu0 0.0
        %3552 = vmatpush1.msra.mxu0 %v3441
        %3553 = vmatprep.subr.mxu0 0.0
        %3554 = vmatpush1.msra.mxu0 %v3442
        %3555 = vmatprep.subr.mxu0 0.0
        %3556 = vmatpush1.msra.mxu0 %v3443
        %3557 = vmatprep.subr.mxu0 0.0
        %3558 = vmatpush1.msra.mxu0 %v3444
        %3559 = vmatprep.subr.mxu0 0.0
        %3560 = vmatpush1.msra.mxu0 %v3445
        %3561 = vmatprep.subr.mxu0 0.0
        %3562 = vmatpush1.msra.mxu0 %v3446
        %3563 = vmatprep.subr.mxu0 0.0
        %3564 = vmatpush1.msra.mxu0 0.0
        %3565 = vmatprep.subr.mxu0 0.0
        %3566 = vmatpush1.msra.mxu0 0.0
        %3567 = vmatprep.subr.mxu0 0.0
        %3568 = vmatpush1.msra.mxu0 0.0
        %3569 = vmatprep.subr.mxu0 0.0
        %3570 = vmatpush1.msra.mxu0 0.0
        %3571 = vmatprep.subr.mxu0 0.0
        %3572 = vmatpush1.msra.mxu0 0.0
        %3573 = vmatprep.subr.mxu0 0.0
        %3574 = vmatpush1.msra.mxu0 0.0
        %3575 = vmatprep.subr.mxu0 0.0
        %3576 = vmatpush1.msra.mxu0 0.0
        %3577 = vmatprep.subr.mxu0 0.0
        %3578 = vmatpush1.msra.mxu0 0.0
        %3579 = vmatprep.subr.mxu0 0.0
        %3580 = vmatpush1.msra.mxu0 0.0
        %3581 = vmatprep.subr.mxu0 0.0
        %3582 = vmatpush1.msra.mxu0 0.0
        %3583 = vmatprep.subr.mxu0 0.0
        %3584 = vmatpush1.msra.mxu0 0.0
        %3585 = vmatprep.subr.mxu0 0.0
        %3586 = vmatpush1.msra.mxu0 0.0
        %3587 = vmatprep.subr.mxu0 0.0
        %3588 = vmatpush1.msra.mxu0 0.0
        %3589 = vmatprep.subr.mxu0 0.0
        %3590 = vmatpush1.msra.mxu0 0.0
        %3591 = vmatprep.subr.mxu0 0.0
        %3592 = vmatpush1.msra.mxu0 0.0
        %3593 = vmatprep.subr.mxu0 0.0
        %3594 = vmatpush1.msra.mxu0 0.0
        %3595 = vmatprep.mubr.f32.mxu0 0.0
        %3596 = vmatmul.mubr.f32.gmra.mrb[0].mxu0 %v3447
        %v3597 = vpop.f32.mrb[0].mxu0
        %v3598 = vadd.f32 %v3474, %v3597
        %v3599 = vpop.f32.mrb[0].mxu0
        %3600 = vmatprep.mubr.f32.mxu0 0.0
        %3601 = vmatmul.mubr.f32.gmra.mrb[0].mxu0 %v3448
        %v3602 = vpop.f32.mrb[0].mxu0
        %v3603 = vadd.f32 %v3479, %v3602
        %v3604 = vpop.f32.mrb[0].mxu0
        %3605 = vmatprep.mubr.f32.mxu0 0.0
        %3606 = vmatmul.mubr.f32.gmra.mrb[0].mxu0 %v3449
        %v3607 = vpop.f32.mrb[0].mxu0
        %v3608 = vadd.f32 %v3484, %v3607
        %v3609 = vpop.f32.mrb[0].mxu0
        %3610 = vmatprep.mubr.f32.mxu0 0.0
        %3611 = vmatmul.mubr.f32.gmra.mrb[0].mxu0 %v3450
        %v3612 = vpop.f32.mrb[0].mxu0
        %v3613 = vadd.f32 %v3489, %v3612
        %v3614 = vpop.f32.mrb[0].mxu0
        %3615 = vmatprep.mubr.f32.mxu0 0.0
        %3616 = vmatmul.mubr.f32.gmra.mrb[0].mxu0 %v3451
        %v3617 = vpop.f32.mrb[0].mxu0
        %v3618 = vadd.f32 %v3494, %v3617
        %v3619 = vpop.f32.mrb[0].mxu0
        %3620 = vmatprep.mubr.f32.mxu0 0.0
        %3621 = vmatmul.mubr.f32.gmra.mrb[0].mxu0 %v3452
        %v3622 = vpop.f32.mrb[0].mxu0
        %v3623 = vadd.f32 %v3499, %v3622
        %v3624 = vpop.f32.mrb[0].mxu0
        %3625 = vmatprep.mubr.f32.mxu0 0.0
        %3626 = vmatmul.mubr.f32.gmra.mrb[0].mxu0 %v3453
        %v3627 = vpop.f32.mrb[0].mxu0
        %v3628 = vadd.f32 %v3504, %v3627
        %v3629 = vpop.f32.mrb[0].mxu0
        %3630 = vmatprep.mubr.f32.mxu0 0.0
        %3631 = vmatmul.mubr.f32.gmra.mrb[0].mxu0 %v3454
        %v3632 = vpop.f32.mrb[0].mxu0
        %v3633 = vadd.f32 %v3509, %v3632
        %v3634 = vpop.f32.mrb[0].mxu0
        %3635 = vmatprep.mubr.f32.mxu0 0.0
        %3636 = vmatmul.mubr.f32.gmra.mrb[0].mxu0 %v3455
        %v3637 = vpop.f32.mrb[0].mxu0
        %v3638 = vadd.f32 %v3514, %v3637
        %v3639 = vpop.f32.mrb[0].mxu0
        %3640 = vmatprep.mubr.f32.mxu0 0.0
        %3641 = vmatmul.mubr.f32.gmra.mrb[0].mxu0 %v3456
        %v3642 = vpop.f32.mrb[0].mxu0
        %v3643 = vadd.f32 %v3519, %v3642
        %v3644 = vpop.f32.mrb[0].mxu0
        %3645 = vmatprep.mubr.f32.mxu0 0.0
        %3646 = vmatmul.mubr.f32.gmra.mrb[0].mxu0 %v3457
        %v3647 = vpop.f32.mrb[0].mxu0
        %v3648 = vadd.f32 %v3524, %v3647
        %v3649 = vpop.f32.mrb[0].mxu0
        %3650 = vmatprep.mubr.f32.mxu0 0.0
        %3651 = vmatmul.mubr.f32.gmra.mrb[0].mxu0 %v3458
        %v3652 = vpop.f32.mrb[0].mxu0
        %v3653 = vadd.f32 %v3529, %v3652
        %v3654 = vpop.f32.mrb[0].mxu0
        %3655 = vdwg.mxu0
        %v3656 = vsub.f32 0.0, %v3598
        %v3657 = vsub.f32 0.0, %v3603
        %v3658 = vsub.f32 0.0, %v3608
        %v3659 = vsub.f32 0.0, %v3613
        %v3660 = vsub.f32 0.0, %v3618
        %v3661 = vsub.f32 0.0, %v3623
        %v3662 = vsub.f32 0.0, %v3628
        %v3663 = vsub.f32 0.0, %v3633
        %v3664 = vsub.f32 0.0, %v3638
        %v3665 = vsub.f32 0.0, %v3643
        %v3666 = vsub.f32 0.0, %v3648
        %v3667 = vsub.f32 0.0, %v3653
        %v3668 = vmul.f32 %v3656, 1.442695
        %v3669 = vpow.pop %v3668
        %v3670 = vmul.f32 %v3657, 1.442695
        %v3671 = vpow.pop %v3670
        %v3672 = vmul.f32 %v3658, 1.442695
        %v3673 = vpow.pop %v3672
        %v3674 = vmul.f32 %v3659, 1.442695
        %v3675 = vpow.pop %v3674
        %v3676 = vmul.f32 %v3660, 1.442695
        %v3677 = vpow.pop %v3676
        %v3678 = vmul.f32 %v3661, 1.442695
        %v3679 = vpow.pop %v3678
        %v3680 = vmul.f32 %v3662, 1.442695
        %v3681 = vpow.pop %v3680
        %v3682 = vmul.f32 %v3663, 1.442695
        %v3683 = vpow.pop %v3682
        %v3684 = vmul.f32 %v3664, 1.442695
        %v3685 = vpow.pop %v3684
        %v3686 = vmul.f32 %v3665, 1.442695
        %v3687 = vpow.pop %v3686
        %v3688 = vmul.f32 %v3666, 1.442695
        %v3689 = vpow.pop %v3688
        %v3690 = vmul.f32 %v3667, 1.442695
        %v3691 = vpow.pop %v3690
        %v3692 = vadd.f32 %v3669, 1.0
        %v3693 = vadd.f32 %v3671, 1.0
        %v3694 = vadd.f32 %v3673, 1.0
        %v3695 = vadd.f32 %v3675, 1.0
        %v3696 = vadd.f32 %v3677, 1.0
        %v3697 = vadd.f32 %v3679, 1.0
        %v3698 = vadd.f32 %v3681, 1.0
        %v3699 = vadd.f32 %v3683, 1.0
        %v3700 = vadd.f32 %v3685, 1.0
        %v3701 = vadd.f32 %v3687, 1.0
        %v3702 = vadd.f32 %v3689, 1.0
        %v3703 = vadd.f32 %v3691, 1.0
        %v3704 = vrcp.pop %v3692
        %v3705 = vrcp.pop %v3693
        %v3706 = vrcp.pop %v3694
        %v3707 = vrcp.pop %v3695
        %v3708 = vrcp.pop %v3696
        %v3709 = vrcp.pop %v3697
        %v3710 = vrcp.pop %v3698
        %v3711 = vrcp.pop %v3699
        %v3712 = vrcp.pop %v3700
        %v3713 = vrcp.pop %v3701
        %v3714 = vrcp.pop %v3702
        %v3715 = vrcp.pop %v3703
        %3716 = vst [vmem:[%s489] sm:$0xff] %v3704
        %3717 = vst [vmem:[%s489 + $0x8] sm:$0xff] %v3705
        %3718 = vst [vmem:[%s489 + $0x10] sm:$0xff] %v3706
        %3719 = vst [vmem:[%s489 + $0x18] sm:$0xff] %v3707
        %3720 = vst [vmem:[%s489 + $0x20] sm:$0xff] %v3708
        %3721 = vst [vmem:[%s489 + $0x28] sm:$0xff] %v3709
        %3722 = vst [vmem:[%s489 + $0x30] sm:$0xff] %v3710
        %3723 = vst [vmem:[%s489 + $0x38] sm:$0xff] %v3711
        %3724 = vst [vmem:[%s489 + $0x40] sm:$0xff] %v3712
        %3725 = vst [vmem:[%s489 + $0x48] sm:$0xff] %v3713
        %3726 = vst [vmem:[%s489 + $0x50] sm:$0xff] %v3714
        %3727 = vst [vmem:[%s489 + $0x58] sm:$0x3f] %v3715
        %s3728 = sand.u32 %s291, 1
        %s3729 = scalar_lea.sflag [#allocation7], %s3728
        %s3730 = sand.u32 %s291, 1
        %s3731 = smul.addr %s3730, 96
        %s3732 = scalar_lea.vmem [#allocation6], %s3731
        // Predicated region
        $region121: #{cnn2_forward.1} parent=101 // pred_check
          %p3733 = pneg %p301
        $region122: #{cnn2_forward.1} parent=101 // pred_check_branch
          %3735 = sbr.rel (%p3733) target = $region124
        $region123: #{cnn2_forward.1} parent=101 // pred_region
          %s3737 = ssub.s32 1536, 1536
          %3738 = vsyncadd %s3729, %s3737
          %s3739 = smul.addr %s26, 128
          %s3740 = scalar_lea.hbm %s12, %s3739
          %s3741 = sshll.u32 %s3732, 4
          %s3742 = int_to_ptr.vmem [resolvable:$true] %s3741
          %3747 = dma.vmem_to_hbm [thread:$0]  %s3742, 1536, %s3740, %s3729, 128, 256, 8
        $region124: #{cnn2_forward.1} parent=101 // pred_fallthru
          _
      $region102: #{cnn2_forward.1} parent=5 // pred_fallthru
        _
      %p3748 = scmp.le.s32.totalorder 2, %s21
      // Predicated region
      $region125: #{cnn2_forward.1} parent=5 // pred_check
        %p3749 = pneg %p3748
      $region126: #{cnn2_forward.1} parent=5 // pred_check_branch
        %3751 = sbr.rel (%p3749) target = $region128
      $region127: #{cnn2_forward.1} parent=5 // pred_region
        %s3752 = ssub.s32 %s21, 2
        // Predicated region
        $region129: #{cnn2_forward.1} parent=127 // pred_check
          %p3753 = pneg %p307
        $region130: #{cnn2_forward.1} parent=127 // pred_check_branch
          %3755 = sbr.rel (%p3753) target = $region132
        $region131: #{cnn2_forward.1} parent=127 // pred_region
          %s3756 = sand.u32 %s292, 1
          %s3757 = scalar_lea.sflag [#allocation7], %s3756
          %s3758 = sand.u32 %s292, 1
          %s3759 = smul.addr %s3758, 96
          %s3760 = scalar_lea.vmem [#allocation6], %s3759
          %3761 = dma.done %s3757, 1536
        $region132: #{cnn2_forward.1} parent=127 // pred_fallthru
          _
      $region128: #{cnn2_forward.1} parent=5 // pred_fallthru
        _
    $region6: #{cnn2_forward.1} parent=1 // loop_footer
      %s25 = sadd.s32 1, %s21
    $region7: #{cnn2_forward.1} parent=1 // loop_footer_branch
      %20 = sbr.rel target = $region3
    $region8: #{cnn2_forward.1} parent=1 // loop_exit
      _
    %3762 = vsyncpa [#allocation7], 1
    %s3763 = scalar_lea.sflag [#allocation7], 1
    %3764 = vsyncpa %s3763, 1

</llo_original>
